<compile_context>
chip_gen: v6e
topology: v6e:2x2x1
jax: 0.10.0
libtpu: 0.0.40
codegen_flags: <defaults>
</compile_context>

<pallas_src>
import jax
import jax.numpy as jnp
from jax import lax
from jax.experimental import pallas as pl
from jax.experimental.pallas import tpu as pltpu


def _make_kernel(F, Fp, L, Le, Ld, Bt):
    N = L * Bt          # lanes per grid block (column = l*Bt + b)
    L4 = L // 4

    def kernel(x_ref,
               wc1_ref, bc1_ref, wc2_ref, bc2_ref, wc3_ref, bc3_ref,
               wl1_ref, bl1_ref, wl2_ref, bl2_ref, wl3_ref, bl3_ref,
               wo_ref, bo_ref, wcorr_ref, out_ref):
        def leaky(v):
            return jnp.where(v >= 0, v, 0.2 * v)

        col = lax.broadcasted_iota(jnp.int32, (1, N), 1)

        def shifted(v, S):
            # left neighbour v[l-S] and right neighbour v[l+S] with zero pad
            # at the (global) sequence boundary; roll wrap-around only lands
            # in lanes that stride-tracking later drops.
            sh = S * Bt
            vl = jnp.where(col >= sh, pltpu.roll(v, sh, axis=1), 0.0)
            vr = jnp.where(col < N - sh, pltpu.roll(v, N - sh, axis=1), 0.0)
            return vl, vr

        def conv_fused(hin, wcat_ref, b_ref, S):
            hl, hr = shifted(hin, S)
            hs = jnp.concatenate([hl, hin, hr], axis=0).astype(jnp.bfloat16)
            return leaky(jnp.dot(wcat_ref[...], hs,
                                 preferred_element_type=jnp.float32) + b_ref[...])

        x = x_ref[...]                                          # (Fp, N) f32

        # ---- conv stack (stride-tracked pooling) ----
        h = conv_fused(x, wc1_ref, bc1_ref, 1)                  # (16, N)
        h = jnp.maximum(h, pltpu.roll(h, N - Bt, axis=1))       # pool -> stride 2
        h = conv_fused(h, wc2_ref, bc2_ref, 2)
        h = jnp.maximum(h, pltpu.roll(h, N - 2 * Bt, axis=1))   # pool -> stride 4
        h = conv_fused(h, wc3_ref, bc3_ref, 4)                  # valid at l % 4 == 0

        # gather the L4 valid (16, Bt) column groups -> (16*L4, Bt); PyTorch
        # flatten ordering is folded into wl1, so linear1 is a single matmul.
        hstack = jnp.concatenate(
            [h[:, 4 * l * Bt:(4 * l + 1) * Bt] for l in range(L4)], axis=0
        ).astype(jnp.bfloat16)
        z = leaky(jnp.dot(wl1_ref[...], hstack,
                          preferred_element_type=jnp.float32) + bl1_ref[...])
        z = leaky(jnp.dot(wl2_ref[...], z.astype(jnp.bfloat16),
                          preferred_element_type=jnp.float32) + bl2_ref[...])
        z = leaky(jnp.dot(wl3_ref[...], z.astype(jnp.bfloat16),
                          preferred_element_type=jnp.float32) + bl3_ref[...])
        out = (jnp.dot(wo_ref[...], z.astype(jnp.bfloat16),
                       preferred_element_type=jnp.float32)
               + bo_ref[...])                                   # (1, Bt); bo includes bcorr

        # ---- correlation branch: vectorized over the whole batch tile (f32) ----
        yv = x[:, Le * Bt:]                                     # (Fp, Ld*Bt), col = l*Bt + b

        def lane_blocks_sum(v):                                 # (*, Ld*Bt) -> (*, Bt)
            s = v[:, 0:Bt]
            for l in range(1, Ld):
                s = s + v[:, l * Bt:(l + 1) * Bt]
            return s

        mean = lane_blocks_sum(yv) * (1.0 / Ld)                 # (Fp, Bt)
        yc = yv - jnp.concatenate([mean] * Ld, axis=1)          # centered, (Fp, Ld*Bt)

        inv_sd = []
        for i in range(F):
            var_i = lane_blocks_sum(yc[i:i + 1] * yc[i:i + 1])  # (1, Bt)
            inv_sd.append(lax.rsqrt(var_i + 1e-12))

        corr_row = jnp.zeros((1, Bt), jnp.float32)
        p = 0
        for i in range(F):
            for j in range(i + 1, F):
                cov = lane_blocks_sum(yc[i:i + 1] * yc[j:j + 1])
                corr_row = corr_row + wcorr_ref[p:p + 1, :] * (cov * inv_sd[i] * inv_sd[j])
                p += 1

        out_ref[...] = out + corr_row

    return kernel


def cnn_discriminator(x, y, params, batch_tile=128):
    """x: (B, F, enc_len), y: (B, F, dec_len) -> (B, 1).

    Requires F > 1 and (enc_len + dec_len) % 4 == 0 (same assumptions as the
    PyTorch module's linear1 sizing).  batch_tile should be a multiple of 128;
    lower it (e.g. to split B across >= 2 grid steps) on v7x to use both
    TensorCores."""
    B, F, Le = x.shape
    Ld = y.shape[-1]
    L = Le + Ld
    assert L % 4 == 0, "encoder_length + decoder_length must be divisible by 4"
    assert F > 1, "corr branch requires n_features > 1"
    L4 = L // 4
    bt = int(batch_tile)
    G = -(-B // bt)
    Bp = G * bt
    Fp = max(8, -(-F // 8) * 8)          # pad channels so sublane concat is aligned

    xcat = jnp.concatenate([x, y], axis=-1).astype(jnp.float32)       # (B, F, L)
    if Bp != B:
        xcat = jnp.concatenate(
            [xcat, jnp.zeros((Bp - B, F, L), jnp.float32)], axis=0)
    if Fp != F:
        xcat = jnp.concatenate(
            [xcat, jnp.zeros((Bp, Fp - F, L), jnp.float32)], axis=1)

    # time-major, batch-inner layout per grid block (column = l*bt + b)
    xg = xcat.reshape(G, bt, Fp, L).transpose(0, 2, 3, 1).reshape(G, Fp, L * bt)

    def tapcat(w):   # (Co, Ci, 3) -> (Co, 3*Ci), tap-major columns
        return jnp.transpose(w, (0, 2, 1)).reshape(w.shape[0], 3 * w.shape[1])

    wc1p = jnp.pad(params['wc1'], ((0, 0), (0, Fp - F), (0, 0)))
    wc1 = tapcat(wc1p).astype(jnp.bfloat16)                           # (16, 3*Fp)
    wc2 = tapcat(params['wc2']).astype(jnp.bfloat16)                  # (16, 48)
    wc3 = tapcat(params['wc3']).astype(jnp.bfloat16)
    bc1 = params['bc1'].reshape(-1, 1).astype(jnp.float32)
    bc2 = params['bc2'].reshape(-1, 1).astype(jnp.float32)
    bc3 = params['bc3'].reshape(-1, 1).astype(jnp.float32)

    H4 = params['wl1'].shape[0]
    # reorder columns from PyTorch flatten order (c*L4 + l) to l-major (l*16 + c)
    wl1 = (params['wl1'].reshape(H4, 16, L4).transpose(0, 2, 1)
           .reshape(H4, L4 * 16).astype(jnp.bfloat16))
    bl1 = params['bl1'].reshape(-1, 1).astype(jnp.float32)
    wl2 = params['wl2'].astype(jnp.bfloat16)
    bl2 = params['bl2'].reshape(-1, 1).astype(jnp.float32)
    wl3 = params['wl3'].astype(jnp.bfloat16)
    bl3 = params['bl3'].reshape(-1, 1).astype(jnp.float32)
    wo = params['wo'].astype(jnp.bfloat16)
    # fold the corr bias into the output bias (both are added to every output)
    bo = (params['bo'] + params['bcorr']).reshape(1, 1).astype(jnp.float32)
    # per-pair corr weights as a (P, 1) f32 column (pair order: i<j row-major)
    wcorr = params['wcorr'].reshape(-1, 1).astype(jnp.float32)

    weights = [wc1, bc1, wc2, bc2, wc3, bc3, wl1, bl1, wl2, bl2, wl3, bl3,
               wo, bo, wcorr]

    def const_spec(a):
        nd = a.ndim
        return pl.BlockSpec(a.shape, lambda g, nd=nd: (0,) * nd)

    kernel = _make_kernel(F, Fp, L, Le, Ld, bt)
    out = pl.pallas_call(
        kernel,
        out_shape=jax.ShapeDtypeStruct((G, 1, bt), jnp.float32),
        grid_spec=pltpu.PrefetchScalarGridSpec(
            num_scalar_prefetch=0,
            grid=(G,),
            in_specs=[pl.BlockSpec((None, Fp, L * bt), lambda g: (g, 0, 0))]
                     + [const_spec(w) for w in weights],
            out_specs=pl.BlockSpec((None, 1, bt), lambda g: (g, 0, 0)),
        ),
        compiler_params=pltpu.CompilerParams(
            dimension_semantics=("parallel",)),
    )(xg, *weights)
    return out.reshape(Bp, 1)[:B]                                     # (B, 1)


# ---------------- deterministic parameter init (plain JAX glue) ----------------

def _spectral_normalize(w, key, n_iter=10):
    w2d = w.reshape(w.shape[0], -1)
    u = jax.random.normal(key, (w2d.shape[0],), dtype=jnp.float32)
    u = u / (jnp.linalg.norm(u) + 1e-12)
    v = None
    for _ in range(n_iter):
        v = w2d.T @ u
        v = v / (jnp.linalg.norm(v) + 1e-12)
        u = w2d @ v
        u = u / (jnp.linalg.norm(u) + 1e-12)
    sigma = u @ (w2d @ v)
    return w / sigma


def init_params(key, n_features, encoder_length, decoder_length, hidden_dim):
    L = encoder_length + decoder_length
    flat = L // 4 * 16
    corr_features = n_features * (n_features - 1) // 2
    shapes = {
        'wc1': (16, n_features, 3), 'bc1': (16,),
        'wc2': (16, 16, 3), 'bc2': (16,),
        'wc3': (16, 16, 3), 'bc3': (16,),
        'wl1': (hidden_dim * 4, flat), 'bl1': (hidden_dim * 4,),
        'wl2': (hidden_dim * 2, hidden_dim * 4), 'bl2': (hidden_dim * 2,),
        'wl3': (hidden_dim, hidden_dim * 2), 'bl3': (hidden_dim,),
        'wo': (1, hidden_dim), 'bo': (1,),
        'wcorr': (1, corr_features), 'bcorr': (1,),
    }
    fan_in = {
        'wc1': n_features * 3, 'bc1': n_features * 3,
        'wc2': 48, 'bc2': 48, 'wc3': 48, 'bc3': 48,
        'wl1': flat, 'bl1': flat,
        'wl2': hidden_dim * 4, 'bl2': hidden_dim * 4,
        'wl3': hidden_dim * 2, 'bl3': hidden_dim * 2,
        'wo': hidden_dim, 'bo': hidden_dim,
        'wcorr': corr_features, 'bcorr': corr_features,
    }
    params = {}
    keys = jax.random.split(key, 2 * len(shapes))
    for idx, (name, shape) in enumerate(shapes.items()):
        bound = 1.0 / (fan_in[name] ** 0.5)
        w = jax.random.uniform(keys[2 * idx], shape, jnp.float32, -bound, bound)
        if name.startswith('w'):  # spectral_norm wraps weights only
            w = _spectral_normalize(w, keys[2 * idx + 1])
        params[name] = w
    return params


# ---------------- plain-JAX reference (PyTorch semantics) ----------------

def ref_forward(x, y, params):
    def leaky(v):
        return jnp.where(v >= 0, v, 0.2 * v)

    def conv(xin, w, b):
        _, _, L = xin.shape
        xp = jnp.pad(xin, ((0, 0), (0, 0), (1, 1)))
        taps = jnp.stack([xp[:, :, k:k + L] for k in range(3)], axis=-1)
        return jnp.einsum('bclk,ock->bol', taps, w) + b[None, :, None]

    def pool(v):
        Bb, C, L = v.shape
        return v.reshape(Bb, C, L // 2, 2).max(axis=-1)

    cat = jnp.concatenate([x, y], axis=-1)
    h = pool(leaky(conv(cat, params['wc1'], params['bc1'])))
    h = pool(leaky(conv(h, params['wc2'], params['bc2'])))
    h = leaky(conv(h, params['wc3'], params['bc3'])).reshape(x.shape[0], -1)
    h = leaky(h @ params['wl1'].T + params['bl1'])
    h = leaky(h @ params['wl2'].T + params['bl2'])
    h = leaky(h @ params['wl3'].T + params['bl3'])
    out = h @ params['wo'].T + params['bo']
    F = y.shape[1]
    yc = y - y.mean(axis=-1, keepdims=True)
    cov = jnp.einsum('bil,bjl->bij', yc, yc)
    sd = jnp.sqrt(jnp.einsum('bil,bil->bi', yc, yc))
    corrm = cov / (sd[:, :, None] * sd[:, None, :])
    feats = jnp.stack([corrm[:, i, j]
                       for i in range(F) for j in range(i + 1, F)], axis=-1)
    return out + feats @ params['wcorr'].T + params['bcorr']


if __name__ == "__main__":
    B, n_features = 2, 4
    encoder_length, decoder_length, hidden_dim = 8, 8, 32
    key = jax.random.PRNGKey(0)
    kp, kx, ky = jax.random.split(key, 3)
    params = init_params(kp, n_features, encoder_length, decoder_length, hidden_dim)
    x = jax.random.normal(kx, (B, n_features, encoder_length), jnp.float32)
    y = jax.random.normal(ky, (B, n_features, decoder_length), jnp.float32)

    out = jax.block_until_ready(cnn_discriminator(x, y, params))
    ref = ref_forward(x, y, params)
    assert out.shape == (B, 1), out.shape
    # bf16 MXU operands with f32 accumulation -> allow a few % of drift vs f32 ref
    assert jnp.allclose(out, ref, atol=4e-2, rtol=6e-2), (out, ref)
    print("KERNEL_OK")
</pallas_src>

<mosaic_0001>
module attributes {stable_mosaic.version = 11 : i64} {
  func.func @kernel(%arg0: i32, %arg1: memref<1x8x2048xf32, #tpu.memory_space<vmem>>, %arg2: memref<16x24xbf16, #tpu.memory_space<vmem>>, %arg3: memref<16x1xf32, #tpu.memory_space<vmem>>, %arg4: memref<16x48xbf16, #tpu.memory_space<vmem>>, %arg5: memref<16x1xf32, #tpu.memory_space<vmem>>, %arg6: memref<16x48xbf16, #tpu.memory_space<vmem>>, %arg7: memref<16x1xf32, #tpu.memory_space<vmem>>, %arg8: memref<128x64xbf16, #tpu.memory_space<vmem>>, %arg9: memref<128x1xf32, #tpu.memory_space<vmem>>, %arg10: memref<64x128xbf16, #tpu.memory_space<vmem>>, %arg11: memref<64x1xf32, #tpu.memory_space<vmem>>, %arg12: memref<32x64xbf16, #tpu.memory_space<vmem>>, %arg13: memref<32x1xf32, #tpu.memory_space<vmem>>, %arg14: memref<1x32xbf16, #tpu.memory_space<vmem>>, %arg15: memref<1x1xf32, #tpu.memory_space<vmem>>, %arg16: memref<6x1xf32, #tpu.memory_space<vmem>>, %arg17: memref<1x1x128xf32, #tpu.memory_space<vmem>>) attributes {dimension_semantics = [#tpu.dimension_semantics<parallel>], iteration_bounds = array<i64: 1>, scalar_prefetch = 0 : i64, scratch_operands = 0 : i64, tpu.core_type = #tpu.core_type<tc>, window_params = [{transform_indices = @transform_0, window_bounds = array<i64: 1, 8, 2048>}, {pipeline_mode = #tpu.pipeline_mode<synchronous>, transform_indices = @transform_1, window_bounds = array<i64: 16, 24>}, {pipeline_mode = #tpu.pipeline_mode<synchronous>, transform_indices = @transform_2, window_bounds = array<i64: 16, 1>}, {pipeline_mode = #tpu.pipeline_mode<synchronous>, transform_indices = @transform_3, window_bounds = array<i64: 16, 48>}, {pipeline_mode = #tpu.pipeline_mode<synchronous>, transform_indices = @transform_4, window_bounds = array<i64: 16, 1>}, {pipeline_mode = #tpu.pipeline_mode<synchronous>, transform_indices = @transform_5, window_bounds = array<i64: 16, 48>}, {pipeline_mode = #tpu.pipeline_mode<synchronous>, transform_indices = @transform_6, window_bounds = array<i64: 16, 1>}, {pipeline_mode = #tpu.pipeline_mode<synchronous>, transform_indices = @transform_7, window_bounds = array<i64: 128, 64>}, {pipeline_mode = #tpu.pipeline_mode<synchronous>, transform_indices = @transform_8, window_bounds = array<i64: 128, 1>}, {pipeline_mode = #tpu.pipeline_mode<synchronous>, transform_indices = @transform_9, window_bounds = array<i64: 64, 128>}, {pipeline_mode = #tpu.pipeline_mode<synchronous>, transform_indices = @transform_10, window_bounds = array<i64: 64, 1>}, {pipeline_mode = #tpu.pipeline_mode<synchronous>, transform_indices = @transform_11, window_bounds = array<i64: 32, 64>}, {pipeline_mode = #tpu.pipeline_mode<synchronous>, transform_indices = @transform_12, window_bounds = array<i64: 32, 1>}, {pipeline_mode = #tpu.pipeline_mode<synchronous>, transform_indices = @transform_13, window_bounds = array<i64: 1, 32>}, {pipeline_mode = #tpu.pipeline_mode<synchronous>, transform_indices = @transform_14, window_bounds = array<i64: 1, 1>}, {pipeline_mode = #tpu.pipeline_mode<synchronous>, transform_indices = @transform_15, window_bounds = array<i64: 6, 1>}, {transform_indices = @transform_16, window_bounds = array<i64: 1, 1, 128>}]} {
    %0 = tpu.iota {dimensions = array<i32: 1>} : vector<1x2048xi32>
    %c0 = arith.constant 0 : index
    %c0_0 = arith.constant 0 : index
    %c0_1 = arith.constant 0 : index
    %1 = vector.load %arg1[%c0, %c0_0, %c0_1] : memref<1x8x2048xf32, #tpu.memory_space<vmem>>, vector<1x8x2048xf32>
    %2 = vector.shape_cast %1 : vector<1x8x2048xf32> to vector<8x2048xf32>
    %c128_i32 = arith.constant 128 : i32
    %3 = vector.broadcast %c128_i32 : i32 to vector<1x2048xi32>
    %4 = arith.cmpi sge, %0, %3 : vector<1x2048xi32>
    %c128_i32_2 = arith.constant 128 : i32
    %5 = tpu.dynamic_rotate %2 by %c128_i32_2 dim 1 : vector<8x2048xf32>, i32 -> vector<8x2048xf32>
    %cst = arith.constant 0.000000e+00 : f32
    %6 = vector.shape_cast %4 : vector<1x2048xi1> to vector<1x2048xi1>
    %7 = vector.broadcast %6 : vector<1x2048xi1> to vector<8x2048xi1>
    %8 = vector.broadcast %cst : f32 to vector<8x2048xf32>
    %9 = arith.select %7, %5, %8 : vector<8x2048xi1>, vector<8x2048xf32>
    %c1920_i32 = arith.constant 1920 : i32
    %10 = vector.broadcast %c1920_i32 : i32 to vector<1x2048xi32>
    %11 = arith.cmpi slt, %0, %10 : vector<1x2048xi32>
    %c1920_i32_3 = arith.constant 1920 : i32
    %12 = tpu.dynamic_rotate %2 by %c1920_i32_3 dim 1 : vector<8x2048xf32>, i32 -> vector<8x2048xf32>
    %cst_4 = arith.constant 0.000000e+00 : f32
    %13 = vector.shape_cast %11 : vector<1x2048xi1> to vector<1x2048xi1>
    %14 = vector.broadcast %13 : vector<1x2048xi1> to vector<8x2048xi1>
    %15 = vector.broadcast %cst_4 : f32 to vector<8x2048xf32>
    %16 = arith.select %14, %12, %15 : vector<8x2048xi1>, vector<8x2048xf32>
    %17 = tpu.concatenate %9, %2, %16 in 0 : vector<8x2048xf32>, vector<8x2048xf32>, vector<8x2048xf32> -> vector<24x2048xf32>
    %18 = arith.truncf %17 : vector<24x2048xf32> to vector<24x2048xbf16>
    %c0_5 = arith.constant 0 : index
    %c0_6 = arith.constant 0 : index
    %19 = vector.load %arg2[%c0_5, %c0_6] : memref<16x24xbf16, #tpu.memory_space<vmem>>, vector<16x24xbf16>
    %cst_7 = arith.constant dense<0.000000e+00> : vector<16x2048xf32>
    %20 = tpu.matmul %19, %18, %cst_7 {dimension_numbers = #tpu.dot_dimension_numbers<[1], [0], [0], [1], [0, 0, 1, 1], [], []>} : vector<16x24xbf16>, vector<24x2048xbf16>, vector<16x2048xf32> -> vector<16x2048xf32>
    %c0_8 = arith.constant 0 : index
    %c0_9 = arith.constant 0 : index
    %21 = vector.load %arg3[%c0_8, %c0_9] : memref<16x1xf32, #tpu.memory_space<vmem>>, vector<16x1xf32>
    %22 = vector.broadcast %21 : vector<16x1xf32> to vector<16x2048xf32>
    %23 = arith.addf %20, %22 : vector<16x2048xf32>
    %cst_10 = arith.constant 0.000000e+00 : f32
    %24 = vector.broadcast %cst_10 : f32 to vector<16x2048xf32>
    %25 = arith.cmpf oge, %23, %24 : vector<16x2048xf32>
    %cst_11 = arith.constant 2.000000e-01 : f32
    %26 = vector.broadcast %cst_11 : f32 to vector<16x2048xf32>
    %27 = arith.mulf %26, %23 : vector<16x2048xf32>
    %28 = arith.select %25, %23, %27 : vector<16x2048xi1>, vector<16x2048xf32>
    %c1920_i32_12 = arith.constant 1920 : i32
    %29 = tpu.dynamic_rotate %28 by %c1920_i32_12 dim 1 : vector<16x2048xf32>, i32 -> vector<16x2048xf32>
    %30 = arith.maximumf %28, %29 : vector<16x2048xf32>
    %c256_i32 = arith.constant 256 : i32
    %31 = vector.broadcast %c256_i32 : i32 to vector<1x2048xi32>
    %32 = arith.cmpi sge, %0, %31 : vector<1x2048xi32>
    %c256_i32_13 = arith.constant 256 : i32
    %33 = tpu.dynamic_rotate %30 by %c256_i32_13 dim 1 : vector<16x2048xf32>, i32 -> vector<16x2048xf32>
    %cst_14 = arith.constant 0.000000e+00 : f32
    %34 = vector.shape_cast %32 : vector<1x2048xi1> to vector<1x2048xi1>
    %35 = vector.broadcast %34 : vector<1x2048xi1> to vector<16x2048xi1>
    %36 = vector.broadcast %cst_14 : f32 to vector<16x2048xf32>
    %37 = arith.select %35, %33, %36 : vector<16x2048xi1>, vector<16x2048xf32>
    %c1792_i32 = arith.constant 1792 : i32
    %38 = vector.broadcast %c1792_i32 : i32 to vector<1x2048xi32>
    %39 = arith.cmpi slt, %0, %38 : vector<1x2048xi32>
    %c1792_i32_15 = arith.constant 1792 : i32
    %40 = tpu.dynamic_rotate %30 by %c1792_i32_15 dim 1 : vector<16x2048xf32>, i32 -> vector<16x2048xf32>
    %cst_16 = arith.constant 0.000000e+00 : f32
    %41 = vector.shape_cast %39 : vector<1x2048xi1> to vector<1x2048xi1>
    %42 = vector.broadcast %41 : vector<1x2048xi1> to vector<16x2048xi1>
    %43 = vector.broadcast %cst_16 : f32 to vector<16x2048xf32>
    %44 = arith.select %42, %40, %43 : vector<16x2048xi1>, vector<16x2048xf32>
    %45 = tpu.concatenate %37, %30, %44 in 0 : vector<16x2048xf32>, vector<16x2048xf32>, vector<16x2048xf32> -> vector<48x2048xf32>
    %46 = arith.truncf %45 : vector<48x2048xf32> to vector<48x2048xbf16>
    %c0_17 = arith.constant 0 : index
    %c0_18 = arith.constant 0 : index
    %47 = vector.load %arg4[%c0_17, %c0_18] : memref<16x48xbf16, #tpu.memory_space<vmem>>, vector<16x48xbf16>
    %cst_19 = arith.constant dense<0.000000e+00> : vector<16x2048xf32>
    %48 = tpu.matmul %47, %46, %cst_19 {dimension_numbers = #tpu.dot_dimension_numbers<[1], [0], [0], [1], [0, 0, 1, 1], [], []>} : vector<16x48xbf16>, vector<48x2048xbf16>, vector<16x2048xf32> -> vector<16x2048xf32>
    %c0_20 = arith.constant 0 : index
    %c0_21 = arith.constant 0 : index
    %49 = vector.load %arg5[%c0_20, %c0_21] : memref<16x1xf32, #tpu.memory_space<vmem>>, vector<16x1xf32>
    %50 = vector.broadcast %49 : vector<16x1xf32> to vector<16x2048xf32>
    %51 = arith.addf %48, %50 : vector<16x2048xf32>
    %cst_22 = arith.constant 0.000000e+00 : f32
    %52 = vector.broadcast %cst_22 : f32 to vector<16x2048xf32>
    %53 = arith.cmpf oge, %51, %52 : vector<16x2048xf32>
    %cst_23 = arith.constant 2.000000e-01 : f32
    %54 = vector.broadcast %cst_23 : f32 to vector<16x2048xf32>
    %55 = arith.mulf %54, %51 : vector<16x2048xf32>
    %56 = arith.select %53, %51, %55 : vector<16x2048xi1>, vector<16x2048xf32>
    %c1792_i32_24 = arith.constant 1792 : i32
    %57 = tpu.dynamic_rotate %56 by %c1792_i32_24 dim 1 : vector<16x2048xf32>, i32 -> vector<16x2048xf32>
    %58 = arith.maximumf %56, %57 : vector<16x2048xf32>
    %c512_i32 = arith.constant 512 : i32
    %59 = vector.broadcast %c512_i32 : i32 to vector<1x2048xi32>
    %60 = arith.cmpi sge, %0, %59 : vector<1x2048xi32>
    %c512_i32_25 = arith.constant 512 : i32
    %61 = tpu.dynamic_rotate %58 by %c512_i32_25 dim 1 : vector<16x2048xf32>, i32 -> vector<16x2048xf32>
    %cst_26 = arith.constant 0.000000e+00 : f32
    %62 = vector.shape_cast %60 : vector<1x2048xi1> to vector<1x2048xi1>
    %63 = vector.broadcast %62 : vector<1x2048xi1> to vector<16x2048xi1>
    %64 = vector.broadcast %cst_26 : f32 to vector<16x2048xf32>
    %65 = arith.select %63, %61, %64 : vector<16x2048xi1>, vector<16x2048xf32>
    %c1536_i32 = arith.constant 1536 : i32
    %66 = vector.broadcast %c1536_i32 : i32 to vector<1x2048xi32>
    %67 = arith.cmpi slt, %0, %66 : vector<1x2048xi32>
    %c1536_i32_27 = arith.constant 1536 : i32
    %68 = tpu.dynamic_rotate %58 by %c1536_i32_27 dim 1 : vector<16x2048xf32>, i32 -> vector<16x2048xf32>
    %cst_28 = arith.constant 0.000000e+00 : f32
    %69 = vector.shape_cast %67 : vector<1x2048xi1> to vector<1x2048xi1>
    %70 = vector.broadcast %69 : vector<1x2048xi1> to vector<16x2048xi1>
    %71 = vector.broadcast %cst_28 : f32 to vector<16x2048xf32>
    %72 = arith.select %70, %68, %71 : vector<16x2048xi1>, vector<16x2048xf32>
    %73 = tpu.concatenate %65, %58, %72 in 0 : vector<16x2048xf32>, vector<16x2048xf32>, vector<16x2048xf32> -> vector<48x2048xf32>
    %74 = arith.truncf %73 : vector<48x2048xf32> to vector<48x2048xbf16>
    %c0_29 = arith.constant 0 : index
    %c0_30 = arith.constant 0 : index
    %75 = vector.load %arg6[%c0_29, %c0_30] : memref<16x48xbf16, #tpu.memory_space<vmem>>, vector<16x48xbf16>
    %cst_31 = arith.constant dense<0.000000e+00> : vector<16x2048xf32>
    %76 = tpu.matmul %75, %74, %cst_31 {dimension_numbers = #tpu.dot_dimension_numbers<[1], [0], [0], [1], [0, 0, 1, 1], [], []>} : vector<16x48xbf16>, vector<48x2048xbf16>, vector<16x2048xf32> -> vector<16x2048xf32>
    %c0_32 = arith.constant 0 : index
    %c0_33 = arith.constant 0 : index
    %77 = vector.load %arg7[%c0_32, %c0_33] : memref<16x1xf32, #tpu.memory_space<vmem>>, vector<16x1xf32>
    %78 = vector.broadcast %77 : vector<16x1xf32> to vector<16x2048xf32>
    %79 = arith.addf %76, %78 : vector<16x2048xf32>
    %cst_34 = arith.constant 0.000000e+00 : f32
    %80 = vector.broadcast %cst_34 : f32 to vector<16x2048xf32>
    %81 = arith.cmpf oge, %79, %80 : vector<16x2048xf32>
    %cst_35 = arith.constant 2.000000e-01 : f32
    %82 = vector.broadcast %cst_35 : f32 to vector<16x2048xf32>
    %83 = arith.mulf %82, %79 : vector<16x2048xf32>
    %84 = arith.select %81, %79, %83 : vector<16x2048xi1>, vector<16x2048xf32>
    %85 = vector.extract_strided_slice %84 {offsets = [0, 0], sizes = [16, 128], strides = [1, 1]} : vector<16x2048xf32> to vector<16x128xf32>
    %86 = vector.extract_strided_slice %84 {offsets = [0, 512], sizes = [16, 128], strides = [1, 1]} : vector<16x2048xf32> to vector<16x128xf32>
    %87 = vector.extract_strided_slice %84 {offsets = [0, 1024], sizes = [16, 128], strides = [1, 1]} : vector<16x2048xf32> to vector<16x128xf32>
    %88 = vector.extract_strided_slice %84 {offsets = [0, 1536], sizes = [16, 128], strides = [1, 1]} : vector<16x2048xf32> to vector<16x128xf32>
    %89 = tpu.concatenate %85, %86, %87, %88 in 0 : vector<16x128xf32>, vector<16x128xf32>, vector<16x128xf32>, vector<16x128xf32> -> vector<64x128xf32>
    %90 = arith.truncf %89 : vector<64x128xf32> to vector<64x128xbf16>
    %c0_36 = arith.constant 0 : index
    %c0_37 = arith.constant 0 : index
    %91 = vector.load %arg8[%c0_36, %c0_37] : memref<128x64xbf16, #tpu.memory_space<vmem>>, vector<128x64xbf16>
    %cst_38 = arith.constant dense<0.000000e+00> : vector<128x128xf32>
    %92 = tpu.matmul %91, %90, %cst_38 {dimension_numbers = #tpu.dot_dimension_numbers<[1], [0], [0], [1], [0, 0, 1, 1], [], []>} : vector<128x64xbf16>, vector<64x128xbf16>, vector<128x128xf32> -> vector<128x128xf32>
    %c0_39 = arith.constant 0 : index
    %c0_40 = arith.constant 0 : index
    %93 = vector.load %arg9[%c0_39, %c0_40] : memref<128x1xf32, #tpu.memory_space<vmem>>, vector<128x1xf32>
    %94 = vector.broadcast %93 : vector<128x1xf32> to vector<128x128xf32>
    %95 = arith.addf %92, %94 : vector<128x128xf32>
    %cst_41 = arith.constant 0.000000e+00 : f32
    %96 = vector.broadcast %cst_41 : f32 to vector<128x128xf32>
    %97 = arith.cmpf oge, %95, %96 : vector<128x128xf32>
    %cst_42 = arith.constant 2.000000e-01 : f32
    %98 = vector.broadcast %cst_42 : f32 to vector<128x128xf32>
    %99 = arith.mulf %98, %95 : vector<128x128xf32>
    %100 = arith.select %97, %95, %99 : vector<128x128xi1>, vector<128x128xf32>
    %c0_43 = arith.constant 0 : index
    %c0_44 = arith.constant 0 : index
    %101 = vector.load %arg10[%c0_43, %c0_44] : memref<64x128xbf16, #tpu.memory_space<vmem>>, vector<64x128xbf16>
    %102 = arith.truncf %100 : vector<128x128xf32> to vector<128x128xbf16>
    %cst_45 = arith.constant dense<0.000000e+00> : vector<64x128xf32>
    %103 = tpu.matmul %101, %102, %cst_45 {dimension_numbers = #tpu.dot_dimension_numbers<[1], [0], [0], [1], [0, 0, 1, 1], [], []>} : vector<64x128xbf16>, vector<128x128xbf16>, vector<64x128xf32> -> vector<64x128xf32>
    %c0_46 = arith.constant 0 : index
    %c0_47 = arith.constant 0 : index
    %104 = vector.load %arg11[%c0_46, %c0_47] : memref<64x1xf32, #tpu.memory_space<vmem>>, vector<64x1xf32>
    %105 = vector.broadcast %104 : vector<64x1xf32> to vector<64x128xf32>
    %106 = arith.addf %103, %105 : vector<64x128xf32>
    %cst_48 = arith.constant 0.000000e+00 : f32
    %107 = vector.broadcast %cst_48 : f32 to vector<64x128xf32>
    %108 = arith.cmpf oge, %106, %107 : vector<64x128xf32>
    %cst_49 = arith.constant 2.000000e-01 : f32
    %109 = vector.broadcast %cst_49 : f32 to vector<64x128xf32>
    %110 = arith.mulf %109, %106 : vector<64x128xf32>
    %111 = arith.select %108, %106, %110 : vector<64x128xi1>, vector<64x128xf32>
    %c0_50 = arith.constant 0 : index
    %c0_51 = arith.constant 0 : index
    %112 = vector.load %arg12[%c0_50, %c0_51] : memref<32x64xbf16, #tpu.memory_space<vmem>>, vector<32x64xbf16>
    %113 = arith.truncf %111 : vector<64x128xf32> to vector<64x128xbf16>
    %cst_52 = arith.constant dense<0.000000e+00> : vector<32x128xf32>
    %114 = tpu.matmul %112, %113, %cst_52 {dimension_numbers = #tpu.dot_dimension_numbers<[1], [0], [0], [1], [0, 0, 1, 1], [], []>} : vector<32x64xbf16>, vector<64x128xbf16>, vector<32x128xf32> -> vector<32x128xf32>
    %c0_53 = arith.constant 0 : index
    %c0_54 = arith.constant 0 : index
    %115 = vector.load %arg13[%c0_53, %c0_54] : memref<32x1xf32, #tpu.memory_space<vmem>>, vector<32x1xf32>
    %116 = vector.broadcast %115 : vector<32x1xf32> to vector<32x128xf32>
    %117 = arith.addf %114, %116 : vector<32x128xf32>
    %cst_55 = arith.constant 0.000000e+00 : f32
    %118 = vector.broadcast %cst_55 : f32 to vector<32x128xf32>
    %119 = arith.cmpf oge, %117, %118 : vector<32x128xf32>
    %cst_56 = arith.constant 2.000000e-01 : f32
    %120 = vector.broadcast %cst_56 : f32 to vector<32x128xf32>
    %121 = arith.mulf %120, %117 : vector<32x128xf32>
    %122 = arith.select %119, %117, %121 : vector<32x128xi1>, vector<32x128xf32>
    %c0_57 = arith.constant 0 : index
    %c0_58 = arith.constant 0 : index
    %123 = vector.load %arg14[%c0_57, %c0_58] : memref<1x32xbf16, #tpu.memory_space<vmem>>, vector<1x32xbf16>
    %124 = arith.truncf %122 : vector<32x128xf32> to vector<32x128xbf16>
    %cst_59 = arith.constant dense<0.000000e+00> : vector<1x128xf32>
    %125 = tpu.matmul %123, %124, %cst_59 {dimension_numbers = #tpu.dot_dimension_numbers<[1], [0], [0], [1], [0, 0, 1, 1], [], []>} : vector<1x32xbf16>, vector<32x128xbf16>, vector<1x128xf32> -> vector<1x128xf32>
    %c0_60 = arith.constant 0 : index
    %c0_61 = arith.constant 0 : index
    %126 = vector.load %arg15[%c0_60, %c0_61] : memref<1x1xf32, #tpu.memory_space<vmem>>, vector<1x1xf32>
    %127 = vector.broadcast %126 : vector<1x1xf32> to vector<1x128xf32>
    %128 = arith.addf %125, %127 : vector<1x128xf32>
    %129 = vector.extract_strided_slice %2 {offsets = [0, 1024], sizes = [8, 1024], strides = [1, 1]} : vector<8x2048xf32> to vector<8x1024xf32>
    %130 = vector.extract_strided_slice %129 {offsets = [0, 0], sizes = [8, 128], strides = [1, 1]} : vector<8x1024xf32> to vector<8x128xf32>
    %131 = vector.extract_strided_slice %129 {offsets = [0, 128], sizes = [8, 128], strides = [1, 1]} : vector<8x1024xf32> to vector<8x128xf32>
    %132 = arith.addf %130, %131 : vector<8x128xf32>
    %133 = vector.extract_strided_slice %129 {offsets = [0, 256], sizes = [8, 128], strides = [1, 1]} : vector<8x1024xf32> to vector<8x128xf32>
    %134 = arith.addf %132, %133 : vector<8x128xf32>
    %135 = vector.extract_strided_slice %129 {offsets = [0, 384], sizes = [8, 128], strides = [1, 1]} : vector<8x1024xf32> to vector<8x128xf32>
    %136 = arith.addf %134, %135 : vector<8x128xf32>
    %137 = vector.extract_strided_slice %129 {offsets = [0, 512], sizes = [8, 128], strides = [1, 1]} : vector<8x1024xf32> to vector<8x128xf32>
    %138 = arith.addf %136, %137 : vector<8x128xf32>
    %139 = vector.extract_strided_slice %129 {offsets = [0, 640], sizes = [8, 128], strides = [1, 1]} : vector<8x1024xf32> to vector<8x128xf32>
    %140 = arith.addf %138, %139 : vector<8x128xf32>
    %141 = vector.extract_strided_slice %129 {offsets = [0, 768], sizes = [8, 128], strides = [1, 1]} : vector<8x1024xf32> to vector<8x128xf32>
    %142 = arith.addf %140, %141 : vector<8x128xf32>
    %143 = vector.extract_strided_slice %129 {offsets = [0, 896], sizes = [8, 128], strides = [1, 1]} : vector<8x1024xf32> to vector<8x128xf32>
    %144 = arith.addf %142, %143 : vector<8x128xf32>
    %cst_62 = arith.constant 1.250000e-01 : f32
    %145 = vector.broadcast %cst_62 : f32 to vector<8x128xf32>
    %146 = arith.mulf %144, %145 : vector<8x128xf32>
    %147 = tpu.concatenate %146, %146, %146, %146, %146, %146, %146, %146 in 1 : vector<8x128xf32>, vector<8x128xf32>, vector<8x128xf32>, vector<8x128xf32>, vector<8x128xf32>, vector<8x128xf32>, vector<8x128xf32>, vector<8x128xf32> -> vector<8x1024xf32>
    %148 = arith.subf %129, %147 : vector<8x1024xf32>
    %149 = vector.extract_strided_slice %148 {offsets = [0, 0], sizes = [1, 1024], strides = [1, 1]} : vector<8x1024xf32> to vector<1x1024xf32>
    %150 = vector.extract_strided_slice %148 {offsets = [0, 0], sizes = [1, 1024], strides = [1, 1]} : vector<8x1024xf32> to vector<1x1024xf32>
    %151 = arith.mulf %149, %150 : vector<1x1024xf32>
    %152 = vector.extract_strided_slice %151 {offsets = [0, 0], sizes = [1, 128], strides = [1, 1]} : vector<1x1024xf32> to vector<1x128xf32>
    %153 = vector.extract_strided_slice %151 {offsets = [0, 128], sizes = [1, 128], strides = [1, 1]} : vector<1x1024xf32> to vector<1x128xf32>
    %154 = arith.addf %152, %153 : vector<1x128xf32>
    %155 = vector.extract_strided_slice %151 {offsets = [0, 256], sizes = [1, 128], strides = [1, 1]} : vector<1x1024xf32> to vector<1x128xf32>
    %156 = arith.addf %154, %155 : vector<1x128xf32>
    %157 = vector.extract_strided_slice %151 {offsets = [0, 384], sizes = [1, 128], strides = [1, 1]} : vector<1x1024xf32> to vector<1x128xf32>
    %158 = arith.addf %156, %157 : vector<1x128xf32>
    %159 = vector.extract_strided_slice %151 {offsets = [0, 512], sizes = [1, 128], strides = [1, 1]} : vector<1x1024xf32> to vector<1x128xf32>
    %160 = arith.addf %158, %159 : vector<1x128xf32>
    %161 = vector.extract_strided_slice %151 {offsets = [0, 640], sizes = [1, 128], strides = [1, 1]} : vector<1x1024xf32> to vector<1x128xf32>
    %162 = arith.addf %160, %161 : vector<1x128xf32>
    %163 = vector.extract_strided_slice %151 {offsets = [0, 768], sizes = [1, 128], strides = [1, 1]} : vector<1x1024xf32> to vector<1x128xf32>
    %164 = arith.addf %162, %163 : vector<1x128xf32>
    %165 = vector.extract_strided_slice %151 {offsets = [0, 896], sizes = [1, 128], strides = [1, 1]} : vector<1x1024xf32> to vector<1x128xf32>
    %166 = arith.addf %164, %165 : vector<1x128xf32>
    %cst_63 = arith.constant 9.99999996E-13 : f32
    %167 = vector.broadcast %cst_63 : f32 to vector<1x128xf32>
    %168 = arith.addf %166, %167 : vector<1x128xf32>
    %169 = math.rsqrt %168 : vector<1x128xf32>
    %170 = vector.extract_strided_slice %148 {offsets = [1, 0], sizes = [1, 1024], strides = [1, 1]} : vector<8x1024xf32> to vector<1x1024xf32>
    %171 = vector.extract_strided_slice %148 {offsets = [1, 0], sizes = [1, 1024], strides = [1, 1]} : vector<8x1024xf32> to vector<1x1024xf32>
    %172 = arith.mulf %170, %171 : vector<1x1024xf32>
    %173 = vector.extract_strided_slice %172 {offsets = [0, 0], sizes = [1, 128], strides = [1, 1]} : vector<1x1024xf32> to vector<1x128xf32>
    %174 = vector.extract_strided_slice %172 {offsets = [0, 128], sizes = [1, 128], strides = [1, 1]} : vector<1x1024xf32> to vector<1x128xf32>
    %175 = arith.addf %173, %174 : vector<1x128xf32>
    %176 = vector.extract_strided_slice %172 {offsets = [0, 256], sizes = [1, 128], strides = [1, 1]} : vector<1x1024xf32> to vector<1x128xf32>
    %177 = arith.addf %175, %176 : vector<1x128xf32>
    %178 = vector.extract_strided_slice %172 {offsets = [0, 384], sizes = [1, 128], strides = [1, 1]} : vector<1x1024xf32> to vector<1x128xf32>
    %179 = arith.addf %177, %178 : vector<1x128xf32>
    %180 = vector.extract_strided_slice %172 {offsets = [0, 512], sizes = [1, 128], strides = [1, 1]} : vector<1x1024xf32> to vector<1x128xf32>
    %181 = arith.addf %179, %180 : vector<1x128xf32>
    %182 = vector.extract_strided_slice %172 {offsets = [0, 640], sizes = [1, 128], strides = [1, 1]} : vector<1x1024xf32> to vector<1x128xf32>
    %183 = arith.addf %181, %182 : vector<1x128xf32>
    %184 = vector.extract_strided_slice %172 {offsets = [0, 768], sizes = [1, 128], strides = [1, 1]} : vector<1x1024xf32> to vector<1x128xf32>
    %185 = arith.addf %183, %184 : vector<1x128xf32>
    %186 = vector.extract_strided_slice %172 {offsets = [0, 896], sizes = [1, 128], strides = [1, 1]} : vector<1x1024xf32> to vector<1x128xf32>
    %187 = arith.addf %185, %186 : vector<1x128xf32>
    %cst_64 = arith.constant 9.99999996E-13 : f32
    %188 = vector.broadcast %cst_64 : f32 to vector<1x128xf32>
    %189 = arith.addf %187, %188 : vector<1x128xf32>
    %190 = math.rsqrt %189 : vector<1x128xf32>
    %191 = vector.extract_strided_slice %148 {offsets = [2, 0], sizes = [1, 1024], strides = [1, 1]} : vector<8x1024xf32> to vector<1x1024xf32>
    %192 = vector.extract_strided_slice %148 {offsets = [2, 0], sizes = [1, 1024], strides = [1, 1]} : vector<8x1024xf32> to vector<1x1024xf32>
    %193 = arith.mulf %191, %192 : vector<1x1024xf32>
    %194 = vector.extract_strided_slice %193 {offsets = [0, 0], sizes = [1, 128], strides = [1, 1]} : vector<1x1024xf32> to vector<1x128xf32>
    %195 = vector.extract_strided_slice %193 {offsets = [0, 128], sizes = [1, 128], strides = [1, 1]} : vector<1x1024xf32> to vector<1x128xf32>
    %196 = arith.addf %194, %195 : vector<1x128xf32>
    %197 = vector.extract_strided_slice %193 {offsets = [0, 256], sizes = [1, 128], strides = [1, 1]} : vector<1x1024xf32> to vector<1x128xf32>
    %198 = arith.addf %196, %197 : vector<1x128xf32>
    %199 = vector.extract_strided_slice %193 {offsets = [0, 384], sizes = [1, 128], strides = [1, 1]} : vector<1x1024xf32> to vector<1x128xf32>
    %200 = arith.addf %198, %199 : vector<1x128xf32>
    %201 = vector.extract_strided_slice %193 {offsets = [0, 512], sizes = [1, 128], strides = [1, 1]} : vector<1x1024xf32> to vector<1x128xf32>
    %202 = arith.addf %200, %201 : vector<1x128xf32>
    %203 = vector.extract_strided_slice %193 {offsets = [0, 640], sizes = [1, 128], strides = [1, 1]} : vector<1x1024xf32> to vector<1x128xf32>
    %204 = arith.addf %202, %203 : vector<1x128xf32>
    %205 = vector.extract_strided_slice %193 {offsets = [0, 768], sizes = [1, 128], strides = [1, 1]} : vector<1x1024xf32> to vector<1x128xf32>
    %206 = arith.addf %204, %205 : vector<1x128xf32>
    %207 = vector.extract_strided_slice %193 {offsets = [0, 896], sizes = [1, 128], strides = [1, 1]} : vector<1x1024xf32> to vector<1x128xf32>
    %208 = arith.addf %206, %207 : vector<1x128xf32>
    %cst_65 = arith.constant 9.99999996E-13 : f32
    %209 = vector.broadcast %cst_65 : f32 to vector<1x128xf32>
    %210 = arith.addf %208, %209 : vector<1x128xf32>
    %211 = math.rsqrt %210 : vector<1x128xf32>
    %212 = vector.extract_strided_slice %148 {offsets = [3, 0], sizes = [1, 1024], strides = [1, 1]} : vector<8x1024xf32> to vector<1x1024xf32>
    %213 = vector.extract_strided_slice %148 {offsets = [3, 0], sizes = [1, 1024], strides = [1, 1]} : vector<8x1024xf32> to vector<1x1024xf32>
    %214 = arith.mulf %212, %213 : vector<1x1024xf32>
    %215 = vector.extract_strided_slice %214 {offsets = [0, 0], sizes = [1, 128], strides = [1, 1]} : vector<1x1024xf32> to vector<1x128xf32>
    %216 = vector.extract_strided_slice %214 {offsets = [0, 128], sizes = [1, 128], strides = [1, 1]} : vector<1x1024xf32> to vector<1x128xf32>
    %217 = arith.addf %215, %216 : vector<1x128xf32>
    %218 = vector.extract_strided_slice %214 {offsets = [0, 256], sizes = [1, 128], strides = [1, 1]} : vector<1x1024xf32> to vector<1x128xf32>
    %219 = arith.addf %217, %218 : vector<1x128xf32>
    %220 = vector.extract_strided_slice %214 {offsets = [0, 384], sizes = [1, 128], strides = [1, 1]} : vector<1x1024xf32> to vector<1x128xf32>
    %221 = arith.addf %219, %220 : vector<1x128xf32>
    %222 = vector.extract_strided_slice %214 {offsets = [0, 512], sizes = [1, 128], strides = [1, 1]} : vector<1x1024xf32> to vector<1x128xf32>
    %223 = arith.addf %221, %222 : vector<1x128xf32>
    %224 = vector.extract_strided_slice %214 {offsets = [0, 640], sizes = [1, 128], strides = [1, 1]} : vector<1x1024xf32> to vector<1x128xf32>
    %225 = arith.addf %223, %224 : vector<1x128xf32>
    %226 = vector.extract_strided_slice %214 {offsets = [0, 768], sizes = [1, 128], strides = [1, 1]} : vector<1x1024xf32> to vector<1x128xf32>
    %227 = arith.addf %225, %226 : vector<1x128xf32>
    %228 = vector.extract_strided_slice %214 {offsets = [0, 896], sizes = [1, 128], strides = [1, 1]} : vector<1x1024xf32> to vector<1x128xf32>
    %229 = arith.addf %227, %228 : vector<1x128xf32>
    %cst_66 = arith.constant 9.99999996E-13 : f32
    %230 = vector.broadcast %cst_66 : f32 to vector<1x128xf32>
    %231 = arith.addf %229, %230 : vector<1x128xf32>
    %232 = math.rsqrt %231 : vector<1x128xf32>
    %cst_67 = arith.constant 0.000000e+00 : f32
    %233 = vector.broadcast %cst_67 : f32 to vector<1x128xf32>
    %234 = vector.extract_strided_slice %148 {offsets = [0, 0], sizes = [1, 1024], strides = [1, 1]} : vector<8x1024xf32> to vector<1x1024xf32>
    %235 = vector.extract_strided_slice %148 {offsets = [1, 0], sizes = [1, 1024], strides = [1, 1]} : vector<8x1024xf32> to vector<1x1024xf32>
    %236 = arith.mulf %234, %235 : vector<1x1024xf32>
    %237 = vector.extract_strided_slice %236 {offsets = [0, 0], sizes = [1, 128], strides = [1, 1]} : vector<1x1024xf32> to vector<1x128xf32>
    %238 = vector.extract_strided_slice %236 {offsets = [0, 128], sizes = [1, 128], strides = [1, 1]} : vector<1x1024xf32> to vector<1x128xf32>
    %239 = arith.addf %237, %238 : vector<1x128xf32>
    %240 = vector.extract_strided_slice %236 {offsets = [0, 256], sizes = [1, 128], strides = [1, 1]} : vector<1x1024xf32> to vector<1x128xf32>
    %241 = arith.addf %239, %240 : vector<1x128xf32>
    %242 = vector.extract_strided_slice %236 {offsets = [0, 384], sizes = [1, 128], strides = [1, 1]} : vector<1x1024xf32> to vector<1x128xf32>
    %243 = arith.addf %241, %242 : vector<1x128xf32>
    %244 = vector.extract_strided_slice %236 {offsets = [0, 512], sizes = [1, 128], strides = [1, 1]} : vector<1x1024xf32> to vector<1x128xf32>
    %245 = arith.addf %243, %244 : vector<1x128xf32>
    %246 = vector.extract_strided_slice %236 {offsets = [0, 640], sizes = [1, 128], strides = [1, 1]} : vector<1x1024xf32> to vector<1x128xf32>
    %247 = arith.addf %245, %246 : vector<1x128xf32>
    %248 = vector.extract_strided_slice %236 {offsets = [0, 768], sizes = [1, 128], strides = [1, 1]} : vector<1x1024xf32> to vector<1x128xf32>
    %249 = arith.addf %247, %248 : vector<1x128xf32>
    %250 = vector.extract_strided_slice %236 {offsets = [0, 896], sizes = [1, 128], strides = [1, 1]} : vector<1x1024xf32> to vector<1x128xf32>
    %251 = arith.addf %249, %250 : vector<1x128xf32>
    %c0_68 = arith.constant 0 : index
    %c0_69 = arith.constant 0 : index
    %252 = vector.load %arg16[%c0_68, %c0_69] : memref<6x1xf32, #tpu.memory_space<vmem>>, vector<1x1xf32>
    %253 = arith.mulf %251, %169 : vector<1x128xf32>
    %254 = arith.mulf %253, %190 : vector<1x128xf32>
    %255 = vector.broadcast %252 : vector<1x1xf32> to vector<1x128xf32>
    %256 = arith.mulf %255, %254 : vector<1x128xf32>
    %257 = arith.addf %233, %256 : vector<1x128xf32>
    %258 = vector.extract_strided_slice %148 {offsets = [0, 0], sizes = [1, 1024], strides = [1, 1]} : vector<8x1024xf32> to vector<1x1024xf32>
    %259 = vector.extract_strided_slice %148 {offsets = [2, 0], sizes = [1, 1024], strides = [1, 1]} : vector<8x1024xf32> to vector<1x1024xf32>
    %260 = arith.mulf %258, %259 : vector<1x1024xf32>
    %261 = vector.extract_strided_slice %260 {offsets = [0, 0], sizes = [1, 128], strides = [1, 1]} : vector<1x1024xf32> to vector<1x128xf32>
    %262 = vector.extract_strided_slice %260 {offsets = [0, 128], sizes = [1, 128], strides = [1, 1]} : vector<1x1024xf32> to vector<1x128xf32>
    %263 = arith.addf %261, %262 : vector<1x128xf32>
    %264 = vector.extract_strided_slice %260 {offsets = [0, 256], sizes = [1, 128], strides = [1, 1]} : vector<1x1024xf32> to vector<1x128xf32>
    %265 = arith.addf %263, %264 : vector<1x128xf32>
    %266 = vector.extract_strided_slice %260 {offsets = [0, 384], sizes = [1, 128], strides = [1, 1]} : vector<1x1024xf32> to vector<1x128xf32>
    %267 = arith.addf %265, %266 : vector<1x128xf32>
    %268 = vector.extract_strided_slice %260 {offsets = [0, 512], sizes = [1, 128], strides = [1, 1]} : vector<1x1024xf32> to vector<1x128xf32>
    %269 = arith.addf %267, %268 : vector<1x128xf32>
    %270 = vector.extract_strided_slice %260 {offsets = [0, 640], sizes = [1, 128], strides = [1, 1]} : vector<1x1024xf32> to vector<1x128xf32>
    %271 = arith.addf %269, %270 : vector<1x128xf32>
    %272 = vector.extract_strided_slice %260 {offsets = [0, 768], sizes = [1, 128], strides = [1, 1]} : vector<1x1024xf32> to vector<1x128xf32>
    %273 = arith.addf %271, %272 : vector<1x128xf32>
    %274 = vector.extract_strided_slice %260 {offsets = [0, 896], sizes = [1, 128], strides = [1, 1]} : vector<1x1024xf32> to vector<1x128xf32>
    %275 = arith.addf %273, %274 : vector<1x128xf32>
    %c1 = arith.constant 1 : index
    %c0_70 = arith.constant 0 : index
    %276 = vector.load %arg16[%c1, %c0_70] : memref<6x1xf32, #tpu.memory_space<vmem>>, vector<1x1xf32>
    %277 = arith.mulf %275, %169 : vector<1x128xf32>
    %278 = arith.mulf %277, %211 : vector<1x128xf32>
    %279 = vector.broadcast %276 : vector<1x1xf32> to vector<1x128xf32>
    %280 = arith.mulf %279, %278 : vector<1x128xf32>
    %281 = arith.addf %257, %280 : vector<1x128xf32>
    %282 = vector.extract_strided_slice %148 {offsets = [0, 0], sizes = [1, 1024], strides = [1, 1]} : vector<8x1024xf32> to vector<1x1024xf32>
    %283 = vector.extract_strided_slice %148 {offsets = [3, 0], sizes = [1, 1024], strides = [1, 1]} : vector<8x1024xf32> to vector<1x1024xf32>
    %284 = arith.mulf %282, %283 : vector<1x1024xf32>
    %285 = vector.extract_strided_slice %284 {offsets = [0, 0], sizes = [1, 128], strides = [1, 1]} : vector<1x1024xf32> to vector<1x128xf32>
    %286 = vector.extract_strided_slice %284 {offsets = [0, 128], sizes = [1, 128], strides = [1, 1]} : vector<1x1024xf32> to vector<1x128xf32>
    %287 = arith.addf %285, %286 : vector<1x128xf32>
    %288 = vector.extract_strided_slice %284 {offsets = [0, 256], sizes = [1, 128], strides = [1, 1]} : vector<1x1024xf32> to vector<1x128xf32>
    %289 = arith.addf %287, %288 : vector<1x128xf32>
    %290 = vector.extract_strided_slice %284 {offsets = [0, 384], sizes = [1, 128], strides = [1, 1]} : vector<1x1024xf32> to vector<1x128xf32>
    %291 = arith.addf %289, %290 : vector<1x128xf32>
    %292 = vector.extract_strided_slice %284 {offsets = [0, 512], sizes = [1, 128], strides = [1, 1]} : vector<1x1024xf32> to vector<1x128xf32>
    %293 = arith.addf %291, %292 : vector<1x128xf32>
    %294 = vector.extract_strided_slice %284 {offsets = [0, 640], sizes = [1, 128], strides = [1, 1]} : vector<1x1024xf32> to vector<1x128xf32>
    %295 = arith.addf %293, %294 : vector<1x128xf32>
    %296 = vector.extract_strided_slice %284 {offsets = [0, 768], sizes = [1, 128], strides = [1, 1]} : vector<1x1024xf32> to vector<1x128xf32>
    %297 = arith.addf %295, %296 : vector<1x128xf32>
    %298 = vector.extract_strided_slice %284 {offsets = [0, 896], sizes = [1, 128], strides = [1, 1]} : vector<1x1024xf32> to vector<1x128xf32>
    %299 = arith.addf %297, %298 : vector<1x128xf32>
    %c2 = arith.constant 2 : index
    %c0_71 = arith.constant 0 : index
    %300 = vector.load %arg16[%c2, %c0_71] : memref<6x1xf32, #tpu.memory_space<vmem>>, vector<1x1xf32>
    %301 = arith.mulf %299, %169 : vector<1x128xf32>
    %302 = arith.mulf %301, %232 : vector<1x128xf32>
    %303 = vector.broadcast %300 : vector<1x1xf32> to vector<1x128xf32>
    %304 = arith.mulf %303, %302 : vector<1x128xf32>
    %305 = arith.addf %281, %304 : vector<1x128xf32>
    %306 = vector.extract_strided_slice %148 {offsets = [1, 0], sizes = [1, 1024], strides = [1, 1]} : vector<8x1024xf32> to vector<1x1024xf32>
    %307 = vector.extract_strided_slice %148 {offsets = [2, 0], sizes = [1, 1024], strides = [1, 1]} : vector<8x1024xf32> to vector<1x1024xf32>
    %308 = arith.mulf %306, %307 : vector<1x1024xf32>
    %309 = vector.extract_strided_slice %308 {offsets = [0, 0], sizes = [1, 128], strides = [1, 1]} : vector<1x1024xf32> to vector<1x128xf32>
    %310 = vector.extract_strided_slice %308 {offsets = [0, 128], sizes = [1, 128], strides = [1, 1]} : vector<1x1024xf32> to vector<1x128xf32>
    %311 = arith.addf %309, %310 : vector<1x128xf32>
    %312 = vector.extract_strided_slice %308 {offsets = [0, 256], sizes = [1, 128], strides = [1, 1]} : vector<1x1024xf32> to vector<1x128xf32>
    %313 = arith.addf %311, %312 : vector<1x128xf32>
    %314 = vector.extract_strided_slice %308 {offsets = [0, 384], sizes = [1, 128], strides = [1, 1]} : vector<1x1024xf32> to vector<1x128xf32>
    %315 = arith.addf %313, %314 : vector<1x128xf32>
    %316 = vector.extract_strided_slice %308 {offsets = [0, 512], sizes = [1, 128], strides = [1, 1]} : vector<1x1024xf32> to vector<1x128xf32>
    %317 = arith.addf %315, %316 : vector<1x128xf32>
    %318 = vector.extract_strided_slice %308 {offsets = [0, 640], sizes = [1, 128], strides = [1, 1]} : vector<1x1024xf32> to vector<1x128xf32>
    %319 = arith.addf %317, %318 : vector<1x128xf32>
    %320 = vector.extract_strided_slice %308 {offsets = [0, 768], sizes = [1, 128], strides = [1, 1]} : vector<1x1024xf32> to vector<1x128xf32>
    %321 = arith.addf %319, %320 : vector<1x128xf32>
    %322 = vector.extract_strided_slice %308 {offsets = [0, 896], sizes = [1, 128], strides = [1, 1]} : vector<1x1024xf32> to vector<1x128xf32>
    %323 = arith.addf %321, %322 : vector<1x128xf32>
    %c3 = arith.constant 3 : index
    %c0_72 = arith.constant 0 : index
    %324 = vector.load %arg16[%c3, %c0_72] : memref<6x1xf32, #tpu.memory_space<vmem>>, vector<1x1xf32>
    %325 = arith.mulf %323, %190 : vector<1x128xf32>
    %326 = arith.mulf %325, %211 : vector<1x128xf32>
    %327 = vector.broadcast %324 : vector<1x1xf32> to vector<1x128xf32>
    %328 = arith.mulf %327, %326 : vector<1x128xf32>
    %329 = arith.addf %305, %328 : vector<1x128xf32>
    %330 = vector.extract_strided_slice %148 {offsets = [1, 0], sizes = [1, 1024], strides = [1, 1]} : vector<8x1024xf32> to vector<1x1024xf32>
    %331 = vector.extract_strided_slice %148 {offsets = [3, 0], sizes = [1, 1024], strides = [1, 1]} : vector<8x1024xf32> to vector<1x1024xf32>
    %332 = arith.mulf %330, %331 : vector<1x1024xf32>
    %333 = vector.extract_strided_slice %332 {offsets = [0, 0], sizes = [1, 128], strides = [1, 1]} : vector<1x1024xf32> to vector<1x128xf32>
    %334 = vector.extract_strided_slice %332 {offsets = [0, 128], sizes = [1, 128], strides = [1, 1]} : vector<1x1024xf32> to vector<1x128xf32>
    %335 = arith.addf %333, %334 : vector<1x128xf32>
    %336 = vector.extract_strided_slice %332 {offsets = [0, 256], sizes = [1, 128], strides = [1, 1]} : vector<1x1024xf32> to vector<1x128xf32>
    %337 = arith.addf %335, %336 : vector<1x128xf32>
    %338 = vector.extract_strided_slice %332 {offsets = [0, 384], sizes = [1, 128], strides = [1, 1]} : vector<1x1024xf32> to vector<1x128xf32>
    %339 = arith.addf %337, %338 : vector<1x128xf32>
    %340 = vector.extract_strided_slice %332 {offsets = [0, 512], sizes = [1, 128], strides = [1, 1]} : vector<1x1024xf32> to vector<1x128xf32>
    %341 = arith.addf %339, %340 : vector<1x128xf32>
    %342 = vector.extract_strided_slice %332 {offsets = [0, 640], sizes = [1, 128], strides = [1, 1]} : vector<1x1024xf32> to vector<1x128xf32>
    %343 = arith.addf %341, %342 : vector<1x128xf32>
    %344 = vector.extract_strided_slice %332 {offsets = [0, 768], sizes = [1, 128], strides = [1, 1]} : vector<1x1024xf32> to vector<1x128xf32>
    %345 = arith.addf %343, %344 : vector<1x128xf32>
    %346 = vector.extract_strided_slice %332 {offsets = [0, 896], sizes = [1, 128], strides = [1, 1]} : vector<1x1024xf32> to vector<1x128xf32>
    %347 = arith.addf %345, %346 : vector<1x128xf32>
    %c4 = arith.constant 4 : index
    %c0_73 = arith.constant 0 : index
    %348 = vector.load %arg16[%c4, %c0_73] : memref<6x1xf32, #tpu.memory_space<vmem>>, vector<1x1xf32>
    %349 = arith.mulf %347, %190 : vector<1x128xf32>
    %350 = arith.mulf %349, %232 : vector<1x128xf32>
    %351 = vector.broadcast %348 : vector<1x1xf32> to vector<1x128xf32>
    %352 = arith.mulf %351, %350 : vector<1x128xf32>
    %353 = arith.addf %329, %352 : vector<1x128xf32>
    %354 = vector.extract_strided_slice %148 {offsets = [2, 0], sizes = [1, 1024], strides = [1, 1]} : vector<8x1024xf32> to vector<1x1024xf32>
    %355 = vector.extract_strided_slice %148 {offsets = [3, 0], sizes = [1, 1024], strides = [1, 1]} : vector<8x1024xf32> to vector<1x1024xf32>
    %356 = arith.mulf %354, %355 : vector<1x1024xf32>
    %357 = vector.extract_strided_slice %356 {offsets = [0, 0], sizes = [1, 128], strides = [1, 1]} : vector<1x1024xf32> to vector<1x128xf32>
    %358 = vector.extract_strided_slice %356 {offsets = [0, 128], sizes = [1, 128], strides = [1, 1]} : vector<1x1024xf32> to vector<1x128xf32>
    %359 = arith.addf %357, %358 : vector<1x128xf32>
    %360 = vector.extract_strided_slice %356 {offsets = [0, 256], sizes = [1, 128], strides = [1, 1]} : vector<1x1024xf32> to vector<1x128xf32>
    %361 = arith.addf %359, %360 : vector<1x128xf32>
    %362 = vector.extract_strided_slice %356 {offsets = [0, 384], sizes = [1, 128], strides = [1, 1]} : vector<1x1024xf32> to vector<1x128xf32>
    %363 = arith.addf %361, %362 : vector<1x128xf32>
    %364 = vector.extract_strided_slice %356 {offsets = [0, 512], sizes = [1, 128], strides = [1, 1]} : vector<1x1024xf32> to vector<1x128xf32>
    %365 = arith.addf %363, %364 : vector<1x128xf32>
    %366 = vector.extract_strided_slice %356 {offsets = [0, 640], sizes = [1, 128], strides = [1, 1]} : vector<1x1024xf32> to vector<1x128xf32>
    %367 = arith.addf %365, %366 : vector<1x128xf32>
    %368 = vector.extract_strided_slice %356 {offsets = [0, 768], sizes = [1, 128], strides = [1, 1]} : vector<1x1024xf32> to vector<1x128xf32>
    %369 = arith.addf %367, %368 : vector<1x128xf32>
    %370 = vector.extract_strided_slice %356 {offsets = [0, 896], sizes = [1, 128], strides = [1, 1]} : vector<1x1024xf32> to vector<1x128xf32>
    %371 = arith.addf %369, %370 : vector<1x128xf32>
    %c5 = arith.constant 5 : index
    %c0_74 = arith.constant 0 : index
    %372 = vector.load %arg16[%c5, %c0_74] : memref<6x1xf32, #tpu.memory_space<vmem>>, vector<1x1xf32>
    %373 = arith.mulf %371, %211 : vector<1x128xf32>
    %374 = arith.mulf %373, %232 : vector<1x128xf32>
    %375 = vector.broadcast %372 : vector<1x1xf32> to vector<1x128xf32>
    %376 = arith.mulf %375, %374 : vector<1x128xf32>
    %377 = arith.addf %353, %376 : vector<1x128xf32>
    %378 = arith.addf %128, %377 : vector<1x128xf32>
    %c0_75 = arith.constant 0 : index
    %c0_76 = arith.constant 0 : index
    %c0_77 = arith.constant 0 : index
    %379 = vector.load %arg17[%c0_75, %c0_76, %c0_77] : memref<1x1x128xf32, #tpu.memory_space<vmem>>, vector<1x1x128xf32>
    %380 = vector.shape_cast %379 : vector<1x1x128xf32> to vector<1x128xf32>
    %381 = vector.shape_cast %378 : vector<1x128xf32> to vector<1x1x128xf32>
    tpu.vector_store %arg17[%c0_75, %c0_76, %c0_77], %381 {strides = array<i32>} : memref<1x1x128xf32, #tpu.memory_space<vmem>>, vector<1x1x128xf32>,
    return
  }
  func.func @transform_0(%arg0: i32) -> (i32, i32, i32) {
    %c0_i32 = arith.constant 0 : i32
    %c0_i32_0 = arith.constant 0 : i32
    %c0_i32_1 = arith.constant 0 : i32
    return %arg0, %c0_i32, %c0_i32_0 : i32, i32, i32
  }
  func.func @transform_1(%arg0: i32) -> (i32, i32) {
    %c0_i32 = arith.constant 0 : i32
    %c0_i32_0 = arith.constant 0 : i32
    %c0_i32_1 = arith.constant 0 : i32
    return %c0_i32, %c0_i32_0 : i32, i32
  }
  func.func @transform_2(%arg0: i32) -> (i32, i32) {
    %c0_i32 = arith.constant 0 : i32
    %c0_i32_0 = arith.constant 0 : i32
    %c0_i32_1 = arith.constant 0 : i32
    return %c0_i32, %c0_i32_0 : i32, i32
  }
  func.func @transform_3(%arg0: i32) -> (i32, i32) {
    %c0_i32 = arith.constant 0 : i32
    %c0_i32_0 = arith.constant 0 : i32
    %c0_i32_1 = arith.constant 0 : i32
    return %c0_i32, %c0_i32_0 : i32, i32
  }
  func.func @transform_4(%arg0: i32) -> (i32, i32) {
    %c0_i32 = arith.constant 0 : i32
    %c0_i32_0 = arith.constant 0 : i32
    %c0_i32_1 = arith.constant 0 : i32
    return %c0_i32, %c0_i32_0 : i32, i32
  }
  func.func @transform_5(%arg0: i32) -> (i32, i32) {
    %c0_i32 = arith.constant 0 : i32
    %c0_i32_0 = arith.constant 0 : i32
    %c0_i32_1 = arith.constant 0 : i32
    return %c0_i32, %c0_i32_0 : i32, i32
  }
  func.func @transform_6(%arg0: i32) -> (i32, i32) {
    %c0_i32 = arith.constant 0 : i32
    %c0_i32_0 = arith.constant 0 : i32
    %c0_i32_1 = arith.constant 0 : i32
    return %c0_i32, %c0_i32_0 : i32, i32
  }
  func.func @transform_7(%arg0: i32) -> (i32, i32) {
    %c0_i32 = arith.constant 0 : i32
    %c0_i32_0 = arith.constant 0 : i32
    %c0_i32_1 = arith.constant 0 : i32
    return %c0_i32, %c0_i32_0 : i32, i32
  }
  func.func @transform_8(%arg0: i32) -> (i32, i32) {
    %c0_i32 = arith.constant 0 : i32
    %c0_i32_0 = arith.constant 0 : i32
    %c0_i32_1 = arith.constant 0 : i32
    return %c0_i32, %c0_i32_0 : i32, i32
  }
  func.func @transform_9(%arg0: i32) -> (i32, i32) {
    %c0_i32 = arith.constant 0 : i32
    %c0_i32_0 = arith.constant 0 : i32
    %c0_i32_1 = arith.constant 0 : i32
    return %c0_i32, %c0_i32_0 : i32, i32
  }
  func.func @transform_10(%arg0: i32) -> (i32, i32) {
    %c0_i32 = arith.constant 0 : i32
    %c0_i32_0 = arith.constant 0 : i32
    %c0_i32_1 = arith.constant 0 : i32
    return %c0_i32, %c0_i32_0 : i32, i32
  }
  func.func @transform_11(%arg0: i32) -> (i32, i32) {
    %c0_i32 = arith.constant 0 : i32
    %c0_i32_0 = arith.constant 0 : i32
    %c0_i32_1 = arith.constant 0 : i32
    return %c0_i32, %c0_i32_0 : i32, i32
  }
  func.func @transform_12(%arg0: i32) -> (i32, i32) {
    %c0_i32 = arith.constant 0 : i32
    %c0_i32_0 = arith.constant 0 : i32
    %c0_i32_1 = arith.constant 0 : i32
    return %c0_i32, %c0_i32_0 : i32, i32
  }
  func.func @transform_13(%arg0: i32) -> (i32, i32) {
    %c0_i32 = arith.constant 0 : i32
    %c0_i32_0 = arith.constant 0 : i32
    %c0_i32_1 = arith.constant 0 : i32
    return %c0_i32, %c0_i32_0 : i32, i32
  }
  func.func @transform_14(%arg0: i32) -> (i32, i32) {
    %c0_i32 = arith.constant 0 : i32
    %c0_i32_0 = arith.constant 0 : i32
    %c0_i32_1 = arith.constant 0 : i32
    return %c0_i32, %c0_i32_0 : i32, i32
  }
  func.func @transform_15(%arg0: i32) -> (i32, i32) {
    %c0_i32 = arith.constant 0 : i32
    %c0_i32_0 = arith.constant 0 : i32
    %c0_i32_1 = arith.constant 0 : i32
    return %c0_i32, %c0_i32_0 : i32, i32
  }
  func.func @transform_16(%arg0: i32) -> (i32, i32, i32) {
    %c0_i32 = arith.constant 0 : i32
    %c0_i32_0 = arith.constant 0 : i32
    %c0_i32_1 = arith.constant 0 : i32
    return %arg0, %c0_i32, %c0_i32_0 : i32, i32, i32
  }
}

</mosaic_0001>

<llo_original>
// kernel: tpu_custom_call.1
$region0: #{tpu_custom_call.1}
  #allocation0 [shape = 'u32[]', space=smem, size = 0x4, offset = 0x4, fixed_abs, tag = 'smem constant byte address 0x4 - core index']
  #allocation1 [shape = 'u32[144,128]{1,0:T(1,128)}', space=vmem, size = 0x12000, scoped, tag = 'internal scratch']
  #allocation2 [shape = 'f32[1,1]{1,0:T(1,128)S(1)}', space=vmem, size = 0x200, scoped, tag = 'scoped memory for tpu_custom_call.1']
  %s0 = inlined_call_operand.vmem [shape: f32[1,8,2048], index: 0, kind: input, shape index: {}]
  %s1 = inlined_call_operand.vmem [shape: bf16[16,24], index: 1, kind: input, shape index: {}]
  %s2 = inlined_call_operand.vmem [shape: f32[16,1], index: 2, kind: input, shape index: {}]
  %s3 = inlined_call_operand.vmem [shape: bf16[16,48], index: 3, kind: input, shape index: {}]
  %s4 = inlined_call_operand.vmem [shape: f32[16,1], index: 4, kind: input, shape index: {}]
  %s5 = inlined_call_operand.vmem [shape: bf16[16,48], index: 5, kind: input, shape index: {}]
  %s6 = inlined_call_operand.vmem [shape: f32[16,1], index: 6, kind: input, shape index: {}]
  %s7 = inlined_call_operand.vmem [shape: bf16[128,64], index: 7, kind: input, shape index: {}]
  %s8 = inlined_call_operand.vmem [shape: f32[128,1], index: 8, kind: input, shape index: {}]
  %s9 = inlined_call_operand.vmem [shape: bf16[64,128], index: 9, kind: input, shape index: {}]
  %s10 = inlined_call_operand.vmem [shape: f32[64,1], index: 10, kind: input, shape index: {}]
  %s11 = inlined_call_operand.vmem [shape: bf16[32,64], index: 11, kind: input, shape index: {}]
  %s12 = inlined_call_operand.vmem [shape: f32[32,1], index: 12, kind: input, shape index: {}]
  %s13 = inlined_call_operand.vmem [shape: bf16[1,32], index: 13, kind: input, shape index: {}]
  %s14 = inlined_call_operand.<no memory space> [shape: f32[1,1], index: 14, kind: input, shape index: {}]
  %s15 = inlined_call_operand.vmem [shape: f32[6,1], index: 15, kind: input, shape index: {}]
  %s16 = inlined_call_operand.hbm [shape: f32[1,1,128], index: 16, kind: output, shape index: {}]
  %s17 = sld [smem:[#allocation0]]
  $region74: #{tpu_custom_call.1} parent=0
    _
  %s19 = ssub.s32 1, %s17
  %s20 = scalar_select 0, %s19, %s17
  %v21 = vstv %s14
  %22 = vst [vmem:[#allocation2] sm:$0x1] %v21
  $region1: #{tpu_custom_call.1} parent=0
    #allocation3 [shape = 'u8[512]{0}', space=vmem, size = 0x400, scoped, tag = 'output window, operand 0, single buffered']
    #allocation4 [shape = 's32[1]{0}', space=sflag, size = 0x4, scoped, tag = 'scoped memory for tpu_custom_call.1']
    %23 = vsyncpa [#allocation4], 0
    // Predicated region
    $region2: #{tpu_custom_call.1} parent=1 // pred_check
      _
    $region3: #{tpu_custom_call.1} parent=1 // pred_check_branch
      %25 = sbr.rel (0) target = $region5
    $region4: #{tpu_custom_call.1} parent=1 // pred_region
      _
    $region5: #{tpu_custom_call.1} parent=1 // pred_fallthru
      _
    // Predicated region
    $region6: #{tpu_custom_call.1} parent=1 // pred_check
      _
    $region7: #{tpu_custom_call.1} parent=1 // pred_check_branch
      %27 = sbr.rel (0) target = $region9
    $region8: #{tpu_custom_call.1} parent=1 // pred_region
      _
    $region9: #{tpu_custom_call.1} parent=1 // pred_fallthru
      _
    // Predicated region
    $region10: #{tpu_custom_call.1} parent=1 // pred_check
      _
    $region11: #{tpu_custom_call.1} parent=1 // pred_check_branch
      %29 = sbr.rel (0) target = $region13
    $region12: #{tpu_custom_call.1} parent=1 // pred_region
      _
    $region13: #{tpu_custom_call.1} parent=1 // pred_fallthru
      _
    // Predicated region
    $region14: #{tpu_custom_call.1} parent=1 // pred_check
      _
    $region15: #{tpu_custom_call.1} parent=1 // pred_check_branch
      %31 = sbr.rel (0) target = $region17
    $region16: #{tpu_custom_call.1} parent=1 // pred_region
      _
    $region17: #{tpu_custom_call.1} parent=1 // pred_fallthru
      _
    // Predicated region
    $region18: #{tpu_custom_call.1} parent=1 // pred_check
      _
    $region19: #{tpu_custom_call.1} parent=1 // pred_check_branch
      %33 = sbr.rel (0) target = $region21
    $region20: #{tpu_custom_call.1} parent=1 // pred_region
      _
    $region21: #{tpu_custom_call.1} parent=1 // pred_fallthru
      _
    // Predicated region
    $region22: #{tpu_custom_call.1} parent=1 // pred_check
      _
    $region23: #{tpu_custom_call.1} parent=1 // pred_check_branch
      %35 = sbr.rel (0) target = $region25
    $region24: #{tpu_custom_call.1} parent=1 // pred_region
      _
    $region25: #{tpu_custom_call.1} parent=1 // pred_fallthru
      _
    // Predicated region
    $region26: #{tpu_custom_call.1} parent=1 // pred_check
      _
    $region27: #{tpu_custom_call.1} parent=1 // pred_check_branch
      %37 = sbr.rel (0) target = $region29
    $region28: #{tpu_custom_call.1} parent=1 // pred_region
      _
    $region29: #{tpu_custom_call.1} parent=1 // pred_fallthru
      _
    // Predicated region
    $region30: #{tpu_custom_call.1} parent=1 // pred_check
      _
    $region31: #{tpu_custom_call.1} parent=1 // pred_check_branch
      %39 = sbr.rel (0) target = $region33
    $region32: #{tpu_custom_call.1} parent=1 // pred_region
      _
    $region33: #{tpu_custom_call.1} parent=1 // pred_fallthru
      _
    // Predicated region
    $region34: #{tpu_custom_call.1} parent=1 // pred_check
      _
    $region35: #{tpu_custom_call.1} parent=1 // pred_check_branch
      %41 = sbr.rel (0) target = $region37
    $region36: #{tpu_custom_call.1} parent=1 // pred_region
      _
    $region37: #{tpu_custom_call.1} parent=1 // pred_fallthru
      _
    // Predicated region
    $region38: #{tpu_custom_call.1} parent=1 // pred_check
      _
    $region39: #{tpu_custom_call.1} parent=1 // pred_check_branch
      %43 = sbr.rel (0) target = $region41
    $region40: #{tpu_custom_call.1} parent=1 // pred_region
      _
    $region41: #{tpu_custom_call.1} parent=1 // pred_fallthru
      _
    // Predicated region
    $region42: #{tpu_custom_call.1} parent=1 // pred_check
      _
    $region43: #{tpu_custom_call.1} parent=1 // pred_check_branch
      %45 = sbr.rel (0) target = $region45
    $region44: #{tpu_custom_call.1} parent=1 // pred_region
      _
    $region45: #{tpu_custom_call.1} parent=1 // pred_fallthru
      _
    // Predicated region
    $region46: #{tpu_custom_call.1} parent=1 // pred_check
      _
    $region47: #{tpu_custom_call.1} parent=1 // pred_check_branch
      %47 = sbr.rel (0) target = $region49
    $region48: #{tpu_custom_call.1} parent=1 // pred_region
      _
    $region49: #{tpu_custom_call.1} parent=1 // pred_fallthru
      _
    // Predicated region
    $region50: #{tpu_custom_call.1} parent=1 // pred_check
      _
    $region51: #{tpu_custom_call.1} parent=1 // pred_check_branch
      %49 = sbr.rel (0) target = $region53
    $region52: #{tpu_custom_call.1} parent=1 // pred_region
      _
    $region53: #{tpu_custom_call.1} parent=1 // pred_fallthru
      _
    // Predicated region
    $region54: #{tpu_custom_call.1} parent=1 // pred_check
      _
    $region55: #{tpu_custom_call.1} parent=1 // pred_check_branch
      %51 = sbr.rel (0) target = $region57
    $region56: #{tpu_custom_call.1} parent=1 // pred_region
      _
    $region57: #{tpu_custom_call.1} parent=1 // pred_fallthru
      _
    // Predicated region
    $region58: #{tpu_custom_call.1} parent=1 // pred_check
      _
    $region59: #{tpu_custom_call.1} parent=1 // pred_check_branch
      %53 = sbr.rel (0) target = $region61
    $region60: #{tpu_custom_call.1} parent=1 // pred_region
      _
    $region61: #{tpu_custom_call.1} parent=1 // pred_fallthru
      _
    // Predicated region
    $region62: #{tpu_custom_call.1} parent=1 // pred_check
      _
    $region63: #{tpu_custom_call.1} parent=1 // pred_check_branch
      %55 = sbr.rel (0) target = $region65
    $region64: #{tpu_custom_call.1} parent=1 // pred_region
      _
    $region65: #{tpu_custom_call.1} parent=1 // pred_fallthru
      _
    %v57 = vlaneseq
    %v58 = vand.u32 %v57, 127
    %v59 = vadd.s32 %v58, 128
    %v60 = vadd.s32 %v58, 256
    %v61 = vadd.s32 %v58, 384
    %v62 = vadd.s32 %v58, 512
    %v63 = vadd.s32 %v58, 640
    %v64 = vadd.s32 %v58, 768
    %v65 = vadd.s32 %v58, 896
    %v66 = vadd.s32 %v58, 1024
    %v67 = vadd.s32 %v58, 1152
    %v68 = vadd.s32 %v58, 1280
    %v69 = vadd.s32 %v58, 1408
    %v70 = vadd.s32 %v58, 1536
    %v71 = vadd.s32 %v58, 1664
    %v72 = vadd.s32 %v58, 1792
    %v73 = vadd.s32 %v58, 1920
    %v74 = vld [vmem:[%s0] sm:$0xff]
    %v75 = vld [vmem:[%s0 + $0x8] sm:$0xff]
    %v76 = vld [vmem:[%s0 + $0x10] sm:$0xff]
    %v77 = vld [vmem:[%s0 + $0x18] sm:$0xff]
    %v78 = vld [vmem:[%s0 + $0x20] sm:$0xff]
    %v79 = vld [vmem:[%s0 + $0x28] sm:$0xff]
    %v80 = vld [vmem:[%s0 + $0x30] sm:$0xff]
    %v81 = vld [vmem:[%s0 + $0x38] sm:$0xff]
    %v82 = vld [vmem:[%s0 + $0x40] sm:$0xff]
    %v83 = vld [vmem:[%s0 + $0x48] sm:$0xff]
    %v84 = vld [vmem:[%s0 + $0x50] sm:$0xff]
    %v85 = vld [vmem:[%s0 + $0x58] sm:$0xff]
    %v86 = vld [vmem:[%s0 + $0x60] sm:$0xff]
    %v87 = vld [vmem:[%s0 + $0x68] sm:$0xff]
    %v88 = vld [vmem:[%s0 + $0x70] sm:$0xff]
    %v89 = vld [vmem:[%s0 + $0x78] sm:$0xff]
    %vm90 = vcmp.ge.s32.totalorder %v58, 128
    %vm91 = vcmp.ge.s32.totalorder %v59, 128
    %vm92 = vcmp.ge.s32.totalorder %v60, 128
    %vm93 = vcmp.ge.s32.totalorder %v61, 128
    %vm94 = vcmp.ge.s32.totalorder %v62, 128
    %vm95 = vcmp.ge.s32.totalorder %v63, 128
    %vm96 = vcmp.ge.s32.totalorder %v64, 128
    %vm97 = vcmp.ge.s32.totalorder %v65, 128
    %vm98 = vcmp.ge.s32.totalorder %v66, 128
    %vm99 = vcmp.ge.s32.totalorder %v67, 128
    %vm100 = vcmp.ge.s32.totalorder %v68, 128
    %vm101 = vcmp.ge.s32.totalorder %v69, 128
    %vm102 = vcmp.ge.s32.totalorder %v70, 128
    %vm103 = vcmp.ge.s32.totalorder %v71, 128
    %vm104 = vcmp.ge.s32.totalorder %v72, 128
    %vm105 = vcmp.ge.s32.totalorder %v73, 128
    %v106 = vsel %vm90, 1, 0
    %v107 = vsel %vm91, 1, 0
    %v108 = vsel %vm92, 1, 0
    %v109 = vsel %vm93, 1, 0
    %v110 = vsel %vm94, 1, 0
    %v111 = vsel %vm95, 1, 0
    %v112 = vsel %vm96, 1, 0
    %v113 = vsel %vm97, 1, 0
    %v114 = vsel %vm98, 1, 0
    %v115 = vsel %vm99, 1, 0
    %v116 = vsel %vm100, 1, 0
    %v117 = vsel %vm101, 1, 0
    %v118 = vsel %vm102, 1, 0
    %v119 = vsel %vm103, 1, 0
    %v120 = vsel %vm104, 1, 0
    %v121 = vsel %vm105, 1, 0
    %vm122 = vcmp.eq.s32.totalorder %v106, 1
    %vm123 = vcmp.eq.s32.totalorder %v107, 1
    %vm124 = vcmp.eq.s32.totalorder %v108, 1
    %vm125 = vcmp.eq.s32.totalorder %v109, 1
    %vm126 = vcmp.eq.s32.totalorder %v110, 1
    %vm127 = vcmp.eq.s32.totalorder %v111, 1
    %vm128 = vcmp.eq.s32.totalorder %v112, 1
    %vm129 = vcmp.eq.s32.totalorder %v113, 1
    %vm130 = vcmp.eq.s32.totalorder %v114, 1
    %vm131 = vcmp.eq.s32.totalorder %v115, 1
    %vm132 = vcmp.eq.s32.totalorder %v116, 1
    %vm133 = vcmp.eq.s32.totalorder %v117, 1
    %vm134 = vcmp.eq.s32.totalorder %v118, 1
    %vm135 = vcmp.eq.s32.totalorder %v119, 1
    %vm136 = vcmp.eq.s32.totalorder %v120, 1
    %vm137 = vcmp.eq.s32.totalorder %v121, 1
    %v138 = vsel %vm122, %v89, 0.0
    %v139 = vsel %vm123, %v74, 0.0
    %v140 = vsel %vm124, %v75, 0.0
    %v141 = vsel %vm125, %v76, 0.0
    %v142 = vsel %vm126, %v77, 0.0
    %v143 = vsel %vm127, %v78, 0.0
    %v144 = vsel %vm128, %v79, 0.0
    %v145 = vsel %vm129, %v80, 0.0
    %v146 = vsel %vm130, %v81, 0.0
    %v147 = vsel %vm131, %v82, 0.0
    %v148 = vsel %vm132, %v83, 0.0
    %v149 = vsel %vm133, %v84, 0.0
    %v150 = vsel %vm134, %v85, 0.0
    %v151 = vsel %vm135, %v86, 0.0
    %v152 = vsel %vm136, %v87, 0.0
    %v153 = vsel %vm137, %v88, 0.0
    %vm154 = vcmp.lt.s32.totalorder %v58, 1920
    %vm155 = vcmp.lt.s32.totalorder %v59, 1920
    %vm156 = vcmp.lt.s32.totalorder %v60, 1920
    %vm157 = vcmp.lt.s32.totalorder %v61, 1920
    %vm158 = vcmp.lt.s32.totalorder %v62, 1920
    %vm159 = vcmp.lt.s32.totalorder %v63, 1920
    %vm160 = vcmp.lt.s32.totalorder %v64, 1920
    %vm161 = vcmp.lt.s32.totalorder %v65, 1920
    %vm162 = vcmp.lt.s32.totalorder %v66, 1920
    %vm163 = vcmp.lt.s32.totalorder %v67, 1920
    %vm164 = vcmp.lt.s32.totalorder %v68, 1920
    %vm165 = vcmp.lt.s32.totalorder %v69, 1920
    %vm166 = vcmp.lt.s32.totalorder %v70, 1920
    %vm167 = vcmp.lt.s32.totalorder %v71, 1920
    %vm168 = vcmp.lt.s32.totalorder %v72, 1920
    %vm169 = vcmp.lt.s32.totalorder %v73, 1920
    %v170 = vsel %vm154, 1, 0
    %v171 = vsel %vm155, 1, 0
    %v172 = vsel %vm156, 1, 0
    %v173 = vsel %vm157, 1, 0
    %v174 = vsel %vm158, 1, 0
    %v175 = vsel %vm159, 1, 0
    %v176 = vsel %vm160, 1, 0
    %v177 = vsel %vm161, 1, 0
    %v178 = vsel %vm162, 1, 0
    %v179 = vsel %vm163, 1, 0
    %v180 = vsel %vm164, 1, 0
    %v181 = vsel %vm165, 1, 0
    %v182 = vsel %vm166, 1, 0
    %v183 = vsel %vm167, 1, 0
    %v184 = vsel %vm168, 1, 0
    %v185 = vsel %vm169, 1, 0
    %vm186 = vcmp.eq.s32.totalorder %v170, 1
    %vm187 = vcmp.eq.s32.totalorder %v171, 1
    %vm188 = vcmp.eq.s32.totalorder %v172, 1
    %vm189 = vcmp.eq.s32.totalorder %v173, 1
    %vm190 = vcmp.eq.s32.totalorder %v174, 1
    %vm191 = vcmp.eq.s32.totalorder %v175, 1
    %vm192 = vcmp.eq.s32.totalorder %v176, 1
    %vm193 = vcmp.eq.s32.totalorder %v177, 1
    %vm194 = vcmp.eq.s32.totalorder %v178, 1
    %vm195 = vcmp.eq.s32.totalorder %v179, 1
    %vm196 = vcmp.eq.s32.totalorder %v180, 1
    %vm197 = vcmp.eq.s32.totalorder %v181, 1
    %vm198 = vcmp.eq.s32.totalorder %v182, 1
    %vm199 = vcmp.eq.s32.totalorder %v183, 1
    %vm200 = vcmp.eq.s32.totalorder %v184, 1
    %vm201 = vcmp.eq.s32.totalorder %v185, 1
    %v202 = vsel %vm186, %v75, 0.0
    %v203 = vsel %vm187, %v76, 0.0
    %v204 = vsel %vm188, %v77, 0.0
    %v205 = vsel %vm189, %v78, 0.0
    %v206 = vsel %vm190, %v79, 0.0
    %v207 = vsel %vm191, %v80, 0.0
    %v208 = vsel %vm192, %v81, 0.0
    %v209 = vsel %vm193, %v82, 0.0
    %v210 = vsel %vm194, %v83, 0.0
    %v211 = vsel %vm195, %v84, 0.0
    %v212 = vsel %vm196, %v85, 0.0
    %v213 = vsel %vm197, %v86, 0.0
    %v214 = vsel %vm198, %v87, 0.0
    %v215 = vsel %vm199, %v88, 0.0
    %v216 = vsel %vm200, %v89, 0.0
    %v217 = vsel %vm201, %v74, 0.0
    %v218 = vpack.c.bf16 %v74, %v138
    %v219 = vpack.c.bf16 %v75, %v139
    %v220 = vpack.c.bf16 %v76, %v140
    %v221 = vpack.c.bf16 %v77, %v141
    %v222 = vpack.c.bf16 %v78, %v142
    %v223 = vpack.c.bf16 %v79, %v143
    %v224 = vpack.c.bf16 %v80, %v144
    %v225 = vpack.c.bf16 %v81, %v145
    %v226 = vpack.c.bf16 %v82, %v146
    %v227 = vpack.c.bf16 %v83, %v147
    %v228 = vpack.c.bf16 %v84, %v148
    %v229 = vpack.c.bf16 %v85, %v149
    %v230 = vpack.c.bf16 %v86, %v150
    %v231 = vpack.c.bf16 %v87, %v151
    %v232 = vpack.c.bf16 %v88, %v152
    %v233 = vpack.c.bf16 %v89, %v153
    %v234 = vpack.c.bf16 %v202, %v202
    %v235 = vpack.c.bf16 %v203, %v203
    %v236 = vpack.c.bf16 %v204, %v204
    %v237 = vpack.c.bf16 %v205, %v205
    %v238 = vpack.c.bf16 %v206, %v206
    %v239 = vpack.c.bf16 %v207, %v207
    %v240 = vpack.c.bf16 %v208, %v208
    %v241 = vpack.c.bf16 %v209, %v209
    %v242 = vpack.c.bf16 %v210, %v210
    %v243 = vpack.c.bf16 %v211, %v211
    %v244 = vpack.c.bf16 %v212, %v212
    %v245 = vpack.c.bf16 %v213, %v213
    %v246 = vpack.c.bf16 %v214, %v214
    %v247 = vpack.c.bf16 %v215, %v215
    %v248 = vpack.c.bf16 %v216, %v216
    %v249 = vpack.c.bf16 %v217, %v217
    %v250 = vld [vmem:[%s1] sm:$0xf]
    %v251 = vld [vmem:[%s1 + $0x4] sm:$0xf]
    %v252 = vld [vmem:[%s2] sm:$0xff]
    %v253 = vld [vmem:[%s2 + $0x8] sm:$0xff]
    %255 = vset.pattern.permute.xlu0 0
    %256 = vperm.xlu0 %255, %v252
    %v257 = vpop.permute.xlu0 %256
    %260 = vset.pattern.permute.xlu0 0
    %261 = vperm.xlu0 %260, %v253
    %v262 = vpop.permute.xlu0 %261
    %v266 = vunpack.c.l.b16 %v250
    %v267 = vunpack.c.l.b16 %v251
    %v268 = vpack.c.b16 %v267, %v266
    %vm269 = vcmask 195584
    %v271 = vsel %vm269, %v268, 0
    %vm273 = vcmask 1043456
    %v275 = vsel %vm273, %v234, 0
    %v278 = vsel %vm273, %v235, 0
    %v281 = vsel %vm273, %v236, 0
    %v284 = vsel %vm273, %v237, 0
    %v287 = vsel %vm273, %v238, 0
    %v290 = vsel %vm273, %v239, 0
    %v293 = vsel %vm273, %v240, 0
    %v296 = vsel %vm273, %v241, 0
    %v299 = vsel %vm273, %v242, 0
    %v302 = vsel %vm273, %v243, 0
    %v305 = vsel %vm273, %v244, 0
    %v308 = vsel %vm273, %v245, 0
    %v311 = vsel %vm273, %v246, 0
    %v314 = vsel %vm273, %v247, 0
    %v317 = vsel %vm273, %v248, 0
    %v320 = vsel %vm273, %v249, 0
    %322 = vmatprep.subr.bf16.mxu0 0
    %323 = vmatpush1.bf16.msra.mxu0 0
    %324 = vmatprep.subr.bf16.mxu0 0
    %325 = vmatpush1.bf16.msra.mxu0 0
    %326 = vmatprep.subr.bf16.mxu0 0
    %327 = vmatpush1.bf16.msra.mxu0 0
    %328 = vmatprep.subr.bf16.mxu0 0
    %329 = vmatpush1.bf16.msra.mxu0 0
    %330 = vmatprep.subr.bf16.mxu0 0
    %331 = vmatpush1.bf16.msra.mxu0 0
    %332 = vmatprep.subr.bf16.mxu0 0
    %333 = vmatpush1.bf16.msra.mxu0 0
    %334 = vmatprep.subr.bf16.mxu0 %v278
    %335 = vmatpush1.bf16.msra.mxu0 %v275
    %336 = vmatprep.subr.bf16.mxu0 %v219
    %337 = vmatpush1.bf16.msra.mxu0 %v218
    %338 = vmatprep.subr.bf16.mxu0 0
    %339 = vmatpush2.bf16.msra.mxu0 0
    %340 = vmatprep.subr.bf16.mxu0 0
    %341 = vmatpush2.bf16.msra.mxu0 0
    %342 = vmatprep.subr.bf16.mxu0 0
    %343 = vmatpush2.bf16.msra.mxu0 0
    %344 = vmatprep.subr.bf16.mxu0 0
    %345 = vmatpush2.bf16.msra.mxu0 0
    %346 = vmatprep.subr.bf16.mxu0 0
    %347 = vmatpush2.bf16.msra.mxu0 0
    %348 = vmatprep.subr.bf16.mxu0 0
    %349 = vmatpush2.bf16.msra.mxu0 0
    %350 = vmatprep.subr.bf16.mxu0 0
    %351 = vmatpush2.bf16.msra.mxu0 0
    %352 = vmatprep.subr.bf16.mxu0 0
    %353 = vmatpush2.bf16.msra.mxu0 0
    %354 = vmatprep.mubr.bf16.mxu0 0
    %355 = vmatmul.mubr.bf16.gmra.mxu0 %v271
    %v356 = vpop.f32.mrf.mxu0
    %v357 = vadd.f32 %v257, %v356
    %v358 = vpop.f32.mrf.mxu0
    %v359 = vadd.f32 %v257, %v358
    %v360 = vpop.f32.mrf.mxu0
    %v361 = vadd.f32 %v262, %v360
    %v362 = vpop.f32.mrf.mxu0
    %v363 = vadd.f32 %v262, %v362
    %364 = vdwg.mxu0
    %365 = vmatprep.subr.bf16.mxu0 0
    %366 = vmatpush1.bf16.msra.mxu0 0
    %367 = vmatprep.subr.bf16.mxu0 0
    %368 = vmatpush1.bf16.msra.mxu0 0
    %369 = vmatprep.subr.bf16.mxu0 0
    %370 = vmatpush1.bf16.msra.mxu0 0
    %371 = vmatprep.subr.bf16.mxu0 0
    %372 = vmatpush1.bf16.msra.mxu0 0
    %373 = vmatprep.subr.bf16.mxu0 0
    %374 = vmatpush1.bf16.msra.mxu0 0
    %375 = vmatprep.subr.bf16.mxu0 0
    %376 = vmatpush1.bf16.msra.mxu0 0
    %377 = vmatprep.subr.bf16.mxu0 %v284
    %378 = vmatpush1.bf16.msra.mxu0 %v281
    %379 = vmatprep.subr.bf16.mxu0 %v221
    %380 = vmatpush1.bf16.msra.mxu0 %v220
    %381 = vmatprep.subr.bf16.mxu0 0
    %382 = vmatpush2.bf16.msra.mxu0 0
    %383 = vmatprep.subr.bf16.mxu0 0
    %384 = vmatpush2.bf16.msra.mxu0 0
    %385 = vmatprep.subr.bf16.mxu0 0
    %386 = vmatpush2.bf16.msra.mxu0 0
    %387 = vmatprep.subr.bf16.mxu0 0
    %388 = vmatpush2.bf16.msra.mxu0 0
    %389 = vmatprep.subr.bf16.mxu0 0
    %390 = vmatpush2.bf16.msra.mxu0 0
    %391 = vmatprep.subr.bf16.mxu0 0
    %392 = vmatpush2.bf16.msra.mxu0 0
    %393 = vmatprep.subr.bf16.mxu0 0
    %394 = vmatpush2.bf16.msra.mxu0 0
    %395 = vmatprep.subr.bf16.mxu0 0
    %396 = vmatpush2.bf16.msra.mxu0 0
    %397 = vmatprep.mubr.bf16.mxu0 0
    %398 = vmatmul.mubr.bf16.gmra.mxu0 %v271
    %v399 = vpop.f32.mrf.mxu0
    %v400 = vadd.f32 %v257, %v399
    %v401 = vpop.f32.mrf.mxu0
    %v402 = vadd.f32 %v257, %v401
    %v403 = vpop.f32.mrf.mxu0
    %v404 = vadd.f32 %v262, %v403
    %v405 = vpop.f32.mrf.mxu0
    %v406 = vadd.f32 %v262, %v405
    %407 = vdwg.mxu0
    %408 = vmatprep.subr.bf16.mxu0 0
    %409 = vmatpush1.bf16.msra.mxu0 0
    %410 = vmatprep.subr.bf16.mxu0 0
    %411 = vmatpush1.bf16.msra.mxu0 0
    %412 = vmatprep.subr.bf16.mxu0 0
    %413 = vmatpush1.bf16.msra.mxu0 0
    %414 = vmatprep.subr.bf16.mxu0 0
    %415 = vmatpush1.bf16.msra.mxu0 0
    %416 = vmatprep.subr.bf16.mxu0 0
    %417 = vmatpush1.bf16.msra.mxu0 0
    %418 = vmatprep.subr.bf16.mxu0 0
    %419 = vmatpush1.bf16.msra.mxu0 0
    %420 = vmatprep.subr.bf16.mxu0 %v290
    %421 = vmatpush1.bf16.msra.mxu0 %v287
    %422 = vmatprep.subr.bf16.mxu0 %v223
    %423 = vmatpush1.bf16.msra.mxu0 %v222
    %424 = vmatprep.subr.bf16.mxu0 0
    %425 = vmatpush2.bf16.msra.mxu0 0
    %426 = vmatprep.subr.bf16.mxu0 0
    %427 = vmatpush2.bf16.msra.mxu0 0
    %428 = vmatprep.subr.bf16.mxu0 0
    %429 = vmatpush2.bf16.msra.mxu0 0
    %430 = vmatprep.subr.bf16.mxu0 0
    %431 = vmatpush2.bf16.msra.mxu0 0
    %432 = vmatprep.subr.bf16.mxu0 0
    %433 = vmatpush2.bf16.msra.mxu0 0
    %434 = vmatprep.subr.bf16.mxu0 0
    %435 = vmatpush2.bf16.msra.mxu0 0
    %436 = vmatprep.subr.bf16.mxu0 0
    %437 = vmatpush2.bf16.msra.mxu0 0
    %438 = vmatprep.subr.bf16.mxu0 0
    %439 = vmatpush2.bf16.msra.mxu0 0
    %440 = vmatprep.mubr.bf16.mxu0 0
    %441 = vmatmul.mubr.bf16.gmra.mxu0 %v271
    %v442 = vpop.f32.mrf.mxu0
    %v443 = vadd.f32 %v257, %v442
    %v444 = vpop.f32.mrf.mxu0
    %v445 = vadd.f32 %v257, %v444
    %v446 = vpop.f32.mrf.mxu0
    %v447 = vadd.f32 %v262, %v446
    %v448 = vpop.f32.mrf.mxu0
    %v449 = vadd.f32 %v262, %v448
    %450 = vdwg.mxu0
    %451 = vmatprep.subr.bf16.mxu0 0
    %452 = vmatpush1.bf16.msra.mxu0 0
    %453 = vmatprep.subr.bf16.mxu0 0
    %454 = vmatpush1.bf16.msra.mxu0 0
    %455 = vmatprep.subr.bf16.mxu0 0
    %456 = vmatpush1.bf16.msra.mxu0 0
    %457 = vmatprep.subr.bf16.mxu0 0
    %458 = vmatpush1.bf16.msra.mxu0 0
    %459 = vmatprep.subr.bf16.mxu0 0
    %460 = vmatpush1.bf16.msra.mxu0 0
    %461 = vmatprep.subr.bf16.mxu0 0
    %462 = vmatpush1.bf16.msra.mxu0 0
    %463 = vmatprep.subr.bf16.mxu0 %v296
    %464 = vmatpush1.bf16.msra.mxu0 %v293
    %465 = vmatprep.subr.bf16.mxu0 %v225
    %466 = vmatpush1.bf16.msra.mxu0 %v224
    %467 = vmatprep.subr.bf16.mxu0 0
    %468 = vmatpush2.bf16.msra.mxu0 0
    %469 = vmatprep.subr.bf16.mxu0 0
    %470 = vmatpush2.bf16.msra.mxu0 0
    %471 = vmatprep.subr.bf16.mxu0 0
    %472 = vmatpush2.bf16.msra.mxu0 0
    %473 = vmatprep.subr.bf16.mxu0 0
    %474 = vmatpush2.bf16.msra.mxu0 0
    %475 = vmatprep.subr.bf16.mxu0 0
    %476 = vmatpush2.bf16.msra.mxu0 0
    %477 = vmatprep.subr.bf16.mxu0 0
    %478 = vmatpush2.bf16.msra.mxu0 0
    %479 = vmatprep.subr.bf16.mxu0 0
    %480 = vmatpush2.bf16.msra.mxu0 0
    %481 = vmatprep.subr.bf16.mxu0 0
    %482 = vmatpush2.bf16.msra.mxu0 0
    %483 = vmatprep.mubr.bf16.mxu0 0
    %484 = vmatmul.mubr.bf16.gmra.mxu0 %v271
    %v485 = vpop.f32.mrf.mxu0
    %v486 = vadd.f32 %v257, %v485
    %v487 = vpop.f32.mrf.mxu0
    %v488 = vadd.f32 %v257, %v487
    %v489 = vpop.f32.mrf.mxu0
    %v490 = vadd.f32 %v262, %v489
    %v491 = vpop.f32.mrf.mxu0
    %v492 = vadd.f32 %v262, %v491
    %493 = vdwg.mxu0
    %494 = vmatprep.subr.bf16.mxu0 0
    %495 = vmatpush1.bf16.msra.mxu0 0
    %496 = vmatprep.subr.bf16.mxu0 0
    %497 = vmatpush1.bf16.msra.mxu0 0
    %498 = vmatprep.subr.bf16.mxu0 0
    %499 = vmatpush1.bf16.msra.mxu0 0
    %500 = vmatprep.subr.bf16.mxu0 0
    %501 = vmatpush1.bf16.msra.mxu0 0
    %502 = vmatprep.subr.bf16.mxu0 0
    %503 = vmatpush1.bf16.msra.mxu0 0
    %504 = vmatprep.subr.bf16.mxu0 0
    %505 = vmatpush1.bf16.msra.mxu0 0
    %506 = vmatprep.subr.bf16.mxu0 %v302
    %507 = vmatpush1.bf16.msra.mxu0 %v299
    %508 = vmatprep.subr.bf16.mxu0 %v227
    %509 = vmatpush1.bf16.msra.mxu0 %v226
    %510 = vmatprep.subr.bf16.mxu0 0
    %511 = vmatpush2.bf16.msra.mxu0 0
    %512 = vmatprep.subr.bf16.mxu0 0
    %513 = vmatpush2.bf16.msra.mxu0 0
    %514 = vmatprep.subr.bf16.mxu0 0
    %515 = vmatpush2.bf16.msra.mxu0 0
    %516 = vmatprep.subr.bf16.mxu0 0
    %517 = vmatpush2.bf16.msra.mxu0 0
    %518 = vmatprep.subr.bf16.mxu0 0
    %519 = vmatpush2.bf16.msra.mxu0 0
    %520 = vmatprep.subr.bf16.mxu0 0
    %521 = vmatpush2.bf16.msra.mxu0 0
    %522 = vmatprep.subr.bf16.mxu0 0
    %523 = vmatpush2.bf16.msra.mxu0 0
    %524 = vmatprep.subr.bf16.mxu0 0
    %525 = vmatpush2.bf16.msra.mxu0 0
    %526 = vmatprep.mubr.bf16.mxu0 0
    %527 = vmatmul.mubr.bf16.gmra.mxu0 %v271
    %v528 = vpop.f32.mrf.mxu0
    %v529 = vadd.f32 %v257, %v528
    %v530 = vpop.f32.mrf.mxu0
    %v531 = vadd.f32 %v257, %v530
    %v532 = vpop.f32.mrf.mxu0
    %v533 = vadd.f32 %v262, %v532
    %v534 = vpop.f32.mrf.mxu0
    %v535 = vadd.f32 %v262, %v534
    %536 = vdwg.mxu0
    %537 = vmatprep.subr.bf16.mxu0 0
    %538 = vmatpush1.bf16.msra.mxu0 0
    %539 = vmatprep.subr.bf16.mxu0 0
    %540 = vmatpush1.bf16.msra.mxu0 0
    %541 = vmatprep.subr.bf16.mxu0 0
    %542 = vmatpush1.bf16.msra.mxu0 0
    %543 = vmatprep.subr.bf16.mxu0 0
    %544 = vmatpush1.bf16.msra.mxu0 0
    %545 = vmatprep.subr.bf16.mxu0 0
    %546 = vmatpush1.bf16.msra.mxu0 0
    %547 = vmatprep.subr.bf16.mxu0 0
    %548 = vmatpush1.bf16.msra.mxu0 0
    %549 = vmatprep.subr.bf16.mxu0 %v308
    %550 = vmatpush1.bf16.msra.mxu0 %v305
    %551 = vmatprep.subr.bf16.mxu0 %v229
    %552 = vmatpush1.bf16.msra.mxu0 %v228
    %553 = vmatprep.subr.bf16.mxu0 0
    %554 = vmatpush2.bf16.msra.mxu0 0
    %555 = vmatprep.subr.bf16.mxu0 0
    %556 = vmatpush2.bf16.msra.mxu0 0
    %557 = vmatprep.subr.bf16.mxu0 0
    %558 = vmatpush2.bf16.msra.mxu0 0
    %559 = vmatprep.subr.bf16.mxu0 0
    %560 = vmatpush2.bf16.msra.mxu0 0
    %561 = vmatprep.subr.bf16.mxu0 0
    %562 = vmatpush2.bf16.msra.mxu0 0
    %563 = vmatprep.subr.bf16.mxu0 0
    %564 = vmatpush2.bf16.msra.mxu0 0
    %565 = vmatprep.subr.bf16.mxu0 0
    %566 = vmatpush2.bf16.msra.mxu0 0
    %567 = vmatprep.subr.bf16.mxu0 0
    %568 = vmatpush2.bf16.msra.mxu0 0
    %569 = vmatprep.mubr.bf16.mxu0 0
    %570 = vmatmul.mubr.bf16.gmra.mxu0 %v271
    %v571 = vpop.f32.mrf.mxu0
    %v572 = vadd.f32 %v257, %v571
    %v573 = vpop.f32.mrf.mxu0
    %v574 = vadd.f32 %v257, %v573
    %v575 = vpop.f32.mrf.mxu0
    %v576 = vadd.f32 %v262, %v575
    %v577 = vpop.f32.mrf.mxu0
    %v578 = vadd.f32 %v262, %v577
    %579 = vdwg.mxu0
    %580 = vmatprep.subr.bf16.mxu0 0
    %581 = vmatpush1.bf16.msra.mxu0 0
    %582 = vmatprep.subr.bf16.mxu0 0
    %583 = vmatpush1.bf16.msra.mxu0 0
    %584 = vmatprep.subr.bf16.mxu0 0
    %585 = vmatpush1.bf16.msra.mxu0 0
    %586 = vmatprep.subr.bf16.mxu0 0
    %587 = vmatpush1.bf16.msra.mxu0 0
    %588 = vmatprep.subr.bf16.mxu0 0
    %589 = vmatpush1.bf16.msra.mxu0 0
    %590 = vmatprep.subr.bf16.mxu0 0
    %591 = vmatpush1.bf16.msra.mxu0 0
    %592 = vmatprep.subr.bf16.mxu0 %v314
    %593 = vmatpush1.bf16.msra.mxu0 %v311
    %594 = vmatprep.subr.bf16.mxu0 %v231
    %595 = vmatpush1.bf16.msra.mxu0 %v230
    %596 = vmatprep.subr.bf16.mxu0 0
    %597 = vmatpush2.bf16.msra.mxu0 0
    %598 = vmatprep.subr.bf16.mxu0 0
    %599 = vmatpush2.bf16.msra.mxu0 0
    %600 = vmatprep.subr.bf16.mxu0 0
    %601 = vmatpush2.bf16.msra.mxu0 0
    %602 = vmatprep.subr.bf16.mxu0 0
    %603 = vmatpush2.bf16.msra.mxu0 0
    %604 = vmatprep.subr.bf16.mxu0 0
    %605 = vmatpush2.bf16.msra.mxu0 0
    %606 = vmatprep.subr.bf16.mxu0 0
    %607 = vmatpush2.bf16.msra.mxu0 0
    %608 = vmatprep.subr.bf16.mxu0 0
    %609 = vmatpush2.bf16.msra.mxu0 0
    %610 = vmatprep.subr.bf16.mxu0 0
    %611 = vmatpush2.bf16.msra.mxu0 0
    %612 = vmatprep.mubr.bf16.mxu0 0
    %613 = vmatmul.mubr.bf16.gmra.mxu0 %v271
    %v614 = vpop.f32.mrf.mxu0
    %v615 = vadd.f32 %v257, %v614
    %v616 = vpop.f32.mrf.mxu0
    %v617 = vadd.f32 %v257, %v616
    %v618 = vpop.f32.mrf.mxu0
    %v619 = vadd.f32 %v262, %v618
    %v620 = vpop.f32.mrf.mxu0
    %v621 = vadd.f32 %v262, %v620
    %622 = vdwg.mxu0
    %623 = vmatprep.subr.bf16.mxu0 0
    %624 = vmatpush1.bf16.msra.mxu0 0
    %625 = vmatprep.subr.bf16.mxu0 0
    %626 = vmatpush1.bf16.msra.mxu0 0
    %627 = vmatprep.subr.bf16.mxu0 0
    %628 = vmatpush1.bf16.msra.mxu0 0
    %629 = vmatprep.subr.bf16.mxu0 0
    %630 = vmatpush1.bf16.msra.mxu0 0
    %631 = vmatprep.subr.bf16.mxu0 0
    %632 = vmatpush1.bf16.msra.mxu0 0
    %633 = vmatprep.subr.bf16.mxu0 0
    %634 = vmatpush1.bf16.msra.mxu0 0
    %635 = vmatprep.subr.bf16.mxu0 %v320
    %636 = vmatpush1.bf16.msra.mxu0 %v317
    %637 = vmatprep.subr.bf16.mxu0 %v233
    %638 = vmatpush1.bf16.msra.mxu0 %v232
    %639 = vmatprep.subr.bf16.mxu0 0
    %640 = vmatpush2.bf16.msra.mxu0 0
    %641 = vmatprep.subr.bf16.mxu0 0
    %642 = vmatpush2.bf16.msra.mxu0 0
    %643 = vmatprep.subr.bf16.mxu0 0
    %644 = vmatpush2.bf16.msra.mxu0 0
    %645 = vmatprep.subr.bf16.mxu0 0
    %646 = vmatpush2.bf16.msra.mxu0 0
    %647 = vmatprep.subr.bf16.mxu0 0
    %648 = vmatpush2.bf16.msra.mxu0 0
    %649 = vmatprep.subr.bf16.mxu0 0
    %650 = vmatpush2.bf16.msra.mxu0 0
    %651 = vmatprep.subr.bf16.mxu0 0
    %652 = vmatpush2.bf16.msra.mxu0 0
    %653 = vmatprep.subr.bf16.mxu0 0
    %654 = vmatpush2.bf16.msra.mxu0 0
    %655 = vmatprep.mubr.bf16.mxu0 0
    %656 = vmatmul.mubr.bf16.gmra.mxu0 %v271
    %v657 = vpop.f32.mrf.mxu0
    %v658 = vadd.f32 %v257, %v657
    %v659 = vpop.f32.mrf.mxu0
    %v660 = vadd.f32 %v257, %v659
    %v661 = vpop.f32.mrf.mxu0
    %v662 = vadd.f32 %v262, %v661
    %v663 = vpop.f32.mrf.mxu0
    %v664 = vadd.f32 %v262, %v663
    %665 = vdwg.mxu0
    %vm666 = vcmp.ge.f32.partialorder %v357, 0.0
    %vm667 = vcmp.ge.f32.partialorder %v359, 0.0
    %vm668 = vcmp.ge.f32.partialorder %v400, 0.0
    %vm669 = vcmp.ge.f32.partialorder %v402, 0.0
    %vm670 = vcmp.ge.f32.partialorder %v443, 0.0
    %vm671 = vcmp.ge.f32.partialorder %v445, 0.0
    %vm672 = vcmp.ge.f32.partialorder %v486, 0.0
    %vm673 = vcmp.ge.f32.partialorder %v488, 0.0
    %vm674 = vcmp.ge.f32.partialorder %v529, 0.0
    %vm675 = vcmp.ge.f32.partialorder %v531, 0.0
    %vm676 = vcmp.ge.f32.partialorder %v572, 0.0
    %vm677 = vcmp.ge.f32.partialorder %v574, 0.0
    %vm678 = vcmp.ge.f32.partialorder %v615, 0.0
    %vm679 = vcmp.ge.f32.partialorder %v617, 0.0
    %vm680 = vcmp.ge.f32.partialorder %v658, 0.0
    %vm681 = vcmp.ge.f32.partialorder %v660, 0.0
    %vm682 = vcmp.ge.f32.partialorder %v361, 0.0
    %vm683 = vcmp.ge.f32.partialorder %v363, 0.0
    %vm684 = vcmp.ge.f32.partialorder %v404, 0.0
    %vm685 = vcmp.ge.f32.partialorder %v406, 0.0
    %vm686 = vcmp.ge.f32.partialorder %v447, 0.0
    %vm687 = vcmp.ge.f32.partialorder %v449, 0.0
    %vm688 = vcmp.ge.f32.partialorder %v490, 0.0
    %vm689 = vcmp.ge.f32.partialorder %v492, 0.0
    %vm690 = vcmp.ge.f32.partialorder %v533, 0.0
    %vm691 = vcmp.ge.f32.partialorder %v535, 0.0
    %vm692 = vcmp.ge.f32.partialorder %v576, 0.0
    %vm693 = vcmp.ge.f32.partialorder %v578, 0.0
    %vm694 = vcmp.ge.f32.partialorder %v619, 0.0
    %vm695 = vcmp.ge.f32.partialorder %v621, 0.0
    %vm696 = vcmp.ge.f32.partialorder %v662, 0.0
    %vm697 = vcmp.ge.f32.partialorder %v664, 0.0
    %v698 = vmul.f32 %v357, 0.2
    %v699 = vmul.f32 %v359, 0.2
    %v700 = vmul.f32 %v400, 0.2
    %v701 = vmul.f32 %v402, 0.2
    %v702 = vmul.f32 %v443, 0.2
    %v703 = vmul.f32 %v445, 0.2
    %v704 = vmul.f32 %v486, 0.2
    %v705 = vmul.f32 %v488, 0.2
    %v706 = vmul.f32 %v529, 0.2
    %v707 = vmul.f32 %v531, 0.2
    %v708 = vmul.f32 %v572, 0.2
    %v709 = vmul.f32 %v574, 0.2
    %v710 = vmul.f32 %v615, 0.2
    %v711 = vmul.f32 %v617, 0.2
    %v712 = vmul.f32 %v658, 0.2
    %v713 = vmul.f32 %v660, 0.2
    %v714 = vmul.f32 %v361, 0.2
    %v715 = vmul.f32 %v363, 0.2
    %v716 = vmul.f32 %v404, 0.2
    %v717 = vmul.f32 %v406, 0.2
    %v718 = vmul.f32 %v447, 0.2
    %v719 = vmul.f32 %v449, 0.2
    %v720 = vmul.f32 %v490, 0.2
    %v721 = vmul.f32 %v492, 0.2
    %v722 = vmul.f32 %v533, 0.2
    %v723 = vmul.f32 %v535, 0.2
    %v724 = vmul.f32 %v576, 0.2
    %v725 = vmul.f32 %v578, 0.2
    %v726 = vmul.f32 %v619, 0.2
    %v727 = vmul.f32 %v621, 0.2
    %v728 = vmul.f32 %v662, 0.2
    %v729 = vmul.f32 %v664, 0.2
    %v730 = vsel %vm666, %v357, %v698
    %v731 = vsel %vm667, %v359, %v699
    %v732 = vsel %vm668, %v400, %v700
    %v733 = vsel %vm669, %v402, %v701
    %v734 = vsel %vm670, %v443, %v702
    %v735 = vsel %vm671, %v445, %v703
    %v736 = vsel %vm672, %v486, %v704
    %v737 = vsel %vm673, %v488, %v705
    %v738 = vsel %vm674, %v529, %v706
    %v739 = vsel %vm675, %v531, %v707
    %v740 = vsel %vm676, %v572, %v708
    %v741 = vsel %vm677, %v574, %v709
    %v742 = vsel %vm678, %v615, %v710
    %v743 = vsel %vm679, %v617, %v711
    %v744 = vsel %vm680, %v658, %v712
    %v745 = vsel %vm681, %v660, %v713
    %v746 = vsel %vm682, %v361, %v714
    %v747 = vsel %vm683, %v363, %v715
    %v748 = vsel %vm684, %v404, %v716
    %v749 = vsel %vm685, %v406, %v717
    %v750 = vsel %vm686, %v447, %v718
    %v751 = vsel %vm687, %v449, %v719
    %v752 = vsel %vm688, %v490, %v720
    %v753 = vsel %vm689, %v492, %v721
    %v754 = vsel %vm690, %v533, %v722
    %v755 = vsel %vm691, %v535, %v723
    %v756 = vsel %vm692, %v576, %v724
    %v757 = vsel %vm693, %v578, %v725
    %v758 = vsel %vm694, %v619, %v726
    %v759 = vsel %vm695, %v621, %v727
    %v760 = vsel %vm696, %v662, %v728
    %v761 = vsel %vm697, %v664, %v729
    %v762 = vmax.f32 %v730, %v731
    %v763 = vmax.f32 %v731, %v732
    %v764 = vmax.f32 %v732, %v733
    %v765 = vmax.f32 %v733, %v734
    %v766 = vmax.f32 %v734, %v735
    %v767 = vmax.f32 %v735, %v736
    %v768 = vmax.f32 %v736, %v737
    %v769 = vmax.f32 %v737, %v738
    %v770 = vmax.f32 %v738, %v739
    %v771 = vmax.f32 %v739, %v740
    %v772 = vmax.f32 %v740, %v741
    %v773 = vmax.f32 %v741, %v742
    %v774 = vmax.f32 %v742, %v743
    %v775 = vmax.f32 %v743, %v744
    %v776 = vmax.f32 %v744, %v745
    %v777 = vmax.f32 %v745, %v730
    %v778 = vmax.f32 %v746, %v747
    %v779 = vmax.f32 %v747, %v748
    %v780 = vmax.f32 %v748, %v749
    %v781 = vmax.f32 %v749, %v750
    %v782 = vmax.f32 %v750, %v751
    %v783 = vmax.f32 %v751, %v752
    %v784 = vmax.f32 %v752, %v753
    %v785 = vmax.f32 %v753, %v754
    %v786 = vmax.f32 %v754, %v755
    %v787 = vmax.f32 %v755, %v756
    %v788 = vmax.f32 %v756, %v757
    %v789 = vmax.f32 %v757, %v758
    %v790 = vmax.f32 %v758, %v759
    %v791 = vmax.f32 %v759, %v760
    %v792 = vmax.f32 %v760, %v761
    %v793 = vmax.f32 %v761, %v746
    %vm794 = vcmp.ge.s32.totalorder %v58, 256
    %vm795 = vcmp.ge.s32.totalorder %v59, 256
    %vm796 = vcmp.ge.s32.totalorder %v60, 256
    %vm797 = vcmp.ge.s32.totalorder %v61, 256
    %vm798 = vcmp.ge.s32.totalorder %v62, 256
    %vm799 = vcmp.ge.s32.totalorder %v63, 256
    %vm800 = vcmp.ge.s32.totalorder %v64, 256
    %vm801 = vcmp.ge.s32.totalorder %v65, 256
    %vm802 = vcmp.ge.s32.totalorder %v66, 256
    %vm803 = vcmp.ge.s32.totalorder %v67, 256
    %vm804 = vcmp.ge.s32.totalorder %v68, 256
    %vm805 = vcmp.ge.s32.totalorder %v69, 256
    %vm806 = vcmp.ge.s32.totalorder %v70, 256
    %vm807 = vcmp.ge.s32.totalorder %v71, 256
    %vm808 = vcmp.ge.s32.totalorder %v72, 256
    %vm809 = vcmp.ge.s32.totalorder %v73, 256
    %v810 = vsel %vm794, 1, 0
    %v811 = vsel %vm795, 1, 0
    %v812 = vsel %vm796, 1, 0
    %v813 = vsel %vm797, 1, 0
    %v814 = vsel %vm798, 1, 0
    %v815 = vsel %vm799, 1, 0
    %v816 = vsel %vm800, 1, 0
    %v817 = vsel %vm801, 1, 0
    %v818 = vsel %vm802, 1, 0
    %v819 = vsel %vm803, 1, 0
    %v820 = vsel %vm804, 1, 0
    %v821 = vsel %vm805, 1, 0
    %v822 = vsel %vm806, 1, 0
    %v823 = vsel %vm807, 1, 0
    %v824 = vsel %vm808, 1, 0
    %v825 = vsel %vm809, 1, 0
    %vm826 = vcmp.eq.s32.totalorder %v810, 1
    %vm827 = vcmp.eq.s32.totalorder %v811, 1
    %vm828 = vcmp.eq.s32.totalorder %v812, 1
    %vm829 = vcmp.eq.s32.totalorder %v813, 1
    %vm830 = vcmp.eq.s32.totalorder %v814, 1
    %vm831 = vcmp.eq.s32.totalorder %v815, 1
    %vm832 = vcmp.eq.s32.totalorder %v816, 1
    %vm833 = vcmp.eq.s32.totalorder %v817, 1
    %vm834 = vcmp.eq.s32.totalorder %v818, 1
    %vm835 = vcmp.eq.s32.totalorder %v819, 1
    %vm836 = vcmp.eq.s32.totalorder %v820, 1
    %vm837 = vcmp.eq.s32.totalorder %v821, 1
    %vm838 = vcmp.eq.s32.totalorder %v822, 1
    %vm839 = vcmp.eq.s32.totalorder %v823, 1
    %vm840 = vcmp.eq.s32.totalorder %v824, 1
    %vm841 = vcmp.eq.s32.totalorder %v825, 1
    %v842 = vsel %vm826, %v776, 0.0
    %v843 = vsel %vm827, %v777, 0.0
    %v844 = vsel %vm828, %v762, 0.0
    %v845 = vsel %vm829, %v763, 0.0
    %v846 = vsel %vm830, %v764, 0.0
    %v847 = vsel %vm831, %v765, 0.0
    %v848 = vsel %vm832, %v766, 0.0
    %v849 = vsel %vm833, %v767, 0.0
    %v850 = vsel %vm834, %v768, 0.0
    %v851 = vsel %vm835, %v769, 0.0
    %v852 = vsel %vm836, %v770, 0.0
    %v853 = vsel %vm837, %v771, 0.0
    %v854 = vsel %vm838, %v772, 0.0
    %v855 = vsel %vm839, %v773, 0.0
    %v856 = vsel %vm840, %v774, 0.0
    %v857 = vsel %vm841, %v775, 0.0
    %v858 = vsel %vm826, %v792, 0.0
    %v859 = vsel %vm827, %v793, 0.0
    %v860 = vsel %vm828, %v778, 0.0
    %v861 = vsel %vm829, %v779, 0.0
    %v862 = vsel %vm830, %v780, 0.0
    %v863 = vsel %vm831, %v781, 0.0
    %v864 = vsel %vm832, %v782, 0.0
    %v865 = vsel %vm833, %v783, 0.0
    %v866 = vsel %vm834, %v784, 0.0
    %v867 = vsel %vm835, %v785, 0.0
    %v868 = vsel %vm836, %v786, 0.0
    %v869 = vsel %vm837, %v787, 0.0
    %v870 = vsel %vm838, %v788, 0.0
    %v871 = vsel %vm839, %v789, 0.0
    %v872 = vsel %vm840, %v790, 0.0
    %v873 = vsel %vm841, %v791, 0.0
    %vm874 = vcmp.lt.s32.totalorder %v58, 1792
    %vm875 = vcmp.lt.s32.totalorder %v59, 1792
    %vm876 = vcmp.lt.s32.totalorder %v60, 1792
    %vm877 = vcmp.lt.s32.totalorder %v61, 1792
    %vm878 = vcmp.lt.s32.totalorder %v62, 1792
    %vm879 = vcmp.lt.s32.totalorder %v63, 1792
    %vm880 = vcmp.lt.s32.totalorder %v64, 1792
    %vm881 = vcmp.lt.s32.totalorder %v65, 1792
    %vm882 = vcmp.lt.s32.totalorder %v66, 1792
    %vm883 = vcmp.lt.s32.totalorder %v67, 1792
    %vm884 = vcmp.lt.s32.totalorder %v68, 1792
    %vm885 = vcmp.lt.s32.totalorder %v69, 1792
    %vm886 = vcmp.lt.s32.totalorder %v70, 1792
    %vm887 = vcmp.lt.s32.totalorder %v71, 1792
    %vm888 = vcmp.lt.s32.totalorder %v72, 1792
    %vm889 = vcmp.lt.s32.totalorder %v73, 1792
    %v890 = vsel %vm874, 1, 0
    %v891 = vsel %vm875, 1, 0
    %v892 = vsel %vm876, 1, 0
    %v893 = vsel %vm877, 1, 0
    %v894 = vsel %vm878, 1, 0
    %v895 = vsel %vm879, 1, 0
    %v896 = vsel %vm880, 1, 0
    %v897 = vsel %vm881, 1, 0
    %v898 = vsel %vm882, 1, 0
    %v899 = vsel %vm883, 1, 0
    %v900 = vsel %vm884, 1, 0
    %v901 = vsel %vm885, 1, 0
    %v902 = vsel %vm886, 1, 0
    %v903 = vsel %vm887, 1, 0
    %v904 = vsel %vm888, 1, 0
    %v905 = vsel %vm889, 1, 0
    %vm906 = vcmp.eq.s32.totalorder %v890, 1
    %vm907 = vcmp.eq.s32.totalorder %v891, 1
    %vm908 = vcmp.eq.s32.totalorder %v892, 1
    %vm909 = vcmp.eq.s32.totalorder %v893, 1
    %vm910 = vcmp.eq.s32.totalorder %v894, 1
    %vm911 = vcmp.eq.s32.totalorder %v895, 1
    %vm912 = vcmp.eq.s32.totalorder %v896, 1
    %vm913 = vcmp.eq.s32.totalorder %v897, 1
    %vm914 = vcmp.eq.s32.totalorder %v898, 1
    %vm915 = vcmp.eq.s32.totalorder %v899, 1
    %vm916 = vcmp.eq.s32.totalorder %v900, 1
    %vm917 = vcmp.eq.s32.totalorder %v901, 1
    %vm918 = vcmp.eq.s32.totalorder %v902, 1
    %vm919 = vcmp.eq.s32.totalorder %v903, 1
    %vm920 = vcmp.eq.s32.totalorder %v904, 1
    %vm921 = vcmp.eq.s32.totalorder %v905, 1
    %v922 = vsel %vm906, %v764, 0.0
    %v923 = vsel %vm907, %v765, 0.0
    %v924 = vsel %vm908, %v766, 0.0
    %v925 = vsel %vm909, %v767, 0.0
    %v926 = vsel %vm910, %v768, 0.0
    %v927 = vsel %vm911, %v769, 0.0
    %v928 = vsel %vm912, %v770, 0.0
    %v929 = vsel %vm913, %v771, 0.0
    %v930 = vsel %vm914, %v772, 0.0
    %v931 = vsel %vm915, %v773, 0.0
    %v932 = vsel %vm916, %v774, 0.0
    %v933 = vsel %vm917, %v775, 0.0
    %v934 = vsel %vm918, %v776, 0.0
    %v935 = vsel %vm919, %v777, 0.0
    %v936 = vsel %vm920, %v762, 0.0
    %v937 = vsel %vm921, %v763, 0.0
    %v938 = vsel %vm906, %v780, 0.0
    %v939 = vsel %vm907, %v781, 0.0
    %v940 = vsel %vm908, %v782, 0.0
    %v941 = vsel %vm909, %v783, 0.0
    %v942 = vsel %vm910, %v784, 0.0
    %v943 = vsel %vm911, %v785, 0.0
    %v944 = vsel %vm912, %v786, 0.0
    %v945 = vsel %vm913, %v787, 0.0
    %v946 = vsel %vm914, %v788, 0.0
    %v947 = vsel %vm915, %v789, 0.0
    %v948 = vsel %vm916, %v790, 0.0
    %v949 = vsel %vm917, %v791, 0.0
    %v950 = vsel %vm918, %v792, 0.0
    %v951 = vsel %vm919, %v793, 0.0
    %v952 = vsel %vm920, %v778, 0.0
    %v953 = vsel %vm921, %v779, 0.0
    %v954 = vpack.c.bf16 %v858, %v842
    %v955 = vpack.c.bf16 %v859, %v843
    %v956 = vpack.c.bf16 %v860, %v844
    %v957 = vpack.c.bf16 %v861, %v845
    %v958 = vpack.c.bf16 %v862, %v846
    %v959 = vpack.c.bf16 %v863, %v847
    %v960 = vpack.c.bf16 %v864, %v848
    %v961 = vpack.c.bf16 %v865, %v849
    %v962 = vpack.c.bf16 %v866, %v850
    %v963 = vpack.c.bf16 %v867, %v851
    %v964 = vpack.c.bf16 %v868, %v852
    %v965 = vpack.c.bf16 %v869, %v853
    %v966 = vpack.c.bf16 %v870, %v854
    %v967 = vpack.c.bf16 %v871, %v855
    %v968 = vpack.c.bf16 %v872, %v856
    %v969 = vpack.c.bf16 %v873, %v857
    %v970 = vpack.c.bf16 %v778, %v762
    %v971 = vpack.c.bf16 %v779, %v763
    %v972 = vpack.c.bf16 %v780, %v764
    %v973 = vpack.c.bf16 %v781, %v765
    %v974 = vpack.c.bf16 %v782, %v766
    %v975 = vpack.c.bf16 %v783, %v767
    %v976 = vpack.c.bf16 %v784, %v768
    %v977 = vpack.c.bf16 %v785, %v769
    %v978 = vpack.c.bf16 %v786, %v770
    %v979 = vpack.c.bf16 %v787, %v771
    %v980 = vpack.c.bf16 %v788, %v772
    %v981 = vpack.c.bf16 %v789, %v773
    %v982 = vpack.c.bf16 %v790, %v774
    %v983 = vpack.c.bf16 %v791, %v775
    %v984 = vpack.c.bf16 %v792, %v776
    %v985 = vpack.c.bf16 %v793, %v777
    %v986 = vpack.c.bf16 %v938, %v922
    %v987 = vpack.c.bf16 %v939, %v923
    %v988 = vpack.c.bf16 %v940, %v924
    %v989 = vpack.c.bf16 %v941, %v925
    %v990 = vpack.c.bf16 %v942, %v926
    %v991 = vpack.c.bf16 %v943, %v927
    %v992 = vpack.c.bf16 %v944, %v928
    %v993 = vpack.c.bf16 %v945, %v929
    %v994 = vpack.c.bf16 %v946, %v930
    %v995 = vpack.c.bf16 %v947, %v931
    %v996 = vpack.c.bf16 %v948, %v932
    %v997 = vpack.c.bf16 %v949, %v933
    %v998 = vpack.c.bf16 %v950, %v934
    %v999 = vpack.c.bf16 %v951, %v935
    %v1000 = vpack.c.bf16 %v952, %v936
    %v1001 = vpack.c.bf16 %v953, %v937
    %v1002 = vld [vmem:[%s3] sm:$0xf]
    %v1003 = vld [vmem:[%s3 + $0x4] sm:$0xf]
    %v1004 = vld [vmem:[%s4] sm:$0xff]
    %v1005 = vld [vmem:[%s4 + $0x8] sm:$0xff]
    %1007 = vset.pattern.permute.xlu0 0
    %1008 = vperm.xlu0 %1007, %v1004
    %v1009 = vpop.permute.xlu0 %1008
    %1012 = vset.pattern.permute.xlu0 0
    %1013 = vperm.xlu0 %1012, %v1005
    %v1014 = vpop.permute.xlu0 %1013
    %v1018 = vunpack.c.l.b16 %v1002
    %v1019 = vunpack.c.l.b16 %v1003
    %v1020 = vpack.c.b16 %v1019, %v1018
    %vm1021 = vcmask 392192
    %v1023 = vsel %vm1021, %v1020, 0
    %1025 = vmatprep.subr.bf16.mxu0 0
    %1026 = vmatpush1.bf16.msra.mxu0 0
    %1027 = vmatprep.subr.bf16.mxu0 0
    %1028 = vmatpush1.bf16.msra.mxu0 0
    %1029 = vmatprep.subr.bf16.mxu0 0
    %1030 = vmatpush1.bf16.msra.mxu0 0
    %1031 = vmatprep.subr.bf16.mxu0 0
    %1032 = vmatpush1.bf16.msra.mxu0 0
    %1033 = vmatprep.subr.bf16.mxu0 0
    %1034 = vmatpush1.bf16.msra.mxu0 0
    %1035 = vmatprep.subr.bf16.mxu0 %v987
    %1036 = vmatpush1.bf16.msra.mxu0 %v986
    %1037 = vmatprep.subr.bf16.mxu0 %v971
    %1038 = vmatpush1.bf16.msra.mxu0 %v970
    %1039 = vmatprep.subr.bf16.mxu0 %v955
    %1040 = vmatpush1.bf16.msra.mxu0 %v954
    %1041 = vmatprep.subr.bf16.mxu0 0
    %1042 = vmatpush2.bf16.msra.mxu0 0
    %1043 = vmatprep.subr.bf16.mxu0 0
    %1044 = vmatpush2.bf16.msra.mxu0 0
    %1045 = vmatprep.subr.bf16.mxu0 0
    %1046 = vmatpush2.bf16.msra.mxu0 0
    %1047 = vmatprep.subr.bf16.mxu0 0
    %1048 = vmatpush2.bf16.msra.mxu0 0
    %1049 = vmatprep.subr.bf16.mxu0 0
    %1050 = vmatpush2.bf16.msra.mxu0 0
    %1051 = vmatprep.subr.bf16.mxu0 0
    %1052 = vmatpush2.bf16.msra.mxu0 0
    %1053 = vmatprep.subr.bf16.mxu0 0
    %1054 = vmatpush2.bf16.msra.mxu0 0
    %1055 = vmatprep.subr.bf16.mxu0 0
    %1056 = vmatpush2.bf16.msra.mxu0 0
    %1057 = vmatprep.mubr.bf16.mxu0 0
    %1058 = vmatmul.mubr.bf16.gmra.mxu0 %v1023
    %v1059 = vpop.f32.mrf.mxu0
    %v1060 = vadd.f32 %v1009, %v1059
    %v1061 = vpop.f32.mrf.mxu0
    %v1062 = vadd.f32 %v1009, %v1061
    %v1063 = vpop.f32.mrf.mxu0
    %v1064 = vadd.f32 %v1014, %v1063
    %v1065 = vpop.f32.mrf.mxu0
    %v1066 = vadd.f32 %v1014, %v1065
    %1067 = vdwg.mxu0
    %1068 = vmatprep.subr.bf16.mxu0 0
    %1069 = vmatpush1.bf16.msra.mxu0 0
    %1070 = vmatprep.subr.bf16.mxu0 0
    %1071 = vmatpush1.bf16.msra.mxu0 0
    %1072 = vmatprep.subr.bf16.mxu0 0
    %1073 = vmatpush1.bf16.msra.mxu0 0
    %1074 = vmatprep.subr.bf16.mxu0 0
    %1075 = vmatpush1.bf16.msra.mxu0 0
    %1076 = vmatprep.subr.bf16.mxu0 0
    %1077 = vmatpush1.bf16.msra.mxu0 0
    %1078 = vmatprep.subr.bf16.mxu0 %v989
    %1079 = vmatpush1.bf16.msra.mxu0 %v988
    %1080 = vmatprep.subr.bf16.mxu0 %v973
    %1081 = vmatpush1.bf16.msra.mxu0 %v972
    %1082 = vmatprep.subr.bf16.mxu0 %v957
    %1083 = vmatpush1.bf16.msra.mxu0 %v956
    %1084 = vmatprep.subr.bf16.mxu0 0
    %1085 = vmatpush2.bf16.msra.mxu0 0
    %1086 = vmatprep.subr.bf16.mxu0 0
    %1087 = vmatpush2.bf16.msra.mxu0 0
    %1088 = vmatprep.subr.bf16.mxu0 0
    %1089 = vmatpush2.bf16.msra.mxu0 0
    %1090 = vmatprep.subr.bf16.mxu0 0
    %1091 = vmatpush2.bf16.msra.mxu0 0
    %1092 = vmatprep.subr.bf16.mxu0 0
    %1093 = vmatpush2.bf16.msra.mxu0 0
    %1094 = vmatprep.subr.bf16.mxu0 0
    %1095 = vmatpush2.bf16.msra.mxu0 0
    %1096 = vmatprep.subr.bf16.mxu0 0
    %1097 = vmatpush2.bf16.msra.mxu0 0
    %1098 = vmatprep.subr.bf16.mxu0 0
    %1099 = vmatpush2.bf16.msra.mxu0 0
    %1100 = vmatprep.mubr.bf16.mxu0 0
    %1101 = vmatmul.mubr.bf16.gmra.mxu0 %v1023
    %v1102 = vpop.f32.mrf.mxu0
    %v1103 = vadd.f32 %v1009, %v1102
    %v1104 = vpop.f32.mrf.mxu0
    %v1105 = vadd.f32 %v1009, %v1104
    %v1106 = vpop.f32.mrf.mxu0
    %v1107 = vadd.f32 %v1014, %v1106
    %v1108 = vpop.f32.mrf.mxu0
    %v1109 = vadd.f32 %v1014, %v1108
    %1110 = vdwg.mxu0
    %1111 = vmatprep.subr.bf16.mxu0 0
    %1112 = vmatpush1.bf16.msra.mxu0 0
    %1113 = vmatprep.subr.bf16.mxu0 0
    %1114 = vmatpush1.bf16.msra.mxu0 0
    %1115 = vmatprep.subr.bf16.mxu0 0
    %1116 = vmatpush1.bf16.msra.mxu0 0
    %1117 = vmatprep.subr.bf16.mxu0 0
    %1118 = vmatpush1.bf16.msra.mxu0 0
    %1119 = vmatprep.subr.bf16.mxu0 0
    %1120 = vmatpush1.bf16.msra.mxu0 0
    %1121 = vmatprep.subr.bf16.mxu0 %v991
    %1122 = vmatpush1.bf16.msra.mxu0 %v990
    %1123 = vmatprep.subr.bf16.mxu0 %v975
    %1124 = vmatpush1.bf16.msra.mxu0 %v974
    %1125 = vmatprep.subr.bf16.mxu0 %v959
    %1126 = vmatpush1.bf16.msra.mxu0 %v958
    %1127 = vmatprep.subr.bf16.mxu0 0
    %1128 = vmatpush2.bf16.msra.mxu0 0
    %1129 = vmatprep.subr.bf16.mxu0 0
    %1130 = vmatpush2.bf16.msra.mxu0 0
    %1131 = vmatprep.subr.bf16.mxu0 0
    %1132 = vmatpush2.bf16.msra.mxu0 0
    %1133 = vmatprep.subr.bf16.mxu0 0
    %1134 = vmatpush2.bf16.msra.mxu0 0
    %1135 = vmatprep.subr.bf16.mxu0 0
    %1136 = vmatpush2.bf16.msra.mxu0 0
    %1137 = vmatprep.subr.bf16.mxu0 0
    %1138 = vmatpush2.bf16.msra.mxu0 0
    %1139 = vmatprep.subr.bf16.mxu0 0
    %1140 = vmatpush2.bf16.msra.mxu0 0
    %1141 = vmatprep.subr.bf16.mxu0 0
    %1142 = vmatpush2.bf16.msra.mxu0 0
    %1143 = vmatprep.mubr.bf16.mxu0 0
    %1144 = vmatmul.mubr.bf16.gmra.mxu0 %v1023
    %v1145 = vpop.f32.mrf.mxu0
    %v1146 = vadd.f32 %v1009, %v1145
    %v1147 = vpop.f32.mrf.mxu0
    %v1148 = vadd.f32 %v1009, %v1147
    %v1149 = vpop.f32.mrf.mxu0
    %v1150 = vadd.f32 %v1014, %v1149
    %v1151 = vpop.f32.mrf.mxu0
    %v1152 = vadd.f32 %v1014, %v1151
    %1153 = vdwg.mxu0
    %1154 = vmatprep.subr.bf16.mxu0 0
    %1155 = vmatpush1.bf16.msra.mxu0 0
    %1156 = vmatprep.subr.bf16.mxu0 0
    %1157 = vmatpush1.bf16.msra.mxu0 0
    %1158 = vmatprep.subr.bf16.mxu0 0
    %1159 = vmatpush1.bf16.msra.mxu0 0
    %1160 = vmatprep.subr.bf16.mxu0 0
    %1161 = vmatpush1.bf16.msra.mxu0 0
    %1162 = vmatprep.subr.bf16.mxu0 0
    %1163 = vmatpush1.bf16.msra.mxu0 0
    %1164 = vmatprep.subr.bf16.mxu0 %v993
    %1165 = vmatpush1.bf16.msra.mxu0 %v992
    %1166 = vmatprep.subr.bf16.mxu0 %v977
    %1167 = vmatpush1.bf16.msra.mxu0 %v976
    %1168 = vmatprep.subr.bf16.mxu0 %v961
    %1169 = vmatpush1.bf16.msra.mxu0 %v960
    %1170 = vmatprep.subr.bf16.mxu0 0
    %1171 = vmatpush2.bf16.msra.mxu0 0
    %1172 = vmatprep.subr.bf16.mxu0 0
    %1173 = vmatpush2.bf16.msra.mxu0 0
    %1174 = vmatprep.subr.bf16.mxu0 0
    %1175 = vmatpush2.bf16.msra.mxu0 0
    %1176 = vmatprep.subr.bf16.mxu0 0
    %1177 = vmatpush2.bf16.msra.mxu0 0
    %1178 = vmatprep.subr.bf16.mxu0 0
    %1179 = vmatpush2.bf16.msra.mxu0 0
    %1180 = vmatprep.subr.bf16.mxu0 0
    %1181 = vmatpush2.bf16.msra.mxu0 0
    %1182 = vmatprep.subr.bf16.mxu0 0
    %1183 = vmatpush2.bf16.msra.mxu0 0
    %1184 = vmatprep.subr.bf16.mxu0 0
    %1185 = vmatpush2.bf16.msra.mxu0 0
    %1186 = vmatprep.mubr.bf16.mxu0 0
    %1187 = vmatmul.mubr.bf16.gmra.mxu0 %v1023
    %v1188 = vpop.f32.mrf.mxu0
    %v1189 = vadd.f32 %v1009, %v1188
    %v1190 = vpop.f32.mrf.mxu0
    %v1191 = vadd.f32 %v1009, %v1190
    %v1192 = vpop.f32.mrf.mxu0
    %v1193 = vadd.f32 %v1014, %v1192
    %v1194 = vpop.f32.mrf.mxu0
    %v1195 = vadd.f32 %v1014, %v1194
    %1196 = vdwg.mxu0
    %1197 = vmatprep.subr.bf16.mxu0 0
    %1198 = vmatpush1.bf16.msra.mxu0 0
    %1199 = vmatprep.subr.bf16.mxu0 0
    %1200 = vmatpush1.bf16.msra.mxu0 0
    %1201 = vmatprep.subr.bf16.mxu0 0
    %1202 = vmatpush1.bf16.msra.mxu0 0
    %1203 = vmatprep.subr.bf16.mxu0 0
    %1204 = vmatpush1.bf16.msra.mxu0 0
    %1205 = vmatprep.subr.bf16.mxu0 0
    %1206 = vmatpush1.bf16.msra.mxu0 0
    %1207 = vmatprep.subr.bf16.mxu0 %v995
    %1208 = vmatpush1.bf16.msra.mxu0 %v994
    %1209 = vmatprep.subr.bf16.mxu0 %v979
    %1210 = vmatpush1.bf16.msra.mxu0 %v978
    %1211 = vmatprep.subr.bf16.mxu0 %v963
    %1212 = vmatpush1.bf16.msra.mxu0 %v962
    %1213 = vmatprep.subr.bf16.mxu0 0
    %1214 = vmatpush2.bf16.msra.mxu0 0
    %1215 = vmatprep.subr.bf16.mxu0 0
    %1216 = vmatpush2.bf16.msra.mxu0 0
    %1217 = vmatprep.subr.bf16.mxu0 0
    %1218 = vmatpush2.bf16.msra.mxu0 0
    %1219 = vmatprep.subr.bf16.mxu0 0
    %1220 = vmatpush2.bf16.msra.mxu0 0
    %1221 = vmatprep.subr.bf16.mxu0 0
    %1222 = vmatpush2.bf16.msra.mxu0 0
    %1223 = vmatprep.subr.bf16.mxu0 0
    %1224 = vmatpush2.bf16.msra.mxu0 0
    %1225 = vmatprep.subr.bf16.mxu0 0
    %1226 = vmatpush2.bf16.msra.mxu0 0
    %1227 = vmatprep.subr.bf16.mxu0 0
    %1228 = vmatpush2.bf16.msra.mxu0 0
    %1229 = vmatprep.mubr.bf16.mxu0 0
    %1230 = vmatmul.mubr.bf16.gmra.mxu0 %v1023
    %v1231 = vpop.f32.mrf.mxu0
    %v1232 = vadd.f32 %v1009, %v1231
    %v1233 = vpop.f32.mrf.mxu0
    %v1234 = vadd.f32 %v1009, %v1233
    %v1235 = vpop.f32.mrf.mxu0
    %v1236 = vadd.f32 %v1014, %v1235
    %v1237 = vpop.f32.mrf.mxu0
    %v1238 = vadd.f32 %v1014, %v1237
    %1239 = vdwg.mxu0
    %1240 = vmatprep.subr.bf16.mxu0 0
    %1241 = vmatpush1.bf16.msra.mxu0 0
    %1242 = vmatprep.subr.bf16.mxu0 0
    %1243 = vmatpush1.bf16.msra.mxu0 0
    %1244 = vmatprep.subr.bf16.mxu0 0
    %1245 = vmatpush1.bf16.msra.mxu0 0
    %1246 = vmatprep.subr.bf16.mxu0 0
    %1247 = vmatpush1.bf16.msra.mxu0 0
    %1248 = vmatprep.subr.bf16.mxu0 0
    %1249 = vmatpush1.bf16.msra.mxu0 0
    %1250 = vmatprep.subr.bf16.mxu0 %v997
    %1251 = vmatpush1.bf16.msra.mxu0 %v996
    %1252 = vmatprep.subr.bf16.mxu0 %v981
    %1253 = vmatpush1.bf16.msra.mxu0 %v980
    %1254 = vmatprep.subr.bf16.mxu0 %v965
    %1255 = vmatpush1.bf16.msra.mxu0 %v964
    %1256 = vmatprep.subr.bf16.mxu0 0
    %1257 = vmatpush2.bf16.msra.mxu0 0
    %1258 = vmatprep.subr.bf16.mxu0 0
    %1259 = vmatpush2.bf16.msra.mxu0 0
    %1260 = vmatprep.subr.bf16.mxu0 0
    %1261 = vmatpush2.bf16.msra.mxu0 0
    %1262 = vmatprep.subr.bf16.mxu0 0
    %1263 = vmatpush2.bf16.msra.mxu0 0
    %1264 = vmatprep.subr.bf16.mxu0 0
    %1265 = vmatpush2.bf16.msra.mxu0 0
    %1266 = vmatprep.subr.bf16.mxu0 0
    %1267 = vmatpush2.bf16.msra.mxu0 0
    %1268 = vmatprep.subr.bf16.mxu0 0
    %1269 = vmatpush2.bf16.msra.mxu0 0
    %1270 = vmatprep.subr.bf16.mxu0 0
    %1271 = vmatpush2.bf16.msra.mxu0 0
    %1272 = vmatprep.mubr.bf16.mxu0 0
    %1273 = vmatmul.mubr.bf16.gmra.mxu0 %v1023
    %v1274 = vpop.f32.mrf.mxu0
    %v1275 = vadd.f32 %v1009, %v1274
    %v1276 = vpop.f32.mrf.mxu0
    %v1277 = vadd.f32 %v1009, %v1276
    %v1278 = vpop.f32.mrf.mxu0
    %v1279 = vadd.f32 %v1014, %v1278
    %v1280 = vpop.f32.mrf.mxu0
    %v1281 = vadd.f32 %v1014, %v1280
    %1282 = vdwg.mxu0
    %1283 = vmatprep.subr.bf16.mxu0 0
    %1284 = vmatpush1.bf16.msra.mxu0 0
    %1285 = vmatprep.subr.bf16.mxu0 0
    %1286 = vmatpush1.bf16.msra.mxu0 0
    %1287 = vmatprep.subr.bf16.mxu0 0
    %1288 = vmatpush1.bf16.msra.mxu0 0
    %1289 = vmatprep.subr.bf16.mxu0 0
    %1290 = vmatpush1.bf16.msra.mxu0 0
    %1291 = vmatprep.subr.bf16.mxu0 0
    %1292 = vmatpush1.bf16.msra.mxu0 0
    %1293 = vmatprep.subr.bf16.mxu0 %v999
    %1294 = vmatpush1.bf16.msra.mxu0 %v998
    %1295 = vmatprep.subr.bf16.mxu0 %v983
    %1296 = vmatpush1.bf16.msra.mxu0 %v982
    %1297 = vmatprep.subr.bf16.mxu0 %v967
    %1298 = vmatpush1.bf16.msra.mxu0 %v966
    %1299 = vmatprep.subr.bf16.mxu0 0
    %1300 = vmatpush2.bf16.msra.mxu0 0
    %1301 = vmatprep.subr.bf16.mxu0 0
    %1302 = vmatpush2.bf16.msra.mxu0 0
    %1303 = vmatprep.subr.bf16.mxu0 0
    %1304 = vmatpush2.bf16.msra.mxu0 0
    %1305 = vmatprep.subr.bf16.mxu0 0
    %1306 = vmatpush2.bf16.msra.mxu0 0
    %1307 = vmatprep.subr.bf16.mxu0 0
    %1308 = vmatpush2.bf16.msra.mxu0 0
    %1309 = vmatprep.subr.bf16.mxu0 0
    %1310 = vmatpush2.bf16.msra.mxu0 0
    %1311 = vmatprep.subr.bf16.mxu0 0
    %1312 = vmatpush2.bf16.msra.mxu0 0
    %1313 = vmatprep.subr.bf16.mxu0 0
    %1314 = vmatpush2.bf16.msra.mxu0 0
    %1315 = vmatprep.mubr.bf16.mxu0 0
    %1316 = vmatmul.mubr.bf16.gmra.mxu0 %v1023
    %v1317 = vpop.f32.mrf.mxu0
    %v1318 = vadd.f32 %v1009, %v1317
    %v1319 = vpop.f32.mrf.mxu0
    %v1320 = vadd.f32 %v1009, %v1319
    %v1321 = vpop.f32.mrf.mxu0
    %v1322 = vadd.f32 %v1014, %v1321
    %v1323 = vpop.f32.mrf.mxu0
    %v1324 = vadd.f32 %v1014, %v1323
    %1325 = vdwg.mxu0
    %1326 = vmatprep.subr.bf16.mxu0 0
    %1327 = vmatpush1.bf16.msra.mxu0 0
    %1328 = vmatprep.subr.bf16.mxu0 0
    %1329 = vmatpush1.bf16.msra.mxu0 0
    %1330 = vmatprep.subr.bf16.mxu0 0
    %1331 = vmatpush1.bf16.msra.mxu0 0
    %1332 = vmatprep.subr.bf16.mxu0 0
    %1333 = vmatpush1.bf16.msra.mxu0 0
    %1334 = vmatprep.subr.bf16.mxu0 0
    %1335 = vmatpush1.bf16.msra.mxu0 0
    %1336 = vmatprep.subr.bf16.mxu0 %v1001
    %1337 = vmatpush1.bf16.msra.mxu0 %v1000
    %1338 = vmatprep.subr.bf16.mxu0 %v985
    %1339 = vmatpush1.bf16.msra.mxu0 %v984
    %1340 = vmatprep.subr.bf16.mxu0 %v969
    %1341 = vmatpush1.bf16.msra.mxu0 %v968
    %1342 = vmatprep.subr.bf16.mxu0 0
    %1343 = vmatpush2.bf16.msra.mxu0 0
    %1344 = vmatprep.subr.bf16.mxu0 0
    %1345 = vmatpush2.bf16.msra.mxu0 0
    %1346 = vmatprep.subr.bf16.mxu0 0
    %1347 = vmatpush2.bf16.msra.mxu0 0
    %1348 = vmatprep.subr.bf16.mxu0 0
    %1349 = vmatpush2.bf16.msra.mxu0 0
    %1350 = vmatprep.subr.bf16.mxu0 0
    %1351 = vmatpush2.bf16.msra.mxu0 0
    %1352 = vmatprep.subr.bf16.mxu0 0
    %1353 = vmatpush2.bf16.msra.mxu0 0
    %1354 = vmatprep.subr.bf16.mxu0 0
    %1355 = vmatpush2.bf16.msra.mxu0 0
    %1356 = vmatprep.subr.bf16.mxu0 0
    %1357 = vmatpush2.bf16.msra.mxu0 0
    %1358 = vmatprep.mubr.bf16.mxu0 0
    %1359 = vmatmul.mubr.bf16.gmra.mxu0 %v1023
    %v1360 = vpop.f32.mrf.mxu0
    %v1361 = vadd.f32 %v1009, %v1360
    %v1362 = vpop.f32.mrf.mxu0
    %v1363 = vadd.f32 %v1009, %v1362
    %v1364 = vpop.f32.mrf.mxu0
    %v1365 = vadd.f32 %v1014, %v1364
    %v1366 = vpop.f32.mrf.mxu0
    %v1367 = vadd.f32 %v1014, %v1366
    %1368 = vdwg.mxu0
    %vm1369 = vcmp.ge.f32.partialorder %v1060, 0.0
    %vm1370 = vcmp.ge.f32.partialorder %v1062, 0.0
    %vm1371 = vcmp.ge.f32.partialorder %v1103, 0.0
    %vm1372 = vcmp.ge.f32.partialorder %v1105, 0.0
    %vm1373 = vcmp.ge.f32.partialorder %v1146, 0.0
    %vm1374 = vcmp.ge.f32.partialorder %v1148, 0.0
    %vm1375 = vcmp.ge.f32.partialorder %v1189, 0.0
    %vm1376 = vcmp.ge.f32.partialorder %v1191, 0.0
    %vm1377 = vcmp.ge.f32.partialorder %v1232, 0.0
    %vm1378 = vcmp.ge.f32.partialorder %v1234, 0.0
    %vm1379 = vcmp.ge.f32.partialorder %v1275, 0.0
    %vm1380 = vcmp.ge.f32.partialorder %v1277, 0.0
    %vm1381 = vcmp.ge.f32.partialorder %v1318, 0.0
    %vm1382 = vcmp.ge.f32.partialorder %v1320, 0.0
    %vm1383 = vcmp.ge.f32.partialorder %v1361, 0.0
    %vm1384 = vcmp.ge.f32.partialorder %v1363, 0.0
    %vm1385 = vcmp.ge.f32.partialorder %v1064, 0.0
    %vm1386 = vcmp.ge.f32.partialorder %v1066, 0.0
    %vm1387 = vcmp.ge.f32.partialorder %v1107, 0.0
    %vm1388 = vcmp.ge.f32.partialorder %v1109, 0.0
    %vm1389 = vcmp.ge.f32.partialorder %v1150, 0.0
    %vm1390 = vcmp.ge.f32.partialorder %v1152, 0.0
    %vm1391 = vcmp.ge.f32.partialorder %v1193, 0.0
    %vm1392 = vcmp.ge.f32.partialorder %v1195, 0.0
    %vm1393 = vcmp.ge.f32.partialorder %v1236, 0.0
    %vm1394 = vcmp.ge.f32.partialorder %v1238, 0.0
    %vm1395 = vcmp.ge.f32.partialorder %v1279, 0.0
    %vm1396 = vcmp.ge.f32.partialorder %v1281, 0.0
    %vm1397 = vcmp.ge.f32.partialorder %v1322, 0.0
    %vm1398 = vcmp.ge.f32.partialorder %v1324, 0.0
    %vm1399 = vcmp.ge.f32.partialorder %v1365, 0.0
    %vm1400 = vcmp.ge.f32.partialorder %v1367, 0.0
    %v1401 = vmul.f32 %v1060, 0.2
    %v1402 = vmul.f32 %v1062, 0.2
    %v1403 = vmul.f32 %v1103, 0.2
    %v1404 = vmul.f32 %v1105, 0.2
    %v1405 = vmul.f32 %v1146, 0.2
    %v1406 = vmul.f32 %v1148, 0.2
    %v1407 = vmul.f32 %v1189, 0.2
    %v1408 = vmul.f32 %v1191, 0.2
    %v1409 = vmul.f32 %v1232, 0.2
    %v1410 = vmul.f32 %v1234, 0.2
    %v1411 = vmul.f32 %v1275, 0.2
    %v1412 = vmul.f32 %v1277, 0.2
    %v1413 = vmul.f32 %v1318, 0.2
    %v1414 = vmul.f32 %v1320, 0.2
    %v1415 = vmul.f32 %v1361, 0.2
    %v1416 = vmul.f32 %v1363, 0.2
    %v1417 = vmul.f32 %v1064, 0.2
    %v1418 = vmul.f32 %v1066, 0.2
    %v1419 = vmul.f32 %v1107, 0.2
    %v1420 = vmul.f32 %v1109, 0.2
    %v1421 = vmul.f32 %v1150, 0.2
    %v1422 = vmul.f32 %v1152, 0.2
    %v1423 = vmul.f32 %v1193, 0.2
    %v1424 = vmul.f32 %v1195, 0.2
    %v1425 = vmul.f32 %v1236, 0.2
    %v1426 = vmul.f32 %v1238, 0.2
    %v1427 = vmul.f32 %v1279, 0.2
    %v1428 = vmul.f32 %v1281, 0.2
    %v1429 = vmul.f32 %v1322, 0.2
    %v1430 = vmul.f32 %v1324, 0.2
    %v1431 = vmul.f32 %v1365, 0.2
    %v1432 = vmul.f32 %v1367, 0.2
    %v1433 = vsel %vm1369, %v1060, %v1401
    %v1434 = vsel %vm1370, %v1062, %v1402
    %v1435 = vsel %vm1371, %v1103, %v1403
    %v1436 = vsel %vm1372, %v1105, %v1404
    %v1437 = vsel %vm1373, %v1146, %v1405
    %v1438 = vsel %vm1374, %v1148, %v1406
    %v1439 = vsel %vm1375, %v1189, %v1407
    %v1440 = vsel %vm1376, %v1191, %v1408
    %v1441 = vsel %vm1377, %v1232, %v1409
    %v1442 = vsel %vm1378, %v1234, %v1410
    %v1443 = vsel %vm1379, %v1275, %v1411
    %v1444 = vsel %vm1380, %v1277, %v1412
    %v1445 = vsel %vm1381, %v1318, %v1413
    %v1446 = vsel %vm1382, %v1320, %v1414
    %v1447 = vsel %vm1383, %v1361, %v1415
    %v1448 = vsel %vm1384, %v1363, %v1416
    %v1449 = vsel %vm1385, %v1064, %v1417
    %v1450 = vsel %vm1386, %v1066, %v1418
    %v1451 = vsel %vm1387, %v1107, %v1419
    %v1452 = vsel %vm1388, %v1109, %v1420
    %v1453 = vsel %vm1389, %v1150, %v1421
    %v1454 = vsel %vm1390, %v1152, %v1422
    %v1455 = vsel %vm1391, %v1193, %v1423
    %v1456 = vsel %vm1392, %v1195, %v1424
    %v1457 = vsel %vm1393, %v1236, %v1425
    %v1458 = vsel %vm1394, %v1238, %v1426
    %v1459 = vsel %vm1395, %v1279, %v1427
    %v1460 = vsel %vm1396, %v1281, %v1428
    %v1461 = vsel %vm1397, %v1322, %v1429
    %v1462 = vsel %vm1398, %v1324, %v1430
    %v1463 = vsel %vm1399, %v1365, %v1431
    %v1464 = vsel %vm1400, %v1367, %v1432
    %v1465 = vmax.f32 %v1433, %v1435
    %v1466 = vmax.f32 %v1434, %v1436
    %v1467 = vmax.f32 %v1437, %v1439
    %v1468 = vmax.f32 %v1438, %v1440
    %v1469 = vmax.f32 %v1441, %v1443
    %v1470 = vmax.f32 %v1442, %v1444
    %v1471 = vmax.f32 %v1445, %v1447
    %v1472 = vmax.f32 %v1446, %v1448
    %v1473 = vmax.f32 %v1449, %v1451
    %v1474 = vmax.f32 %v1450, %v1452
    %v1475 = vmax.f32 %v1453, %v1455
    %v1476 = vmax.f32 %v1454, %v1456
    %v1477 = vmax.f32 %v1457, %v1459
    %v1478 = vmax.f32 %v1458, %v1460
    %v1479 = vmax.f32 %v1461, %v1463
    %v1480 = vmax.f32 %v1462, %v1464
    %vm1481 = vcmp.ge.s32.totalorder %v58, 512
    %vm1482 = vcmp.ge.s32.totalorder %v59, 512
    %vm1483 = vcmp.ge.s32.totalorder %v62, 512
    %vm1484 = vcmp.ge.s32.totalorder %v63, 512
    %vm1485 = vcmp.ge.s32.totalorder %v66, 512
    %vm1486 = vcmp.ge.s32.totalorder %v67, 512
    %vm1487 = vcmp.ge.s32.totalorder %v70, 512
    %vm1488 = vcmp.ge.s32.totalorder %v71, 512
    %v1489 = vsel %vm1481, 1, 0
    %v1490 = vsel %vm1482, 1, 0
    %v1491 = vsel %vm1483, 1, 0
    %v1492 = vsel %vm1484, 1, 0
    %v1493 = vsel %vm1485, 1, 0
    %v1494 = vsel %vm1486, 1, 0
    %v1495 = vsel %vm1487, 1, 0
    %v1496 = vsel %vm1488, 1, 0
    %vm1497 = vcmp.eq.s32.totalorder %v1489, 1
    %vm1498 = vcmp.eq.s32.totalorder %v1490, 1
    %vm1499 = vcmp.eq.s32.totalorder %v1491, 1
    %vm1500 = vcmp.eq.s32.totalorder %v1492, 1
    %vm1501 = vcmp.eq.s32.totalorder %v1493, 1
    %vm1502 = vcmp.eq.s32.totalorder %v1494, 1
    %vm1503 = vcmp.eq.s32.totalorder %v1495, 1
    %vm1504 = vcmp.eq.s32.totalorder %v1496, 1
    %v1505 = vsel %vm1497, %v1471, 0.0
    %v1506 = vsel %vm1498, %v1472, 0.0
    %v1507 = vsel %vm1499, %v1465, 0.0
    %v1508 = vsel %vm1500, %v1466, 0.0
    %v1509 = vsel %vm1501, %v1467, 0.0
    %v1510 = vsel %vm1502, %v1468, 0.0
    %v1511 = vsel %vm1503, %v1469, 0.0
    %v1512 = vsel %vm1504, %v1470, 0.0
    %v1513 = vsel %vm1497, %v1479, 0.0
    %v1514 = vsel %vm1498, %v1480, 0.0
    %v1515 = vsel %vm1499, %v1473, 0.0
    %v1516 = vsel %vm1500, %v1474, 0.0
    %v1517 = vsel %vm1501, %v1475, 0.0
    %v1518 = vsel %vm1502, %v1476, 0.0
    %v1519 = vsel %vm1503, %v1477, 0.0
    %v1520 = vsel %vm1504, %v1478, 0.0
    %vm1521 = vcmp.lt.s32.totalorder %v58, 1536
    %vm1522 = vcmp.lt.s32.totalorder %v59, 1536
    %vm1523 = vcmp.lt.s32.totalorder %v62, 1536
    %vm1524 = vcmp.lt.s32.totalorder %v63, 1536
    %vm1525 = vcmp.lt.s32.totalorder %v66, 1536
    %vm1526 = vcmp.lt.s32.totalorder %v67, 1536
    %vm1527 = vcmp.lt.s32.totalorder %v70, 1536
    %vm1528 = vcmp.lt.s32.totalorder %v71, 1536
    %v1529 = vsel %vm1521, 1, 0
    %v1530 = vsel %vm1522, 1, 0
    %v1531 = vsel %vm1523, 1, 0
    %v1532 = vsel %vm1524, 1, 0
    %v1533 = vsel %vm1525, 1, 0
    %v1534 = vsel %vm1526, 1, 0
    %v1535 = vsel %vm1527, 1, 0
    %v1536 = vsel %vm1528, 1, 0
    %vm1537 = vcmp.eq.s32.totalorder %v1529, 1
    %vm1538 = vcmp.eq.s32.totalorder %v1530, 1
    %vm1539 = vcmp.eq.s32.totalorder %v1531, 1
    %vm1540 = vcmp.eq.s32.totalorder %v1532, 1
    %vm1541 = vcmp.eq.s32.totalorder %v1533, 1
    %vm1542 = vcmp.eq.s32.totalorder %v1534, 1
    %vm1543 = vcmp.eq.s32.totalorder %v1535, 1
    %vm1544 = vcmp.eq.s32.totalorder %v1536, 1
    %v1545 = vsel %vm1537, %v1467, 0.0
    %v1546 = vsel %vm1538, %v1468, 0.0
    %v1547 = vsel %vm1539, %v1469, 0.0
    %v1548 = vsel %vm1540, %v1470, 0.0
    %v1549 = vsel %vm1541, %v1471, 0.0
    %v1550 = vsel %vm1542, %v1472, 0.0
    %v1551 = vsel %vm1543, %v1465, 0.0
    %v1552 = vsel %vm1544, %v1466, 0.0
    %v1553 = vsel %vm1537, %v1475, 0.0
    %v1554 = vsel %vm1538, %v1476, 0.0
    %v1555 = vsel %vm1539, %v1477, 0.0
    %v1556 = vsel %vm1540, %v1478, 0.0
    %v1557 = vsel %vm1541, %v1479, 0.0
    %v1558 = vsel %vm1542, %v1480, 0.0
    %v1559 = vsel %vm1543, %v1473, 0.0
    %v1560 = vsel %vm1544, %v1474, 0.0
    %v1561 = vpack.c.bf16 %v1513, %v1505
    %v1562 = vpack.c.bf16 %v1514, %v1506
    %v1563 = vpack.c.bf16 %v1515, %v1507
    %v1564 = vpack.c.bf16 %v1516, %v1508
    %v1565 = vpack.c.bf16 %v1517, %v1509
    %v1566 = vpack.c.bf16 %v1518, %v1510
    %v1567 = vpack.c.bf16 %v1519, %v1511
    %v1568 = vpack.c.bf16 %v1520, %v1512
    %v1569 = vpack.c.bf16 %v1473, %v1465
    %v1570 = vpack.c.bf16 %v1474, %v1466
    %v1571 = vpack.c.bf16 %v1475, %v1467
    %v1572 = vpack.c.bf16 %v1476, %v1468
    %v1573 = vpack.c.bf16 %v1477, %v1469
    %v1574 = vpack.c.bf16 %v1478, %v1470
    %v1575 = vpack.c.bf16 %v1479, %v1471
    %v1576 = vpack.c.bf16 %v1480, %v1472
    %v1577 = vpack.c.bf16 %v1553, %v1545
    %v1578 = vpack.c.bf16 %v1554, %v1546
    %v1579 = vpack.c.bf16 %v1555, %v1547
    %v1580 = vpack.c.bf16 %v1556, %v1548
    %v1581 = vpack.c.bf16 %v1557, %v1549
    %v1582 = vpack.c.bf16 %v1558, %v1550
    %v1583 = vpack.c.bf16 %v1559, %v1551
    %v1584 = vpack.c.bf16 %v1560, %v1552
    %v1585 = vld [vmem:[%s5] sm:$0xf]
    %v1586 = vld [vmem:[%s5 + $0x4] sm:$0xf]
    %v1587 = vld [vmem:[%s6] sm:$0xff]
    %v1588 = vld [vmem:[%s6 + $0x8] sm:$0xff]
    %1590 = vset.pattern.permute.xlu0 0
    %1591 = vperm.xlu0 %1590, %v1587
    %v1592 = vpop.permute.xlu0 %1591
    %1595 = vset.pattern.permute.xlu0 0
    %1596 = vperm.xlu0 %1595, %v1588
    %v1597 = vpop.permute.xlu0 %1596
    %v1601 = vunpack.c.l.b16 %v1585
    %v1602 = vunpack.c.l.b16 %v1586
    %v1603 = vpack.c.b16 %v1602, %v1601
    %v1605 = vsel %vm1021, %v1603, 0
    %1607 = vmatprep.subr.bf16.mxu0 0
    %1608 = vmatpush1.bf16.msra.mxu0 0
    %1609 = vmatprep.subr.bf16.mxu0 0
    %1610 = vmatpush1.bf16.msra.mxu0 0
    %1611 = vmatprep.subr.bf16.mxu0 0
    %1612 = vmatpush1.bf16.msra.mxu0 0
    %1613 = vmatprep.subr.bf16.mxu0 0
    %1614 = vmatpush1.bf16.msra.mxu0 0
    %1615 = vmatprep.subr.bf16.mxu0 0
    %1616 = vmatpush1.bf16.msra.mxu0 0
    %1617 = vmatprep.subr.bf16.mxu0 %v1578
    %1618 = vmatpush1.bf16.msra.mxu0 %v1577
    %1619 = vmatprep.subr.bf16.mxu0 %v1570
    %1620 = vmatpush1.bf16.msra.mxu0 %v1569
    %1621 = vmatprep.subr.bf16.mxu0 %v1562
    %1622 = vmatpush1.bf16.msra.mxu0 %v1561
    %1623 = vmatprep.subr.bf16.mxu0 0
    %1624 = vmatpush2.bf16.msra.mxu0 0
    %1625 = vmatprep.subr.bf16.mxu0 0
    %1626 = vmatpush2.bf16.msra.mxu0 0
    %1627 = vmatprep.subr.bf16.mxu0 0
    %1628 = vmatpush2.bf16.msra.mxu0 0
    %1629 = vmatprep.subr.bf16.mxu0 0
    %1630 = vmatpush2.bf16.msra.mxu0 0
    %1631 = vmatprep.subr.bf16.mxu0 0
    %1632 = vmatpush2.bf16.msra.mxu0 0
    %1633 = vmatprep.subr.bf16.mxu0 0
    %1634 = vmatpush2.bf16.msra.mxu0 0
    %1635 = vmatprep.subr.bf16.mxu0 0
    %1636 = vmatpush2.bf16.msra.mxu0 0
    %1637 = vmatprep.subr.bf16.mxu0 0
    %1638 = vmatpush2.bf16.msra.mxu0 0
    %1639 = vmatprep.mubr.bf16.mxu0 0
    %1640 = vmatmul.mubr.bf16.gmra.mxu0 %v1605
    %v1641 = vpop.f32.mrf.mxu0
    %v1642 = vadd.f32 %v1592, %v1641
    %v1643 = vpop.f32.mrf.mxu0
    %v1644 = vpop.f32.mrf.mxu0
    %v1645 = vadd.f32 %v1597, %v1644
    %v1646 = vpop.f32.mrf.mxu0
    %1647 = vdwg.mxu0
    %1648 = vmatprep.subr.bf16.mxu0 0
    %1649 = vmatpush1.bf16.msra.mxu0 0
    %1650 = vmatprep.subr.bf16.mxu0 0
    %1651 = vmatpush1.bf16.msra.mxu0 0
    %1652 = vmatprep.subr.bf16.mxu0 0
    %1653 = vmatpush1.bf16.msra.mxu0 0
    %1654 = vmatprep.subr.bf16.mxu0 0
    %1655 = vmatpush1.bf16.msra.mxu0 0
    %1656 = vmatprep.subr.bf16.mxu0 0
    %1657 = vmatpush1.bf16.msra.mxu0 0
    %1658 = vmatprep.subr.bf16.mxu0 %v1580
    %1659 = vmatpush1.bf16.msra.mxu0 %v1579
    %1660 = vmatprep.subr.bf16.mxu0 %v1572
    %1661 = vmatpush1.bf16.msra.mxu0 %v1571
    %1662 = vmatprep.subr.bf16.mxu0 %v1564
    %1663 = vmatpush1.bf16.msra.mxu0 %v1563
    %1664 = vmatprep.subr.bf16.mxu0 0
    %1665 = vmatpush2.bf16.msra.mxu0 0
    %1666 = vmatprep.subr.bf16.mxu0 0
    %1667 = vmatpush2.bf16.msra.mxu0 0
    %1668 = vmatprep.subr.bf16.mxu0 0
    %1669 = vmatpush2.bf16.msra.mxu0 0
    %1670 = vmatprep.subr.bf16.mxu0 0
    %1671 = vmatpush2.bf16.msra.mxu0 0
    %1672 = vmatprep.subr.bf16.mxu0 0
    %1673 = vmatpush2.bf16.msra.mxu0 0
    %1674 = vmatprep.subr.bf16.mxu0 0
    %1675 = vmatpush2.bf16.msra.mxu0 0
    %1676 = vmatprep.subr.bf16.mxu0 0
    %1677 = vmatpush2.bf16.msra.mxu0 0
    %1678 = vmatprep.subr.bf16.mxu0 0
    %1679 = vmatpush2.bf16.msra.mxu0 0
    %1680 = vmatprep.mubr.bf16.mxu0 0
    %1681 = vmatmul.mubr.bf16.gmra.mxu0 %v1605
    %v1682 = vpop.f32.mrf.mxu0
    %v1683 = vadd.f32 %v1592, %v1682
    %v1684 = vpop.f32.mrf.mxu0
    %v1685 = vpop.f32.mrf.mxu0
    %v1686 = vadd.f32 %v1597, %v1685
    %v1687 = vpop.f32.mrf.mxu0
    %1688 = vdwg.mxu0
    %1689 = vmatprep.subr.bf16.mxu0 0
    %1690 = vmatpush1.bf16.msra.mxu0 0
    %1691 = vmatprep.subr.bf16.mxu0 0
    %1692 = vmatpush1.bf16.msra.mxu0 0
    %1693 = vmatprep.subr.bf16.mxu0 0
    %1694 = vmatpush1.bf16.msra.mxu0 0
    %1695 = vmatprep.subr.bf16.mxu0 0
    %1696 = vmatpush1.bf16.msra.mxu0 0
    %1697 = vmatprep.subr.bf16.mxu0 0
    %1698 = vmatpush1.bf16.msra.mxu0 0
    %1699 = vmatprep.subr.bf16.mxu0 %v1582
    %1700 = vmatpush1.bf16.msra.mxu0 %v1581
    %1701 = vmatprep.subr.bf16.mxu0 %v1574
    %1702 = vmatpush1.bf16.msra.mxu0 %v1573
    %1703 = vmatprep.subr.bf16.mxu0 %v1566
    %1704 = vmatpush1.bf16.msra.mxu0 %v1565
    %1705 = vmatprep.subr.bf16.mxu0 0
    %1706 = vmatpush2.bf16.msra.mxu0 0
    %1707 = vmatprep.subr.bf16.mxu0 0
    %1708 = vmatpush2.bf16.msra.mxu0 0
    %1709 = vmatprep.subr.bf16.mxu0 0
    %1710 = vmatpush2.bf16.msra.mxu0 0
    %1711 = vmatprep.subr.bf16.mxu0 0
    %1712 = vmatpush2.bf16.msra.mxu0 0
    %1713 = vmatprep.subr.bf16.mxu0 0
    %1714 = vmatpush2.bf16.msra.mxu0 0
    %1715 = vmatprep.subr.bf16.mxu0 0
    %1716 = vmatpush2.bf16.msra.mxu0 0
    %1717 = vmatprep.subr.bf16.mxu0 0
    %1718 = vmatpush2.bf16.msra.mxu0 0
    %1719 = vmatprep.subr.bf16.mxu0 0
    %1720 = vmatpush2.bf16.msra.mxu0 0
    %1721 = vmatprep.mubr.bf16.mxu0 0
    %1722 = vmatmul.mubr.bf16.gmra.mxu0 %v1605
    %v1723 = vpop.f32.mrf.mxu0
    %v1724 = vadd.f32 %v1592, %v1723
    %v1725 = vpop.f32.mrf.mxu0
    %v1726 = vpop.f32.mrf.mxu0
    %v1727 = vadd.f32 %v1597, %v1726
    %v1728 = vpop.f32.mrf.mxu0
    %1729 = vdwg.mxu0
    %1730 = vmatprep.subr.bf16.mxu0 0
    %1731 = vmatpush1.bf16.msra.mxu0 0
    %1732 = vmatprep.subr.bf16.mxu0 0
    %1733 = vmatpush1.bf16.msra.mxu0 0
    %1734 = vmatprep.subr.bf16.mxu0 0
    %1735 = vmatpush1.bf16.msra.mxu0 0
    %1736 = vmatprep.subr.bf16.mxu0 0
    %1737 = vmatpush1.bf16.msra.mxu0 0
    %1738 = vmatprep.subr.bf16.mxu0 0
    %1739 = vmatpush1.bf16.msra.mxu0 0
    %1740 = vmatprep.subr.bf16.mxu0 %v1584
    %1741 = vmatpush1.bf16.msra.mxu0 %v1583
    %1742 = vmatprep.subr.bf16.mxu0 %v1576
    %1743 = vmatpush1.bf16.msra.mxu0 %v1575
    %1744 = vmatprep.subr.bf16.mxu0 %v1568
    %1745 = vmatpush1.bf16.msra.mxu0 %v1567
    %1746 = vmatprep.subr.bf16.mxu0 0
    %1747 = vmatpush2.bf16.msra.mxu0 0
    %1748 = vmatprep.subr.bf16.mxu0 0
    %1749 = vmatpush2.bf16.msra.mxu0 0
    %1750 = vmatprep.subr.bf16.mxu0 0
    %1751 = vmatpush2.bf16.msra.mxu0 0
    %1752 = vmatprep.subr.bf16.mxu0 0
    %1753 = vmatpush2.bf16.msra.mxu0 0
    %1754 = vmatprep.subr.bf16.mxu0 0
    %1755 = vmatpush2.bf16.msra.mxu0 0
    %1756 = vmatprep.subr.bf16.mxu0 0
    %1757 = vmatpush2.bf16.msra.mxu0 0
    %1758 = vmatprep.subr.bf16.mxu0 0
    %1759 = vmatpush2.bf16.msra.mxu0 0
    %1760 = vmatprep.subr.bf16.mxu0 0
    %1761 = vmatpush2.bf16.msra.mxu0 0
    %1762 = vmatprep.mubr.bf16.mxu0 0
    %1763 = vmatmul.mubr.bf16.gmra.mxu0 %v1605
    %v1764 = vpop.f32.mrf.mxu0
    %v1765 = vadd.f32 %v1592, %v1764
    %v1766 = vpop.f32.mrf.mxu0
    %v1767 = vpop.f32.mrf.mxu0
    %v1768 = vadd.f32 %v1597, %v1767
    %v1769 = vpop.f32.mrf.mxu0
    %1770 = vdwg.mxu0
    %vm1771 = vcmp.ge.f32.partialorder %v1642, 0.0
    %vm1772 = vcmp.ge.f32.partialorder %v1683, 0.0
    %vm1773 = vcmp.ge.f32.partialorder %v1724, 0.0
    %vm1774 = vcmp.ge.f32.partialorder %v1765, 0.0
    %vm1775 = vcmp.ge.f32.partialorder %v1645, 0.0
    %vm1776 = vcmp.ge.f32.partialorder %v1686, 0.0
    %vm1777 = vcmp.ge.f32.partialorder %v1727, 0.0
    %vm1778 = vcmp.ge.f32.partialorder %v1768, 0.0
    %v1779 = vmul.f32 %v1642, 0.2
    %v1780 = vmul.f32 %v1683, 0.2
    %v1781 = vmul.f32 %v1724, 0.2
    %v1782 = vmul.f32 %v1765, 0.2
    %v1783 = vmul.f32 %v1645, 0.2
    %v1784 = vmul.f32 %v1686, 0.2
    %v1785 = vmul.f32 %v1727, 0.2
    %v1786 = vmul.f32 %v1768, 0.2
    %v1787 = vsel %vm1771, %v1642, %v1779
    %v1788 = vsel %vm1772, %v1683, %v1780
    %v1789 = vsel %vm1773, %v1724, %v1781
    %v1790 = vsel %vm1774, %v1765, %v1782
    %v1791 = vsel %vm1775, %v1645, %v1783
    %v1792 = vsel %vm1776, %v1686, %v1784
    %v1793 = vsel %vm1777, %v1727, %v1785
    %v1794 = vsel %vm1778, %v1768, %v1786
    %v1795 = vpack.c.bf16 %v1791, %v1787
    %v1796 = vpack.c.bf16 %v1792, %v1788
    %v1797 = vpack.c.bf16 %v1793, %v1789
    %v1798 = vpack.c.bf16 %v1794, %v1790
    %v1799 = vld [vmem:[%s7] sm:$0xf]
    %v1800 = vld [vmem:[%s7 + $0x4] sm:$0xf]
    %v1801 = vld [vmem:[%s7 + $0x8] sm:$0xf]
    %v1802 = vld [vmem:[%s7 + $0xc] sm:$0xf]
    %v1803 = vld [vmem:[%s7 + $0x10] sm:$0xf]
    %v1804 = vld [vmem:[%s7 + $0x14] sm:$0xf]
    %v1805 = vld [vmem:[%s7 + $0x18] sm:$0xf]
    %v1806 = vld [vmem:[%s7 + $0x1c] sm:$0xf]
    %v1807 = vld [vmem:[%s7 + $0x20] sm:$0xf]
    %v1808 = vld [vmem:[%s7 + $0x24] sm:$0xf]
    %v1809 = vld [vmem:[%s7 + $0x28] sm:$0xf]
    %v1810 = vld [vmem:[%s7 + $0x2c] sm:$0xf]
    %v1811 = vld [vmem:[%s7 + $0x30] sm:$0xf]
    %v1812 = vld [vmem:[%s7 + $0x34] sm:$0xf]
    %v1813 = vld [vmem:[%s7 + $0x38] sm:$0xf]
    %v1814 = vld [vmem:[%s7 + $0x3c] sm:$0xf]
    %v1815 = vld [vmem:[%s8] sm:$0xff]
    %v1816 = vld [vmem:[%s8 + $0x8] sm:$0xff]
    %v1817 = vld [vmem:[%s8 + $0x10] sm:$0xff]
    %v1818 = vld [vmem:[%s8 + $0x18] sm:$0xff]
    %v1819 = vld [vmem:[%s8 + $0x20] sm:$0xff]
    %v1820 = vld [vmem:[%s8 + $0x28] sm:$0xff]
    %v1821 = vld [vmem:[%s8 + $0x30] sm:$0xff]
    %v1822 = vld [vmem:[%s8 + $0x38] sm:$0xff]
    %v1823 = vld [vmem:[%s8 + $0x40] sm:$0xff]
    %v1824 = vld [vmem:[%s8 + $0x48] sm:$0xff]
    %v1825 = vld [vmem:[%s8 + $0x50] sm:$0xff]
    %v1826 = vld [vmem:[%s8 + $0x58] sm:$0xff]
    %v1827 = vld [vmem:[%s8 + $0x60] sm:$0xff]
    %v1828 = vld [vmem:[%s8 + $0x68] sm:$0xff]
    %v1829 = vld [vmem:[%s8 + $0x70] sm:$0xff]
    %v1830 = vld [vmem:[%s8 + $0x78] sm:$0xff]
    %1832 = vset.pattern.permute.xlu0 0
    %1833 = vperm.xlu0 %1832, %v1815
    %v1834 = vpop.permute.xlu0 %1833
    %1837 = vset.pattern.permute.xlu0 0
    %1838 = vperm.xlu0 %1837, %v1816
    %v1839 = vpop.permute.xlu0 %1838
    %1842 = vset.pattern.permute.xlu0 0
    %1843 = vperm.xlu0 %1842, %v1817
    %v1844 = vpop.permute.xlu0 %1843
    %1847 = vset.pattern.permute.xlu0 0
    %1848 = vperm.xlu0 %1847, %v1818
    %v1849 = vpop.permute.xlu0 %1848
    %1852 = vset.pattern.permute.xlu0 0
    %1853 = vperm.xlu0 %1852, %v1819
    %v1854 = vpop.permute.xlu0 %1853
    %1857 = vset.pattern.permute.xlu0 0
    %1858 = vperm.xlu0 %1857, %v1820
    %v1859 = vpop.permute.xlu0 %1858
    %1862 = vset.pattern.permute.xlu0 0
    %1863 = vperm.xlu0 %1862, %v1821
    %v1864 = vpop.permute.xlu0 %1863
    %1867 = vset.pattern.permute.xlu0 0
    %1868 = vperm.xlu0 %1867, %v1822
    %v1869 = vpop.permute.xlu0 %1868
    %1872 = vset.pattern.permute.xlu0 0
    %1873 = vperm.xlu0 %1872, %v1823
    %v1874 = vpop.permute.xlu0 %1873
    %1877 = vset.pattern.permute.xlu0 0
    %1878 = vperm.xlu0 %1877, %v1824
    %v1879 = vpop.permute.xlu0 %1878
    %1882 = vset.pattern.permute.xlu0 0
    %1883 = vperm.xlu0 %1882, %v1825
    %v1884 = vpop.permute.xlu0 %1883
    %1887 = vset.pattern.permute.xlu0 0
    %1888 = vperm.xlu0 %1887, %v1826
    %v1889 = vpop.permute.xlu0 %1888
    %1892 = vset.pattern.permute.xlu0 0
    %1893 = vperm.xlu0 %1892, %v1827
    %v1894 = vpop.permute.xlu0 %1893
    %1897 = vset.pattern.permute.xlu0 0
    %1898 = vperm.xlu0 %1897, %v1828
    %v1899 = vpop.permute.xlu0 %1898
    %1902 = vset.pattern.permute.xlu0 0
    %1903 = vperm.xlu0 %1902, %v1829
    %v1904 = vpop.permute.xlu0 %1903
    %1907 = vset.pattern.permute.xlu0 0
    %1908 = vperm.xlu0 %1907, %v1830
    %v1909 = vpop.permute.xlu0 %1908
    %v1927 = vunpack.c.l.b16 %v1799
    %v1928 = vunpack.c.l.b16 %v1800
    %v1929 = vunpack.c.l.b16 %v1801
    %v1930 = vunpack.c.l.b16 %v1802
    %v1931 = vunpack.c.l.b16 %v1803
    %v1932 = vunpack.c.l.b16 %v1804
    %v1933 = vunpack.c.l.b16 %v1805
    %v1934 = vunpack.c.l.b16 %v1806
    %v1935 = vunpack.c.l.b16 %v1807
    %v1936 = vunpack.c.l.b16 %v1808
    %v1937 = vunpack.c.l.b16 %v1809
    %v1938 = vunpack.c.l.b16 %v1810
    %v1939 = vunpack.c.l.b16 %v1811
    %v1940 = vunpack.c.l.b16 %v1812
    %v1941 = vunpack.c.l.b16 %v1813
    %v1942 = vunpack.c.l.b16 %v1814
    %v1943 = vpack.c.b16 %v1928, %v1927
    %v1944 = vpack.c.b16 %v1930, %v1929
    %v1945 = vpack.c.b16 %v1932, %v1931
    %v1946 = vpack.c.b16 %v1934, %v1933
    %v1947 = vpack.c.b16 %v1936, %v1935
    %v1948 = vpack.c.b16 %v1938, %v1937
    %v1949 = vpack.c.b16 %v1940, %v1939
    %v1950 = vpack.c.b16 %v1942, %v1941
    %vm1951 = vcmask 523264
    %v1953 = vsel %vm1951, %v1943, 0
    %v1956 = vsel %vm1951, %v1944, 0
    %v1959 = vsel %vm1951, %v1945, 0
    %v1962 = vsel %vm1951, %v1946, 0
    %v1965 = vsel %vm1951, %v1947, 0
    %v1968 = vsel %vm1951, %v1948, 0
    %v1971 = vsel %vm1951, %v1949, 0
    %v1974 = vsel %vm1951, %v1950, 0
    %1976 = vmatprep.subr.bf16.mxu0 0
    %1977 = vmatpush1.bf16.msra.mxu0 0
    %1978 = vmatprep.subr.bf16.mxu0 0
    %1979 = vmatpush1.bf16.msra.mxu0 0
    %1980 = vmatprep.subr.bf16.mxu0 0
    %1981 = vmatpush1.bf16.msra.mxu0 0
    %1982 = vmatprep.subr.bf16.mxu0 0
    %1983 = vmatpush1.bf16.msra.mxu0 0
    %1984 = vmatprep.subr.bf16.mxu0 0
    %1985 = vmatpush1.bf16.msra.mxu0 %v1798
    %1986 = vmatprep.subr.bf16.mxu0 0
    %1987 = vmatpush1.bf16.msra.mxu0 %v1797
    %1988 = vmatprep.subr.bf16.mxu0 0
    %1989 = vmatpush1.bf16.msra.mxu0 %v1796
    %1990 = vmatprep.subr.bf16.mxu0 0
    %1991 = vmatpush1.bf16.msra.mxu0 %v1795
    %1992 = vmatprep.subr.bf16.mxu0 0
    %1993 = vmatpush2.bf16.msra.mxu0 0
    %1994 = vmatprep.subr.bf16.mxu0 0
    %1995 = vmatpush2.bf16.msra.mxu0 0
    %1996 = vmatprep.subr.bf16.mxu0 0
    %1997 = vmatpush2.bf16.msra.mxu0 0
    %1998 = vmatprep.subr.bf16.mxu0 0
    %1999 = vmatpush2.bf16.msra.mxu0 0
    %2000 = vmatprep.subr.bf16.mxu0 0
    %2001 = vmatpush2.bf16.msra.mxu0 0
    %2002 = vmatprep.subr.bf16.mxu0 0
    %2003 = vmatpush2.bf16.msra.mxu0 0
    %2004 = vmatprep.subr.bf16.mxu0 0
    %2005 = vmatpush2.bf16.msra.mxu0 0
    %2006 = vmatprep.subr.bf16.mxu0 0
    %2007 = vmatpush2.bf16.msra.mxu0 0
    %2008 = vmatprep.mubr.bf16.mxu0 0
    %2009 = vmatmul.mubr.bf16.gmra.mxu0 %v1953
    %v2010 = vpop.f32.mrf.mxu0
    %v2011 = vadd.f32 %v1834, %v2010
    %v2012 = vpop.f32.mrf.mxu0
    %v2013 = vpop.f32.mrf.mxu0
    %v2014 = vadd.f32 %v1839, %v2013
    %v2015 = vpop.f32.mrf.mxu0
    %2016 = vmatprep.mubr.bf16.mxu0 0
    %2017 = vmatmul.mubr.bf16.gmra.mxu0 %v1956
    %v2018 = vpop.f32.mrf.mxu0
    %v2019 = vadd.f32 %v1844, %v2018
    %v2020 = vpop.f32.mrf.mxu0
    %v2021 = vpop.f32.mrf.mxu0
    %v2022 = vadd.f32 %v1849, %v2021
    %v2023 = vpop.f32.mrf.mxu0
    %2024 = vmatprep.mubr.bf16.mxu0 0
    %2025 = vmatmul.mubr.bf16.gmra.mxu0 %v1959
    %v2026 = vpop.f32.mrf.mxu0
    %v2027 = vadd.f32 %v1854, %v2026
    %v2028 = vpop.f32.mrf.mxu0
    %v2029 = vpop.f32.mrf.mxu0
    %v2030 = vadd.f32 %v1859, %v2029
    %v2031 = vpop.f32.mrf.mxu0
    %2032 = vmatprep.mubr.bf16.mxu0 0
    %2033 = vmatmul.mubr.bf16.gmra.mxu0 %v1962
    %v2034 = vpop.f32.mrf.mxu0
    %v2035 = vadd.f32 %v1864, %v2034
    %v2036 = vpop.f32.mrf.mxu0
    %v2037 = vpop.f32.mrf.mxu0
    %v2038 = vadd.f32 %v1869, %v2037
    %v2039 = vpop.f32.mrf.mxu0
    %2040 = vmatprep.mubr.bf16.mxu0 0
    %2041 = vmatmul.mubr.bf16.gmra.mxu0 %v1965
    %v2042 = vpop.f32.mrf.mxu0
    %v2043 = vadd.f32 %v1874, %v2042
    %v2044 = vpop.f32.mrf.mxu0
    %v2045 = vpop.f32.mrf.mxu0
    %v2046 = vadd.f32 %v1879, %v2045
    %v2047 = vpop.f32.mrf.mxu0
    %2048 = vmatprep.mubr.bf16.mxu0 0
    %2049 = vmatmul.mubr.bf16.gmra.mxu0 %v1968
    %v2050 = vpop.f32.mrf.mxu0
    %v2051 = vadd.f32 %v1884, %v2050
    %v2052 = vpop.f32.mrf.mxu0
    %v2053 = vpop.f32.mrf.mxu0
    %v2054 = vadd.f32 %v1889, %v2053
    %v2055 = vpop.f32.mrf.mxu0
    %2056 = vmatprep.mubr.bf16.mxu0 0
    %2057 = vmatmul.mubr.bf16.gmra.mxu0 %v1971
    %v2058 = vpop.f32.mrf.mxu0
    %v2059 = vadd.f32 %v1894, %v2058
    %v2060 = vpop.f32.mrf.mxu0
    %v2061 = vpop.f32.mrf.mxu0
    %v2062 = vadd.f32 %v1899, %v2061
    %v2063 = vpop.f32.mrf.mxu0
    %2064 = vmatprep.mubr.bf16.mxu0 0
    %2065 = vmatmul.mubr.bf16.gmra.mxu0 %v1974
    %v2066 = vpop.f32.mrf.mxu0
    %v2067 = vadd.f32 %v1904, %v2066
    %v2068 = vpop.f32.mrf.mxu0
    %v2069 = vpop.f32.mrf.mxu0
    %v2070 = vadd.f32 %v1909, %v2069
    %v2071 = vpop.f32.mrf.mxu0
    %2072 = vdwg.mxu0
    %vm2073 = vcmp.ge.f32.partialorder %v2011, 0.0
    %vm2074 = vcmp.ge.f32.partialorder %v2014, 0.0
    %vm2075 = vcmp.ge.f32.partialorder %v2019, 0.0
    %vm2076 = vcmp.ge.f32.partialorder %v2022, 0.0
    %vm2077 = vcmp.ge.f32.partialorder %v2027, 0.0
    %vm2078 = vcmp.ge.f32.partialorder %v2030, 0.0
    %vm2079 = vcmp.ge.f32.partialorder %v2035, 0.0
    %vm2080 = vcmp.ge.f32.partialorder %v2038, 0.0
    %vm2081 = vcmp.ge.f32.partialorder %v2043, 0.0
    %vm2082 = vcmp.ge.f32.partialorder %v2046, 0.0
    %vm2083 = vcmp.ge.f32.partialorder %v2051, 0.0
    %vm2084 = vcmp.ge.f32.partialorder %v2054, 0.0
    %vm2085 = vcmp.ge.f32.partialorder %v2059, 0.0
    %vm2086 = vcmp.ge.f32.partialorder %v2062, 0.0
    %vm2087 = vcmp.ge.f32.partialorder %v2067, 0.0
    %vm2088 = vcmp.ge.f32.partialorder %v2070, 0.0
    %v2089 = vmul.f32 %v2011, 0.2
    %v2090 = vmul.f32 %v2014, 0.2
    %v2091 = vmul.f32 %v2019, 0.2
    %v2092 = vmul.f32 %v2022, 0.2
    %v2093 = vmul.f32 %v2027, 0.2
    %v2094 = vmul.f32 %v2030, 0.2
    %v2095 = vmul.f32 %v2035, 0.2
    %v2096 = vmul.f32 %v2038, 0.2
    %v2097 = vmul.f32 %v2043, 0.2
    %v2098 = vmul.f32 %v2046, 0.2
    %v2099 = vmul.f32 %v2051, 0.2
    %v2100 = vmul.f32 %v2054, 0.2
    %v2101 = vmul.f32 %v2059, 0.2
    %v2102 = vmul.f32 %v2062, 0.2
    %v2103 = vmul.f32 %v2067, 0.2
    %v2104 = vmul.f32 %v2070, 0.2
    %v2105 = vsel %vm2073, %v2011, %v2089
    %v2106 = vsel %vm2074, %v2014, %v2090
    %v2107 = vsel %vm2075, %v2019, %v2091
    %v2108 = vsel %vm2076, %v2022, %v2092
    %v2109 = vsel %vm2077, %v2027, %v2093
    %v2110 = vsel %vm2078, %v2030, %v2094
    %v2111 = vsel %vm2079, %v2035, %v2095
    %v2112 = vsel %vm2080, %v2038, %v2096
    %v2113 = vsel %vm2081, %v2043, %v2097
    %v2114 = vsel %vm2082, %v2046, %v2098
    %v2115 = vsel %vm2083, %v2051, %v2099
    %v2116 = vsel %vm2084, %v2054, %v2100
    %v2117 = vsel %vm2085, %v2059, %v2101
    %v2118 = vsel %vm2086, %v2062, %v2102
    %v2119 = vsel %vm2087, %v2067, %v2103
    %v2120 = vsel %vm2088, %v2070, %v2104
    %v2121 = vld [vmem:[%s9] sm:$0xf]
    %v2122 = vld [vmem:[%s9 + $0x4] sm:$0xf]
    %v2123 = vld [vmem:[%s9 + $0x8] sm:$0xf]
    %v2124 = vld [vmem:[%s9 + $0xc] sm:$0xf]
    %v2125 = vld [vmem:[%s9 + $0x10] sm:$0xf]
    %v2126 = vld [vmem:[%s9 + $0x14] sm:$0xf]
    %v2127 = vld [vmem:[%s9 + $0x18] sm:$0xf]
    %v2128 = vld [vmem:[%s9 + $0x1c] sm:$0xf]
    %v2129 = vpack.c.bf16 %v2106, %v2105
    %v2130 = vpack.c.bf16 %v2108, %v2107
    %v2131 = vpack.c.bf16 %v2110, %v2109
    %v2132 = vpack.c.bf16 %v2112, %v2111
    %v2133 = vpack.c.bf16 %v2114, %v2113
    %v2134 = vpack.c.bf16 %v2116, %v2115
    %v2135 = vpack.c.bf16 %v2118, %v2117
    %v2136 = vpack.c.bf16 %v2120, %v2119
    %v2137 = vld [vmem:[%s10] sm:$0xff]
    %v2138 = vld [vmem:[%s10 + $0x8] sm:$0xff]
    %v2139 = vld [vmem:[%s10 + $0x10] sm:$0xff]
    %v2140 = vld [vmem:[%s10 + $0x18] sm:$0xff]
    %v2141 = vld [vmem:[%s10 + $0x20] sm:$0xff]
    %v2142 = vld [vmem:[%s10 + $0x28] sm:$0xff]
    %v2143 = vld [vmem:[%s10 + $0x30] sm:$0xff]
    %v2144 = vld [vmem:[%s10 + $0x38] sm:$0xff]
    %2146 = vset.pattern.permute.xlu0 0
    %2147 = vperm.xlu0 %2146, %v2137
    %v2148 = vpop.permute.xlu0 %2147
    %2151 = vset.pattern.permute.xlu0 0
    %2152 = vperm.xlu0 %2151, %v2138
    %v2153 = vpop.permute.xlu0 %2152
    %2156 = vset.pattern.permute.xlu0 0
    %2157 = vperm.xlu0 %2156, %v2139
    %v2158 = vpop.permute.xlu0 %2157
    %2161 = vset.pattern.permute.xlu0 0
    %2162 = vperm.xlu0 %2161, %v2140
    %v2163 = vpop.permute.xlu0 %2162
    %2166 = vset.pattern.permute.xlu0 0
    %2167 = vperm.xlu0 %2166, %v2141
    %v2168 = vpop.permute.xlu0 %2167
    %2171 = vset.pattern.permute.xlu0 0
    %2172 = vperm.xlu0 %2171, %v2142
    %v2173 = vpop.permute.xlu0 %2172
    %2176 = vset.pattern.permute.xlu0 0
    %2177 = vperm.xlu0 %2176, %v2143
    %v2178 = vpop.permute.xlu0 %2177
    %2181 = vset.pattern.permute.xlu0 0
    %2182 = vperm.xlu0 %2181, %v2144
    %v2183 = vpop.permute.xlu0 %2182
    %v2193 = vunpack.c.l.b16 %v2121
    %v2194 = vunpack.c.l.b16 %v2122
    %v2195 = vunpack.c.l.b16 %v2123
    %v2196 = vunpack.c.l.b16 %v2124
    %v2197 = vunpack.c.l.b16 %v2125
    %v2198 = vunpack.c.l.b16 %v2126
    %v2199 = vunpack.c.l.b16 %v2127
    %v2200 = vunpack.c.l.b16 %v2128
    %v2201 = vpack.c.b16 %v2194, %v2193
    %v2202 = vpack.c.b16 %v2196, %v2195
    %v2203 = vpack.c.b16 %v2198, %v2197
    %v2204 = vpack.c.b16 %v2200, %v2199
    %2209 = vmatprep.subr.bf16.mxu0 0
    %2210 = vmatpush1.bf16.msra.mxu0 %v2136
    %2211 = vmatprep.subr.bf16.mxu0 0
    %2212 = vmatpush1.bf16.msra.mxu0 %v2135
    %2213 = vmatprep.subr.bf16.mxu0 0
    %2214 = vmatpush1.bf16.msra.mxu0 %v2134
    %2215 = vmatprep.subr.bf16.mxu0 0
    %2216 = vmatpush1.bf16.msra.mxu0 %v2133
    %2217 = vmatprep.subr.bf16.mxu0 0
    %2218 = vmatpush1.bf16.msra.mxu0 %v2132
    %2219 = vmatprep.subr.bf16.mxu0 0
    %2220 = vmatpush1.bf16.msra.mxu0 %v2131
    %2221 = vmatprep.subr.bf16.mxu0 0
    %2222 = vmatpush1.bf16.msra.mxu0 %v2130
    %2223 = vmatprep.subr.bf16.mxu0 0
    %2224 = vmatpush1.bf16.msra.mxu0 %v2129
    %2225 = vmatprep.subr.bf16.mxu0 0
    %2226 = vmatpush2.bf16.msra.mxu0 0
    %2227 = vmatprep.subr.bf16.mxu0 0
    %2228 = vmatpush2.bf16.msra.mxu0 0
    %2229 = vmatprep.subr.bf16.mxu0 0
    %2230 = vmatpush2.bf16.msra.mxu0 0
    %2231 = vmatprep.subr.bf16.mxu0 0
    %2232 = vmatpush2.bf16.msra.mxu0 0
    %2233 = vmatprep.subr.bf16.mxu0 0
    %2234 = vmatpush2.bf16.msra.mxu0 0
    %2235 = vmatprep.subr.bf16.mxu0 0
    %2236 = vmatpush2.bf16.msra.mxu0 0
    %2237 = vmatprep.subr.bf16.mxu0 0
    %2238 = vmatpush2.bf16.msra.mxu0 0
    %2239 = vmatprep.subr.bf16.mxu0 0
    %2240 = vmatpush2.bf16.msra.mxu0 0
    %2241 = vmatprep.mubr.bf16.mxu0 0
    %2242 = vmatmul.mubr.bf16.gmra.mxu0 %v2201
    %v2243 = vpop.f32.mrf.mxu0
    %v2244 = vadd.f32 %v2148, %v2243
    %v2245 = vpop.f32.mrf.mxu0
    %v2246 = vpop.f32.mrf.mxu0
    %v2247 = vadd.f32 %v2153, %v2246
    %v2248 = vpop.f32.mrf.mxu0
    %2249 = vmatprep.mubr.bf16.mxu0 0
    %2250 = vmatmul.mubr.bf16.gmra.mxu0 %v2202
    %v2251 = vpop.f32.mrf.mxu0
    %v2252 = vadd.f32 %v2158, %v2251
    %v2253 = vpop.f32.mrf.mxu0
    %v2254 = vpop.f32.mrf.mxu0
    %v2255 = vadd.f32 %v2163, %v2254
    %v2256 = vpop.f32.mrf.mxu0
    %2257 = vmatprep.mubr.bf16.mxu0 0
    %2258 = vmatmul.mubr.bf16.gmra.mxu0 %v2203
    %v2259 = vpop.f32.mrf.mxu0
    %v2260 = vadd.f32 %v2168, %v2259
    %v2261 = vpop.f32.mrf.mxu0
    %v2262 = vpop.f32.mrf.mxu0
    %v2263 = vadd.f32 %v2173, %v2262
    %v2264 = vpop.f32.mrf.mxu0
    %2265 = vmatprep.mubr.bf16.mxu0 0
    %2266 = vmatmul.mubr.bf16.gmra.mxu0 %v2204
    %v2267 = vpop.f32.mrf.mxu0
    %v2268 = vadd.f32 %v2178, %v2267
    %v2269 = vpop.f32.mrf.mxu0
    %v2270 = vpop.f32.mrf.mxu0
    %v2271 = vadd.f32 %v2183, %v2270
    %v2272 = vpop.f32.mrf.mxu0
    %2273 = vdwg.mxu0
    %vm2274 = vcmp.ge.f32.partialorder %v2244, 0.0
    %vm2275 = vcmp.ge.f32.partialorder %v2247, 0.0
    %vm2276 = vcmp.ge.f32.partialorder %v2252, 0.0
    %vm2277 = vcmp.ge.f32.partialorder %v2255, 0.0
    %vm2278 = vcmp.ge.f32.partialorder %v2260, 0.0
    %vm2279 = vcmp.ge.f32.partialorder %v2263, 0.0
    %vm2280 = vcmp.ge.f32.partialorder %v2268, 0.0
    %vm2281 = vcmp.ge.f32.partialorder %v2271, 0.0
    %v2282 = vmul.f32 %v2244, 0.2
    %v2283 = vmul.f32 %v2247, 0.2
    %v2284 = vmul.f32 %v2252, 0.2
    %v2285 = vmul.f32 %v2255, 0.2
    %v2286 = vmul.f32 %v2260, 0.2
    %v2287 = vmul.f32 %v2263, 0.2
    %v2288 = vmul.f32 %v2268, 0.2
    %v2289 = vmul.f32 %v2271, 0.2
    %v2290 = vsel %vm2274, %v2244, %v2282
    %v2291 = vsel %vm2275, %v2247, %v2283
    %v2292 = vsel %vm2276, %v2252, %v2284
    %v2293 = vsel %vm2277, %v2255, %v2285
    %v2294 = vsel %vm2278, %v2260, %v2286
    %v2295 = vsel %vm2279, %v2263, %v2287
    %v2296 = vsel %vm2280, %v2268, %v2288
    %v2297 = vsel %vm2281, %v2271, %v2289
    %v2298 = vld [vmem:[%s11] sm:$0xf]
    %v2299 = vld [vmem:[%s11 + $0x4] sm:$0xf]
    %v2300 = vld [vmem:[%s11 + $0x8] sm:$0xf]
    %v2301 = vld [vmem:[%s11 + $0xc] sm:$0xf]
    %v2302 = vpack.c.bf16 %v2291, %v2290
    %v2303 = vpack.c.bf16 %v2293, %v2292
    %v2304 = vpack.c.bf16 %v2295, %v2294
    %v2305 = vpack.c.bf16 %v2297, %v2296
    %v2306 = vld [vmem:[%s12] sm:$0xff]
    %v2307 = vld [vmem:[%s12 + $0x8] sm:$0xff]
    %v2308 = vld [vmem:[%s12 + $0x10] sm:$0xff]
    %v2309 = vld [vmem:[%s12 + $0x18] sm:$0xff]
    %2311 = vset.pattern.permute.xlu0 0
    %2312 = vperm.xlu0 %2311, %v2306
    %v2313 = vpop.permute.xlu0 %2312
    %2316 = vset.pattern.permute.xlu0 0
    %2317 = vperm.xlu0 %2316, %v2307
    %v2318 = vpop.permute.xlu0 %2317
    %2321 = vset.pattern.permute.xlu0 0
    %2322 = vperm.xlu0 %2321, %v2308
    %v2323 = vpop.permute.xlu0 %2322
    %2326 = vset.pattern.permute.xlu0 0
    %2327 = vperm.xlu0 %2326, %v2309
    %v2328 = vpop.permute.xlu0 %2327
    %v2334 = vunpack.c.l.b16 %v2298
    %v2335 = vunpack.c.l.b16 %v2299
    %v2336 = vunpack.c.l.b16 %v2300
    %v2337 = vunpack.c.l.b16 %v2301
    %v2338 = vpack.c.b16 %v2335, %v2334
    %v2339 = vpack.c.b16 %v2337, %v2336
    %v2341 = vsel %vm1951, %v2338, 0
    %v2344 = vsel %vm1951, %v2339, 0
    %2346 = vmatprep.subr.bf16.mxu0 0
    %2347 = vmatpush1.bf16.msra.mxu0 0
    %2348 = vmatprep.subr.bf16.mxu0 0
    %2349 = vmatpush1.bf16.msra.mxu0 0
    %2350 = vmatprep.subr.bf16.mxu0 0
    %2351 = vmatpush1.bf16.msra.mxu0 0
    %2352 = vmatprep.subr.bf16.mxu0 0
    %2353 = vmatpush1.bf16.msra.mxu0 0
    %2354 = vmatprep.subr.bf16.mxu0 0
    %2355 = vmatpush1.bf16.msra.mxu0 %v2305
    %2356 = vmatprep.subr.bf16.mxu0 0
    %2357 = vmatpush1.bf16.msra.mxu0 %v2304
    %2358 = vmatprep.subr.bf16.mxu0 0
    %2359 = vmatpush1.bf16.msra.mxu0 %v2303
    %2360 = vmatprep.subr.bf16.mxu0 0
    %2361 = vmatpush1.bf16.msra.mxu0 %v2302
    %2362 = vmatprep.subr.bf16.mxu0 0
    %2363 = vmatpush2.bf16.msra.mxu0 0
    %2364 = vmatprep.subr.bf16.mxu0 0
    %2365 = vmatpush2.bf16.msra.mxu0 0
    %2366 = vmatprep.subr.bf16.mxu0 0
    %2367 = vmatpush2.bf16.msra.mxu0 0
    %2368 = vmatprep.subr.bf16.mxu0 0
    %2369 = vmatpush2.bf16.msra.mxu0 0
    %2370 = vmatprep.subr.bf16.mxu0 0
    %2371 = vmatpush2.bf16.msra.mxu0 0
    %2372 = vmatprep.subr.bf16.mxu0 0
    %2373 = vmatpush2.bf16.msra.mxu0 0
    %2374 = vmatprep.subr.bf16.mxu0 0
    %2375 = vmatpush2.bf16.msra.mxu0 0
    %2376 = vmatprep.subr.bf16.mxu0 0
    %2377 = vmatpush2.bf16.msra.mxu0 0
    %2378 = vmatprep.mubr.bf16.mxu0 0
    %2379 = vmatmul.mubr.bf16.gmra.mxu0 %v2341
    %v2380 = vpop.f32.mrf.mxu0
    %v2381 = vadd.f32 %v2313, %v2380
    %v2382 = vpop.f32.mrf.mxu0
    %v2383 = vpop.f32.mrf.mxu0
    %v2384 = vadd.f32 %v2318, %v2383
    %v2385 = vpop.f32.mrf.mxu0
    %2386 = vmatprep.mubr.bf16.mxu0 0
    %2387 = vmatmul.mubr.bf16.gmra.mxu0 %v2344
    %v2388 = vpop.f32.mrf.mxu0
    %v2389 = vadd.f32 %v2323, %v2388
    %v2390 = vpop.f32.mrf.mxu0
    %v2391 = vpop.f32.mrf.mxu0
    %v2392 = vadd.f32 %v2328, %v2391
    %v2393 = vpop.f32.mrf.mxu0
    %2394 = vdwg.mxu0
    %vm2395 = vcmp.ge.f32.partialorder %v2381, 0.0
    %vm2396 = vcmp.ge.f32.partialorder %v2384, 0.0
    %vm2397 = vcmp.ge.f32.partialorder %v2389, 0.0
    %vm2398 = vcmp.ge.f32.partialorder %v2392, 0.0
    %v2399 = vmul.f32 %v2381, 0.2
    %v2400 = vmul.f32 %v2384, 0.2
    %v2401 = vmul.f32 %v2389, 0.2
    %v2402 = vmul.f32 %v2392, 0.2
    %v2403 = vsel %vm2395, %v2381, %v2399
    %v2404 = vsel %vm2396, %v2384, %v2400
    %v2405 = vsel %vm2397, %v2389, %v2401
    %v2406 = vsel %vm2398, %v2392, %v2402
    %v2407 = vld [vmem:[%s13] sm:$0x1]
    %v2408 = vpack.c.bf16 %v2404, %v2403
    %v2409 = vpack.c.bf16 %v2406, %v2405
    %v2410 = vld [vmem:[#allocation2] sm:$0x1]
    %2412 = vset.pattern.permute.xlu0 0
    %2413 = vperm.xlu0 %2412, %v2410
    %v2414 = vpop.permute.xlu0 %2413
    %v2416 = vlaneseq
    %v2417 = vshrl.u32 %v2416, 7
    %v2418 = vsub.s32 0, %v2417
    %v2419 = vrot.slane %v2414, %v2418
    %vm2420 = vcmask 261120
    %v2422 = vsel %vm2420, %v2407, 0
    %2424 = vmatprep.subr.bf16.mxu0 0
    %2425 = vmatpush1.bf16.msra.mxu0 0
    %2426 = vmatprep.subr.bf16.mxu0 0
    %2427 = vmatpush1.bf16.msra.mxu0 0
    %2428 = vmatprep.subr.bf16.mxu0 0
    %2429 = vmatpush1.bf16.msra.mxu0 0
    %2430 = vmatprep.subr.bf16.mxu0 0
    %2431 = vmatpush1.bf16.msra.mxu0 0
    %2432 = vmatprep.subr.bf16.mxu0 0
    %2433 = vmatpush1.bf16.msra.mxu0 0
    %2434 = vmatprep.subr.bf16.mxu0 0
    %2435 = vmatpush1.bf16.msra.mxu0 0
    %2436 = vmatprep.subr.bf16.mxu0 0
    %2437 = vmatpush1.bf16.msra.mxu0 %v2409
    %2438 = vmatprep.subr.bf16.mxu0 0
    %2439 = vmatpush1.bf16.msra.mxu0 %v2408
    %2440 = vmatprep.subr.bf16.mxu0 0
    %2441 = vmatpush2.bf16.msra.mxu0 0
    %2442 = vmatprep.subr.bf16.mxu0 0
    %2443 = vmatpush2.bf16.msra.mxu0 0
    %2444 = vmatprep.subr.bf16.mxu0 0
    %2445 = vmatpush2.bf16.msra.mxu0 0
    %2446 = vmatprep.subr.bf16.mxu0 0
    %2447 = vmatpush2.bf16.msra.mxu0 0
    %2448 = vmatprep.subr.bf16.mxu0 0
    %2449 = vmatpush2.bf16.msra.mxu0 0
    %2450 = vmatprep.subr.bf16.mxu0 0
    %2451 = vmatpush2.bf16.msra.mxu0 0
    %2452 = vmatprep.subr.bf16.mxu0 0
    %2453 = vmatpush2.bf16.msra.mxu0 0
    %2454 = vmatprep.subr.bf16.mxu0 0
    %2455 = vmatpush2.bf16.msra.mxu0 0
    %2456 = vmatprep.mubr.bf16.mxu0 0
    %2457 = vmatmul.mubr.bf16.gmra.mxu0 %v2422
    %v2458 = vpop.f32.mrf.mxu0
    %v2459 = vadd.f32 %v2419, %v2458
    %v2460 = vpop.f32.mrf.mxu0
    %v2461 = vpop.f32.mrf.mxu0
    %v2462 = vpop.f32.mrf.mxu0
    %2463 = vdwg.mxu0
    %v2464 = vadd.f32 %v82, %v83
    %v2465 = vadd.f32 %v2464, %v84
    %v2466 = vadd.f32 %v2465, %v85
    %v2467 = vadd.f32 %v2466, %v86
    %v2468 = vadd.f32 %v2467, %v87
    %v2469 = vadd.f32 %v2468, %v88
    %v2470 = vadd.f32 %v2469, %v89
    %v2471 = vmul.f32 %v2470, 0.125
    %v2472 = vsub.f32 %v82, %v2471
    %v2473 = vsub.f32 %v83, %v2471
    %v2474 = vsub.f32 %v84, %v2471
    %v2475 = vsub.f32 %v85, %v2471
    %v2476 = vsub.f32 %v86, %v2471
    %v2477 = vsub.f32 %v87, %v2471
    %v2478 = vsub.f32 %v88, %v2471
    %v2479 = vsub.f32 %v89, %v2471
    %v2480 = vmul.f32 %v2472, %v2472
    %v2481 = vmul.f32 %v2473, %v2473
    %v2482 = vmul.f32 %v2474, %v2474
    %v2483 = vmul.f32 %v2475, %v2475
    %v2484 = vmul.f32 %v2476, %v2476
    %v2485 = vmul.f32 %v2477, %v2477
    %v2486 = vmul.f32 %v2478, %v2478
    %v2487 = vmul.f32 %v2479, %v2479
    %v2488 = vadd.f32 %v2480, %v2481
    %v2489 = vadd.f32 %v2488, %v2482
    %v2490 = vadd.f32 %v2489, %v2483
    %v2491 = vadd.f32 %v2490, %v2484
    %v2492 = vadd.f32 %v2491, %v2485
    %v2493 = vadd.f32 %v2492, %v2486
    %v2494 = vadd.f32 %v2493, %v2487
    %v2495 = vadd.f32 %v2494, 1e-12
    %v2496 = vrsqrt.pop %v2495
    %v2505 = vrot.slane %v2472, 1
    %v2506 = vrot.slane %v2473, 1
    %v2507 = vrot.slane %v2474, 1
    %v2508 = vrot.slane %v2475, 1
    %v2509 = vrot.slane %v2476, 1
    %v2510 = vrot.slane %v2477, 1
    %v2511 = vrot.slane %v2478, 1
    %v2512 = vrot.slane %v2479, 1
    %v2521 = vmul.f32 %v2472, %v2505
    %v2522 = vmul.f32 %v2473, %v2506
    %v2523 = vmul.f32 %v2474, %v2507
    %v2524 = vmul.f32 %v2475, %v2508
    %v2525 = vmul.f32 %v2476, %v2509
    %v2526 = vmul.f32 %v2477, %v2510
    %v2527 = vmul.f32 %v2478, %v2511
    %v2528 = vmul.f32 %v2479, %v2512
    %v2529 = vadd.f32 %v2521, %v2522
    %v2530 = vadd.f32 %v2529, %v2523
    %v2531 = vadd.f32 %v2530, %v2524
    %v2532 = vadd.f32 %v2531, %v2525
    %v2533 = vadd.f32 %v2532, %v2526
    %v2534 = vadd.f32 %v2533, %v2527
    %v2535 = vadd.f32 %v2534, %v2528
    %v2536 = vld [vmem:[%s15] sm:$0x1]
    %v2537 = vmul.f32 %v2535, %v2496
    %v2539 = vrot.slane %v2496, 1
    %v2541 = vmul.f32 %v2537, %v2539
    %2543 = vset.pattern.permute.xlu0 0
    %2544 = vperm.xlu0 %2543, %v2536
    %v2545 = vpop.permute.xlu0 %2544
    %v2547 = vmul.f32 %v2545, %v2541
    %v2548 = vadd.f32 %v2547, 0.0
    %v2549 = vrot.slane %v2472, 2
    %v2550 = vrot.slane %v2473, 2
    %v2551 = vrot.slane %v2474, 2
    %v2552 = vrot.slane %v2475, 2
    %v2553 = vrot.slane %v2476, 2
    %v2554 = vrot.slane %v2477, 2
    %v2555 = vrot.slane %v2478, 2
    %v2556 = vrot.slane %v2479, 2
    %v2565 = vmul.f32 %v2472, %v2549
    %v2566 = vmul.f32 %v2473, %v2550
    %v2567 = vmul.f32 %v2474, %v2551
    %v2568 = vmul.f32 %v2475, %v2552
    %v2569 = vmul.f32 %v2476, %v2553
    %v2570 = vmul.f32 %v2477, %v2554
    %v2571 = vmul.f32 %v2478, %v2555
    %v2572 = vmul.f32 %v2479, %v2556
    %v2573 = vadd.f32 %v2565, %v2566
    %v2574 = vadd.f32 %v2573, %v2567
    %v2575 = vadd.f32 %v2574, %v2568
    %v2576 = vadd.f32 %v2575, %v2569
    %v2577 = vadd.f32 %v2576, %v2570
    %v2578 = vadd.f32 %v2577, %v2571
    %v2579 = vadd.f32 %v2578, %v2572
    %v2580 = vld [vmem:[%s15 + $0x1] sm:$0x1]
    %v2581 = vmul.f32 %v2579, %v2496
    %v2582 = vrot.slane %v2496, 2
    %v2584 = vmul.f32 %v2581, %v2582
    %2586 = vset.pattern.permute.xlu0 0
    %2587 = vperm.xlu0 %2586, %v2580
    %v2588 = vpop.permute.xlu0 %2587
    %v2590 = vmul.f32 %v2588, %v2584
    %v2591 = vadd.f32 %v2548, %v2590
    %v2592 = vrot.slane %v2472, 3
    %v2593 = vrot.slane %v2473, 3
    %v2594 = vrot.slane %v2474, 3
    %v2595 = vrot.slane %v2475, 3
    %v2596 = vrot.slane %v2476, 3
    %v2597 = vrot.slane %v2477, 3
    %v2598 = vrot.slane %v2478, 3
    %v2599 = vrot.slane %v2479, 3
    %v2608 = vmul.f32 %v2472, %v2592
    %v2609 = vmul.f32 %v2473, %v2593
    %v2610 = vmul.f32 %v2474, %v2594
    %v2611 = vmul.f32 %v2475, %v2595
    %v2612 = vmul.f32 %v2476, %v2596
    %v2613 = vmul.f32 %v2477, %v2597
    %v2614 = vmul.f32 %v2478, %v2598
    %v2615 = vmul.f32 %v2479, %v2599
    %v2616 = vadd.f32 %v2608, %v2609
    %v2617 = vadd.f32 %v2616, %v2610
    %v2618 = vadd.f32 %v2617, %v2611
    %v2619 = vadd.f32 %v2618, %v2612
    %v2620 = vadd.f32 %v2619, %v2613
    %v2621 = vadd.f32 %v2620, %v2614
    %v2622 = vadd.f32 %v2621, %v2615
    %v2623 = vld [vmem:[%s15 + $0x2] sm:$0x1]
    %v2624 = vmul.f32 %v2622, %v2496
    %v2625 = vrot.slane %v2496, 3
    %v2627 = vmul.f32 %v2624, %v2625
    %2629 = vset.pattern.permute.xlu0 0
    %2630 = vperm.xlu0 %2629, %v2623
    %v2631 = vpop.permute.xlu0 %2630
    %v2633 = vmul.f32 %v2631, %v2627
    %v2634 = vadd.f32 %v2591, %v2633
    %v2635 = vld [vmem:[%s15 + $0x3] sm:$0x1]
    %2637 = vset.pattern.permute.xlu0 0
    %2638 = vperm.xlu0 %2637, %v2635
    %v2639 = vpop.permute.xlu0 %2638
    %v2642 = vrot.slane %v2541, 1
    %v2644 = vmul.f32 %v2639, %v2642
    %v2645 = vadd.f32 %v2634, %v2644
    %v2646 = vld [vmem:[%s15 + $0x4] sm:$0x1]
    %2648 = vset.pattern.permute.xlu0 0
    %2649 = vperm.xlu0 %2648, %v2646
    %v2650 = vpop.permute.xlu0 %2649
    %v2653 = vrot.slane %v2584, 1
    %v2655 = vmul.f32 %v2650, %v2653
    %v2656 = vadd.f32 %v2645, %v2655
    %v2657 = vld [vmem:[%s15 + $0x5] sm:$0x1]
    %2659 = vset.pattern.permute.xlu0 0
    %2660 = vperm.xlu0 %2659, %v2657
    %v2661 = vpop.permute.xlu0 %2660
    %v2663 = vrot.slane %v2541, 2
    %v2665 = vmul.f32 %v2661, %v2663
    %v2666 = vadd.f32 %v2656, %v2665
    %v2667 = vadd.f32 %v2459, %v2666
    %2668 = vst [vmem:[#allocation3] sm:$0x1] %v2667
    // Predicated region
    $region66: #{tpu_custom_call.1} parent=1 // pred_check
      _
    $region67: #{tpu_custom_call.1} parent=1 // pred_check_branch
      %2670 = sbr.rel (0) target = $region69
    $region68: #{tpu_custom_call.1} parent=1 // pred_region
      %s2672 = ssub.s32 16, 16
      %2673 = vsyncadd [#allocation4], %s2672
      %s2675 = sshll.u32 [#allocation3], 4
      %s2676 = int_to_ptr.vmem [resolvable:$true] %s2675
      %2678 = dma.vmem_to_hbm [thread:$0]  %s2676, 16, %s16, [#allocation4]
    $region69: #{tpu_custom_call.1} parent=1 // pred_fallthru
      _
    // Predicated region
    $region70: #{tpu_custom_call.1} parent=1 // pred_check
      _
    $region71: #{tpu_custom_call.1} parent=1 // pred_check_branch
      %2680 = sbr.rel (0) target = $region73
    $region72: #{tpu_custom_call.1} parent=1 // pred_region
      %2681 = dma.done [#allocation4], 16
    $region73: #{tpu_custom_call.1} parent=1 // pred_fallthru
      _
    %2682 = vsyncpa [#allocation4], 1

</llo_original>
